<compile_context>
chip_gen: v7x
topology: tpu7x:2x2x1
jax: 0.10.0
libtpu: 0.0.40
codegen_flags: <defaults>
</compile_context>

<pallas_src>
import functools

import jax
import jax.numpy as jnp
from jax.experimental import pallas as pl
from jax.experimental.pallas import tpu as pltpu

VMEM = pltpu.MemorySpace.VMEM
F32 = jnp.float32
BF16 = jnp.bfloat16
C_PAD = 128  # lane-dense padding for lin2/lin3 outputs and the final store


def net1_kernel(x_ref, a_ref, bcol_ref, brow_ref, w_ref, b_ref, o_ref, *, offs):
    n = x_ref.shape[0]
    f_in = x_ref.shape[1]
    b = o_ref.shape[0]
    neg = jnp.float32(-3.0e38)

    a_bf = a_ref[...]                    # (N, N) bf16 0/1 adjacency, A[dst, src]
    a_f32 = a_bf.astype(F32)             # one cast, reused by all 3 degree reductions
    bcol = bcol_ref[...]                 # (N, 1) int32 graph id per node
    brow = brow_ref[...]                 # (1, N) int32 graph id per node

    same_graph = (bcol == brow).astype(F32)                        # (N, N)
    idx_i = jax.lax.broadcasted_iota(jnp.int32, (n, n), 0)
    idx_j = jax.lax.broadcasted_iota(jnp.int32, (n, n), 1)
    tie_ahead = idx_j < idx_i            # stable tie-break: earlier index ranks first

    # ---- static slices from the packed parameter slabs ----
    (wc1_s, wc1_e), (w2_s, w2_e), (w3_s, w3_e), \
        (m1_s, m1_e), (m2_s, m2_e), (m3_s, m3_e) = offs
    wl1 = w_ref[wc1_s:wc1_s + f_in, :]
    wr1 = w_ref[wc1_s + f_in:wc1_e, :]
    w2 = w_ref[w2_s:w2_e, :]
    w3 = w_ref[w3_s:w3_e, :]
    m1w = w_ref[m1_s:m1_e, :]
    m2w = w_ref[m2_s:m2_e, :]
    m3w = w_ref[m3_s:m3_e, :]
    b1 = b_ref[0:1, :]; p1 = b_ref[1:2, :]
    b2 = b_ref[2:3, :]; p2 = b_ref[3:4, :]
    b3 = b_ref[4:5, :]; p3 = b_ref[5:6, :]
    m1b = b_ref[6:7, :]; m2b = b_ref[7:8, :]; m3b = b_ref[8:9, :]

    def sage_relu(x_in, alive_row, w_parts, bias):
        # Degree of *surviving* neighbours via a lane reduction (XLU slot); runs
        # concurrently with the MXU aggregation matmul below.
        masked = a_f32 if alive_row is None else a_f32 * alive_row
        deg = jnp.sum(masked, axis=1, keepdims=True)               # (N, 1)
        inv_deg = pl.reciprocal(jnp.maximum(deg, 1.0), approx=True)
        # Aggregate first (A is exact 0/1 in bf16), normalize AFTER the matmul.
        agg = jnp.dot(a_bf, x_in.astype(BF16),
                      preferred_element_type=F32) * inv_deg
        if len(w_parts) == 1:
            # blocks 2/3: fused [W_l; W_r], one K=2H MXU pass on cat=[agg, x].
            # TODO(synk): on v5e (128-deep MXU) the two-dot form below avoids the
            # concat copy with no MXU downside; keep fused for v6e/v7x.
            cat = jnp.concatenate([agg, x_in], axis=1).astype(BF16)
            h = jnp.dot(cat, w_parts[0], preferred_element_type=F32)
        else:
            # block 1 (K=F_IN): two small lane-aligned dots, no sub-128 lane concat.
            wl, wr = w_parts
            h = (jnp.dot(agg.astype(BF16), wl, preferred_element_type=F32)
                 + jnp.dot(x_in.astype(BF16), wr, preferred_element_type=F32))
        return jnp.maximum(h + bias, 0.0)

    def topk_pool(h, alive_col, alive_row, p_row):
        # TopKPooling(ratio=0.5): score = (h @ p)/||p|| (p pre-normalised, (1, H) row),
        # keep top ceil(cnt/2) per graph, gate kept features by tanh(score).
        score = jnp.sum(h * p_row, axis=1, keepdims=True)          # (N, 1) lane reduce
        gate = jnp.tanh(score)
        s_row = score.T                                            # (1, N)
        pair_valid = same_graph if alive_row is None else same_graph * alive_row
        ahead = (s_row > score) | ((s_row == score) & tie_ahead)
        rank = jnp.sum(jnp.where(ahead, pair_valid, 0.0), axis=1, keepdims=True)
        cnt = jnp.sum(pair_valid, axis=1, keepdims=True)
        # rank < ceil(0.5 * cnt)  <=>  2*rank < cnt   (exact for integer rank/cnt)
        sel_col = alive_col * (2.0 * rank < cnt).astype(F32)       # (N, 1)
        return h * gate * sel_col, sel_col

    def readout(xp, sel_col, sel_row):
        # [global_max_pool, global_mean_pool] -> (B, 2H)
        gid = jax.lax.broadcasted_iota(jnp.int32, (b, n), 0)
        gm = (brow == gid).astype(F32) * sel_row                   # (B, N)
        cnt = jnp.sum(gm, axis=1, keepdims=True)
        mean = jnp.dot(gm, xp, preferred_element_type=F32) / jnp.maximum(cnt, 1.0)
        maxes = []
        for g in range(b):               # B is tiny; unrolled, no per-row transposes
            m_g = jnp.logical_and(bcol == g, sel_col > 0.0)        # (N, 1) column mask
            maxes.append(jnp.max(jnp.where(m_g, xp, neg), axis=0, keepdims=True))
        mx = jnp.concatenate(maxes, axis=0)                        # (B, H)
        return jnp.concatenate([mx, mean], axis=1)                 # (B, 2H)

    ones_col = jnp.ones((n, 1), F32)

    # --- block 1: conv1 -> relu -> pool1 -> readout ---
    h = sage_relu(x_ref[...], None, (wl1, wr1), b1)
    xp, sel1 = topk_pool(h, ones_col, None, p1)
    sel1_row = sel1.T
    r = readout(xp, sel1, sel1_row)

    # --- block 2 ---
    h = sage_relu(xp, sel1_row, (w2,), b2)
    xp, sel2 = topk_pool(h, sel1, sel1_row, p2)
    sel2_row = sel2.T
    r = r + readout(xp, sel2, sel2_row)

    # --- block 3 ---
    h = sage_relu(xp, sel2_row, (w3,), b3)
    xp, sel3 = topk_pool(h, sel2, sel2_row, p3)
    sel3_row = sel3.T
    r = r + readout(xp, sel3, sel3_row)

    # --- MLP head (lin2/lin3 zero-padded to 128 lanes; pad classes get bias -1e30) ---
    h1 = jnp.maximum(jnp.dot(r.astype(BF16), m1w,
                             preferred_element_type=F32) + m1b, 0.0)
    # TODO(synk): F.dropout(p=0.5) is identity at inference (training=False).
    h2 = jnp.maximum(jnp.dot(h1.astype(BF16), m2w,
                             preferred_element_type=F32) + m2b, 0.0)
    logits = jnp.dot(h2.astype(BF16), m3w,
                     preferred_element_type=F32) + m3b             # (B, 128)
    mx = jnp.max(logits, axis=-1, keepdims=True)
    lse = jnp.log(jnp.sum(jnp.exp(logits - mx), axis=-1, keepdims=True)) + mx
    o_ref[...] = logits - lse            # log_softmax (padded cols stay ~ -1e30)


@functools.partial(jax.jit, static_argnames=("num_graphs", "num_classes"))
def net1_forward(x, a, batch, params, *, num_graphs, num_classes):
    n, f_in = x.shape
    hid = params["wl2"].shape[0]
    assert hid == C_PAD, "this module has SAGE hidden = 128 = TPU lane width"

    bcol = batch.astype(jnp.int32).reshape(n, 1)
    brow = batch.astype(jnp.int32).reshape(1, n)

    def p_row(p):    # TopKPooling projection pre-normalised to unit norm, (1, H) row
        p = p.astype(F32)
        return (p / jnp.sqrt(jnp.sum(p * p))).reshape(1, -1)

    def row_pad(v, fill=0.0):
        v = jnp.asarray(v, F32).reshape(1, -1)
        out = jnp.full((1, C_PAD), fill, F32)
        return out.at[:, :v.shape[1]].set(v)

    # ---- packed bf16 weight slab (every segment is 128 lanes wide) ----
    wc1 = jnp.concatenate([params["wl1"], params["wr1"]], axis=0)   # (2*F_IN, H)
    w2 = jnp.concatenate([params["wl2"], params["wr2"]], axis=0)    # (2H, H)
    w3 = jnp.concatenate([params["wl3"], params["wr3"]], axis=0)    # (2H, H)
    m1w = params["w_lin1"]                                          # (2H, H)
    w_lin2 = params["w_lin2"]
    m2w = jnp.zeros((hid, C_PAD), F32).at[:, :w_lin2.shape[1]].set(w_lin2)
    w_lin3 = params["w_lin3"]
    m3w = jnp.zeros((C_PAD, C_PAD), F32).at[:w_lin3.shape[0], :num_classes].set(w_lin3)
    segs = (wc1, w2, w3, m1w, m2w, m3w)
    wslab = jnp.concatenate(segs, axis=0).astype(BF16)
    offs, acc = [], 0
    for s in segs:
        offs.append((acc, acc + s.shape[0]))
        acc += s.shape[0]
    offs = tuple(offs)                   # static row offsets into the weight slab

    # ---- packed f32 bias / projection slab, (9, 128) ----
    bslab = jnp.concatenate([
        row_pad(params["bl1"]), p_row(params["p1"]),
        row_pad(params["bl2"]), p_row(params["p2"]),
        row_pad(params["bl3"]), p_row(params["p3"]),
        row_pad(params["b_lin1"]), row_pad(params["b_lin2"]),
        row_pad(params["b_lin3"], fill=-1e30),
    ], axis=0)

    kernel = functools.partial(net1_kernel, offs=offs)
    out = pl.pallas_call(
        kernel,
        out_shape=jax.ShapeDtypeStruct((num_graphs, C_PAD), F32),
        in_specs=[pl.BlockSpec(memory_space=VMEM)] * 6,
        out_specs=pl.BlockSpec(memory_space=VMEM),
    )(x.astype(F32), a.astype(BF16), bcol, brow, wslab, bslab)
    return out[:, :num_classes]


if __name__ == "__main__":
    NUM_NODES = 64          # 2 graphs x 32 nodes
    NUM_GRAPHS = 2
    F_IN = 32               # num_node_features
    HID = 128
    NUM_CLASSES = 2

    key = jax.random.PRNGKey(0)
    keys = jax.random.split(key, 20)

    def wnorm(k, shape, scale=0.1):
        return (scale * jax.random.normal(k, shape)).astype(jnp.float32)

    params = dict(
        # SAGEConv: lin_l (on aggregated, with bias) + lin_r (root, no bias)
        wl1=wnorm(keys[0], (F_IN, HID)), wr1=wnorm(keys[1], (F_IN, HID)),
        bl1=wnorm(keys[2], (1, HID)), p1=wnorm(keys[3], (HID,)),
        wl2=wnorm(keys[4], (HID, HID)), wr2=wnorm(keys[5], (HID, HID)),
        bl2=wnorm(keys[6], (1, HID)), p2=wnorm(keys[7], (HID,)),
        wl3=wnorm(keys[8], (HID, HID)), wr3=wnorm(keys[9], (HID, HID)),
        bl3=wnorm(keys[10], (1, HID)), p3=wnorm(keys[11], (HID,)),
        w_lin1=wnorm(keys[12], (2 * HID, HID)), b_lin1=wnorm(keys[13], (1, HID)),
        w_lin2=wnorm(keys[14], (HID, 64)),      b_lin2=wnorm(keys[15], (1, 64)),
        w_lin3=wnorm(keys[16], (64, NUM_CLASSES)),
        b_lin3=wnorm(keys[17], (1, NUM_CLASSES)),
    )

    x = jax.random.normal(keys[18], (NUM_NODES, F_IN), dtype=jnp.float32)
    batch = jnp.concatenate([jnp.zeros(32, jnp.int32), jnp.ones(32, jnp.int32)])

    # random directed edges within each graph, no self loops (precondition:
    # the dense adjacency never connects nodes across graphs)
    probs = jax.random.uniform(keys[19], (NUM_NODES, NUM_NODES))
    same_graph = batch[:, None] == batch[None, :]
    a = ((probs < 0.2) & same_graph
         & (~jnp.eye(NUM_NODES, dtype=bool))).astype(jnp.float32)

    out = net1_forward(x, a, batch, params,
                       num_graphs=NUM_GRAPHS, num_classes=NUM_CLASSES)
    out = jax.block_until_ready(out)
    assert out.shape == (NUM_GRAPHS, NUM_CLASSES)
    assert bool(jnp.all(jnp.isfinite(out)))
    print("KERNEL_OK")
</pallas_src>

<mosaic_0001>
module attributes {stable_mosaic.version = 11 : i64} {
  func.func @net1_kernel(%arg0: memref<64x32xf32, #tpu.memory_space<vmem>>, %arg1: memref<64x64xbf16, #tpu.memory_space<vmem>>, %arg2: memref<64x1xi32, #tpu.memory_space<vmem>>, %arg3: memref<1x64xi32, #tpu.memory_space<vmem>>, %arg4: memref<1088x128xbf16, #tpu.memory_space<vmem>>, %arg5: memref<9x128xf32, #tpu.memory_space<vmem>>, %arg6: memref<2x128xf32, #tpu.memory_space<vmem>>) attributes {dimension_semantics = [], scalar_prefetch = 0 : i64, scratch_operands = 0 : i64, tpu.core_type = #tpu.core_type<tc>} {
    %c0 = arith.constant 0 : index
    %c0_0 = arith.constant 0 : index
    %0 = vector.load %arg1[%c0, %c0_0] : memref<64x64xbf16, #tpu.memory_space<vmem>>, vector<64x64xbf16>
    %1 = arith.extf %0 : vector<64x64xbf16> to vector<64x64xf32>
    %c0_1 = arith.constant 0 : index
    %c0_2 = arith.constant 0 : index
    %2 = vector.load %arg2[%c0_1, %c0_2] : memref<64x1xi32, #tpu.memory_space<vmem>>, vector<64x1xi32>
    %c0_3 = arith.constant 0 : index
    %c0_4 = arith.constant 0 : index
    %3 = vector.load %arg3[%c0_3, %c0_4] : memref<1x64xi32, #tpu.memory_space<vmem>>, vector<1x64xi32>
    %4 = vector.broadcast %2 : vector<64x1xi32> to vector<64x64xi32>
    %5 = vector.broadcast %3 : vector<1x64xi32> to vector<64x64xi32>
    %6 = arith.cmpi eq, %4, %5 : vector<64x64xi32>
    %7 = arith.extui %6 : vector<64x64xi1> to vector<64x64xi32>
    %8 = arith.sitofp %7 : vector<64x64xi32> to vector<64x64xf32>
    %9 = tpu.iota {dimensions = array<i32: 0>} : vector<64x64xi32>
    %10 = tpu.iota {dimensions = array<i32: 1>} : vector<64x64xi32>
    %11 = arith.cmpi slt, %10, %9 : vector<64x64xi32>
    %c0_5 = arith.constant 0 : index
    %c0_6 = arith.constant 0 : index
    %12 = vector.load %arg4[%c0_5, %c0_6] : memref<1088x128xbf16, #tpu.memory_space<vmem>>, vector<32x128xbf16>
    %c32 = arith.constant 32 : index
    %c0_7 = arith.constant 0 : index
    %13 = vector.load %arg4[%c32, %c0_7] : memref<1088x128xbf16, #tpu.memory_space<vmem>>, vector<32x128xbf16>
    %c64 = arith.constant 64 : index
    %c0_8 = arith.constant 0 : index
    %14 = vector.load %arg4[%c64, %c0_8] : memref<1088x128xbf16, #tpu.memory_space<vmem>>, vector<256x128xbf16>
    %c320 = arith.constant 320 : index
    %c0_9 = arith.constant 0 : index
    %15 = vector.load %arg4[%c320, %c0_9] : memref<1088x128xbf16, #tpu.memory_space<vmem>>, vector<256x128xbf16>
    %c576 = arith.constant 576 : index
    %c0_10 = arith.constant 0 : index
    %16 = vector.load %arg4[%c576, %c0_10] : memref<1088x128xbf16, #tpu.memory_space<vmem>>, vector<256x128xbf16>
    %c832 = arith.constant 832 : index
    %c0_11 = arith.constant 0 : index
    %17 = vector.load %arg4[%c832, %c0_11] : memref<1088x128xbf16, #tpu.memory_space<vmem>>, vector<128x128xbf16>
    %c960 = arith.constant 960 : index
    %c0_12 = arith.constant 0 : index
    %18 = vector.load %arg4[%c960, %c0_12] : memref<1088x128xbf16, #tpu.memory_space<vmem>>, vector<128x128xbf16>
    %c0_13 = arith.constant 0 : index
    %c0_14 = arith.constant 0 : index
    %19 = vector.load %arg5[%c0_13, %c0_14] : memref<9x128xf32, #tpu.memory_space<vmem>>, vector<1x128xf32>
    %c1 = arith.constant 1 : index
    %c0_15 = arith.constant 0 : index
    %20 = vector.load %arg5[%c1, %c0_15] : memref<9x128xf32, #tpu.memory_space<vmem>>, vector<1x128xf32>
    %c2 = arith.constant 2 : index
    %c0_16 = arith.constant 0 : index
    %21 = vector.load %arg5[%c2, %c0_16] : memref<9x128xf32, #tpu.memory_space<vmem>>, vector<1x128xf32>
    %c3 = arith.constant 3 : index
    %c0_17 = arith.constant 0 : index
    %22 = vector.load %arg5[%c3, %c0_17] : memref<9x128xf32, #tpu.memory_space<vmem>>, vector<1x128xf32>
    %c4 = arith.constant 4 : index
    %c0_18 = arith.constant 0 : index
    %23 = vector.load %arg5[%c4, %c0_18] : memref<9x128xf32, #tpu.memory_space<vmem>>, vector<1x128xf32>
    %c5 = arith.constant 5 : index
    %c0_19 = arith.constant 0 : index
    %24 = vector.load %arg5[%c5, %c0_19] : memref<9x128xf32, #tpu.memory_space<vmem>>, vector<1x128xf32>
    %c6 = arith.constant 6 : index
    %c0_20 = arith.constant 0 : index
    %25 = vector.load %arg5[%c6, %c0_20] : memref<9x128xf32, #tpu.memory_space<vmem>>, vector<1x128xf32>
    %c7 = arith.constant 7 : index
    %c0_21 = arith.constant 0 : index
    %26 = vector.load %arg5[%c7, %c0_21] : memref<9x128xf32, #tpu.memory_space<vmem>>, vector<1x128xf32>
    %c8 = arith.constant 8 : index
    %c0_22 = arith.constant 0 : index
    %27 = vector.load %arg5[%c8, %c0_22] : memref<9x128xf32, #tpu.memory_space<vmem>>, vector<1x128xf32>
    %cst = arith.constant 1.000000e+00 : f32
    %28 = vector.broadcast %cst : f32 to vector<64x1xf32>
    %c0_23 = arith.constant 0 : index
    %c0_24 = arith.constant 0 : index
    %29 = vector.load %arg0[%c0_23, %c0_24] : memref<64x32xf32, #tpu.memory_space<vmem>>, vector<64x32xf32>
    %cst_25 = arith.constant dense<0.000000e+00> : vector<64xf32>
    %30 = vector.multi_reduction <add>, %1, %cst_25 [1] : vector<64x64xf32> to vector<64xf32>
    %31 = vector.shape_cast %30 : vector<64xf32> to vector<64x1xf32>
    %cst_26 = arith.constant 1.000000e+00 : f32
    %32 = vector.broadcast %cst_26 : f32 to vector<64x1xf32>
    %33 = arith.maximumf %31, %32 : vector<64x1xf32>
    %34 = tpu.reciprocal %33 {approx = true} : vector<64x1xf32> -> vector<64x1xf32>
    %35 = arith.truncf %29 : vector<64x32xf32> to vector<64x32xbf16>
    %cst_27 = arith.constant dense<0.000000e+00> : vector<64x32xf32>
    %36 = tpu.matmul %0, %35, %cst_27 {dimension_numbers = #tpu.dot_dimension_numbers<[1], [0], [0], [1], [0, 0, 1, 1], [], []>} : vector<64x64xbf16>, vector<64x32xbf16>, vector<64x32xf32> -> vector<64x32xf32>
    %37 = vector.broadcast %34 : vector<64x1xf32> to vector<64x32xf32>
    %38 = arith.mulf %36, %37 : vector<64x32xf32>
    %39 = arith.truncf %38 : vector<64x32xf32> to vector<64x32xbf16>
    %cst_28 = arith.constant dense<0.000000e+00> : vector<64x128xf32>
    %40 = tpu.matmul %39, %12, %cst_28 {dimension_numbers = #tpu.dot_dimension_numbers<[1], [0], [0], [1], [0, 0, 1, 1], [], []>} : vector<64x32xbf16>, vector<32x128xbf16>, vector<64x128xf32> -> vector<64x128xf32>
    %41 = arith.truncf %29 : vector<64x32xf32> to vector<64x32xbf16>
    %cst_29 = arith.constant dense<0.000000e+00> : vector<64x128xf32>
    %42 = tpu.matmul %41, %13, %cst_29 {dimension_numbers = #tpu.dot_dimension_numbers<[1], [0], [0], [1], [0, 0, 1, 1], [], []>} : vector<64x32xbf16>, vector<32x128xbf16>, vector<64x128xf32> -> vector<64x128xf32>
    %43 = arith.addf %40, %42 : vector<64x128xf32>
    %44 = vector.broadcast %19 : vector<1x128xf32> to vector<64x128xf32>
    %45 = arith.addf %43, %44 : vector<64x128xf32>
    %cst_30 = arith.constant 0.000000e+00 : f32
    %46 = vector.broadcast %cst_30 : f32 to vector<64x128xf32>
    %47 = arith.maximumf %45, %46 : vector<64x128xf32>
    %48 = vector.broadcast %20 : vector<1x128xf32> to vector<64x128xf32>
    %49 = arith.mulf %47, %48 : vector<64x128xf32>
    %cst_31 = arith.constant dense<0.000000e+00> : vector<64xf32>
    %50 = vector.multi_reduction <add>, %49, %cst_31 [1] : vector<64x128xf32> to vector<64xf32>
    %51 = vector.shape_cast %50 : vector<64xf32> to vector<64x1xf32>
    %52 = math.tanh %51 : vector<64x1xf32>
    %53 = tpu.transpose %51, [1, 0] : vector<64x1xf32> -> vector<1x64xf32>
    %54 = vector.broadcast %53 : vector<1x64xf32> to vector<64x64xf32>
    %55 = vector.broadcast %51 : vector<64x1xf32> to vector<64x64xf32>
    %56 = arith.cmpf ogt, %54, %55 : vector<64x64xf32>
    %57 = vector.broadcast %53 : vector<1x64xf32> to vector<64x64xf32>
    %58 = vector.broadcast %51 : vector<64x1xf32> to vector<64x64xf32>
    %59 = arith.cmpf oeq, %57, %58 : vector<64x64xf32>
    %60 = arith.andi %59, %11 : vector<64x64xi1>
    %61 = arith.ori %56, %60 : vector<64x64xi1>
    %cst_32 = arith.constant 0.000000e+00 : f32
    %62 = vector.broadcast %cst_32 : f32 to vector<64x64xf32>
    %63 = arith.select %61, %8, %62 : vector<64x64xi1>, vector<64x64xf32>
    %cst_33 = arith.constant dense<0.000000e+00> : vector<64xf32>
    %64 = vector.multi_reduction <add>, %63, %cst_33 [1] : vector<64x64xf32> to vector<64xf32>
    %65 = vector.shape_cast %64 : vector<64xf32> to vector<64x1xf32>
    %cst_34 = arith.constant dense<0.000000e+00> : vector<64xf32>
    %66 = vector.multi_reduction <add>, %8, %cst_34 [1] : vector<64x64xf32> to vector<64xf32>
    %67 = vector.shape_cast %66 : vector<64xf32> to vector<64x1xf32>
    %cst_35 = arith.constant 2.000000e+00 : f32
    %68 = vector.broadcast %cst_35 : f32 to vector<64x1xf32>
    %69 = arith.mulf %68, %65 : vector<64x1xf32>
    %70 = arith.cmpf olt, %69, %67 : vector<64x1xf32>
    %71 = arith.extui %70 : vector<64x1xi1> to vector<64x1xi32>
    %72 = arith.sitofp %71 : vector<64x1xi32> to vector<64x1xf32>
    %73 = arith.mulf %28, %72 : vector<64x1xf32>
    %74 = vector.broadcast %52 : vector<64x1xf32> to vector<64x128xf32>
    %75 = arith.mulf %47, %74 : vector<64x128xf32>
    %76 = vector.broadcast %73 : vector<64x1xf32> to vector<64x128xf32>
    %77 = arith.mulf %75, %76 : vector<64x128xf32>
    %78 = tpu.transpose %73, [1, 0] : vector<64x1xf32> -> vector<1x64xf32>
    %79 = tpu.iota {dimensions = array<i32: 0>} : vector<2x64xi32>
    %80 = vector.broadcast %3 : vector<1x64xi32> to vector<2x64xi32>
    %81 = arith.cmpi eq, %80, %79 : vector<2x64xi32>
    %82 = arith.extui %81 : vector<2x64xi1> to vector<2x64xi32>
    %83 = arith.sitofp %82 : vector<2x64xi32> to vector<2x64xf32>
    %84 = vector.broadcast %78 : vector<1x64xf32> to vector<2x64xf32>
    %85 = arith.mulf %83, %84 : vector<2x64xf32>
    %cst_36 = arith.constant dense<0.000000e+00> : vector<2xf32>
    %86 = vector.multi_reduction <add>, %85, %cst_36 [1] : vector<2x64xf32> to vector<2xf32>
    %87 = vector.shape_cast %86 : vector<2xf32> to vector<2x1xf32>
    %cst_37 = arith.constant dense<0.000000e+00> : vector<2x128xf32>
    %88 = tpu.matmul %85, %77, %cst_37 {dimension_numbers = #tpu.dot_dimension_numbers<[1], [0], [0], [1], [0, 0, 1, 1], [], []>} : vector<2x64xf32>, vector<64x128xf32>, vector<2x128xf32> -> vector<2x128xf32>
    %cst_38 = arith.constant 1.000000e+00 : f32
    %89 = vector.broadcast %cst_38 : f32 to vector<2x1xf32>
    %90 = arith.maximumf %87, %89 : vector<2x1xf32>
    %91 = vector.broadcast %90 : vector<2x1xf32> to vector<2x128xf32>
    %92 = arith.divf %88, %91 : vector<2x128xf32>
    %c0_i32 = arith.constant 0 : i32
    %93 = vector.broadcast %c0_i32 : i32 to vector<64x1xi32>
    %94 = arith.cmpi eq, %2, %93 : vector<64x1xi32>
    %cst_39 = arith.constant 0.000000e+00 : f32
    %95 = vector.broadcast %cst_39 : f32 to vector<64x1xf32>
    %96 = arith.cmpf ogt, %73, %95 : vector<64x1xf32>
    %97 = arith.andi %94, %96 : vector<64x1xi1>
    %cst_40 = arith.constant -3.000000e+38 : f32
    %98 = vector.shape_cast %97 : vector<64x1xi1> to vector<64x1xi1>
    %99 = vector.broadcast %98 : vector<64x1xi1> to vector<64x128xi1>
    %100 = vector.broadcast %cst_40 : f32 to vector<64x128xf32>
    %101 = arith.select %99, %77, %100 : vector<64x128xi1>, vector<64x128xf32>
    %cst_41 = arith.constant dense<0xFF800000> : vector<128xf32>
    %102 = vector.multi_reduction <maximumf>, %101, %cst_41 [0] : vector<64x128xf32> to vector<128xf32>
    %103 = vector.shape_cast %102 : vector<128xf32> to vector<1x128xf32>
    %c1_i32 = arith.constant 1 : i32
    %104 = vector.broadcast %c1_i32 : i32 to vector<64x1xi32>
    %105 = arith.cmpi eq, %2, %104 : vector<64x1xi32>
    %cst_42 = arith.constant 0.000000e+00 : f32
    %106 = vector.broadcast %cst_42 : f32 to vector<64x1xf32>
    %107 = arith.cmpf ogt, %73, %106 : vector<64x1xf32>
    %108 = arith.andi %105, %107 : vector<64x1xi1>
    %cst_43 = arith.constant -3.000000e+38 : f32
    %109 = vector.shape_cast %108 : vector<64x1xi1> to vector<64x1xi1>
    %110 = vector.broadcast %109 : vector<64x1xi1> to vector<64x128xi1>
    %111 = vector.broadcast %cst_43 : f32 to vector<64x128xf32>
    %112 = arith.select %110, %77, %111 : vector<64x128xi1>, vector<64x128xf32>
    %cst_44 = arith.constant dense<0xFF800000> : vector<128xf32>
    %113 = vector.multi_reduction <maximumf>, %112, %cst_44 [0] : vector<64x128xf32> to vector<128xf32>
    %114 = vector.shape_cast %113 : vector<128xf32> to vector<1x128xf32>
    %115 = tpu.concatenate %103, %114 in 0 : vector<1x128xf32>, vector<1x128xf32> -> vector<2x128xf32>
    %116 = tpu.concatenate %115, %92 in 1 : vector<2x128xf32>, vector<2x128xf32> -> vector<2x256xf32>
    %117 = vector.broadcast %78 : vector<1x64xf32> to vector<64x64xf32>
    %118 = arith.mulf %1, %117 : vector<64x64xf32>
    %cst_45 = arith.constant dense<0.000000e+00> : vector<64xf32>
    %119 = vector.multi_reduction <add>, %118, %cst_45 [1] : vector<64x64xf32> to vector<64xf32>
    %120 = vector.shape_cast %119 : vector<64xf32> to vector<64x1xf32>
    %cst_46 = arith.constant 1.000000e+00 : f32
    %121 = vector.broadcast %cst_46 : f32 to vector<64x1xf32>
    %122 = arith.maximumf %120, %121 : vector<64x1xf32>
    %123 = tpu.reciprocal %122 {approx = true} : vector<64x1xf32> -> vector<64x1xf32>
    %124 = arith.truncf %77 : vector<64x128xf32> to vector<64x128xbf16>
    %cst_47 = arith.constant dense<0.000000e+00> : vector<64x128xf32>
    %125 = tpu.matmul %0, %124, %cst_47 {dimension_numbers = #tpu.dot_dimension_numbers<[1], [0], [0], [1], [0, 0, 1, 1], [], []>} : vector<64x64xbf16>, vector<64x128xbf16>, vector<64x128xf32> -> vector<64x128xf32>
    %126 = vector.broadcast %123 : vector<64x1xf32> to vector<64x128xf32>
    %127 = arith.mulf %125, %126 : vector<64x128xf32>
    %128 = tpu.concatenate %127, %77 in 1 : vector<64x128xf32>, vector<64x128xf32> -> vector<64x256xf32>
    %129 = arith.truncf %128 : vector<64x256xf32> to vector<64x256xbf16>
    %cst_48 = arith.constant dense<0.000000e+00> : vector<64x128xf32>
    %130 = tpu.matmul %129, %14, %cst_48 {dimension_numbers = #tpu.dot_dimension_numbers<[1], [0], [0], [1], [0, 0, 1, 1], [], []>} : vector<64x256xbf16>, vector<256x128xbf16>, vector<64x128xf32> -> vector<64x128xf32>
    %131 = vector.broadcast %21 : vector<1x128xf32> to vector<64x128xf32>
    %132 = arith.addf %130, %131 : vector<64x128xf32>
    %cst_49 = arith.constant 0.000000e+00 : f32
    %133 = vector.broadcast %cst_49 : f32 to vector<64x128xf32>
    %134 = arith.maximumf %132, %133 : vector<64x128xf32>
    %135 = vector.broadcast %22 : vector<1x128xf32> to vector<64x128xf32>
    %136 = arith.mulf %134, %135 : vector<64x128xf32>
    %cst_50 = arith.constant dense<0.000000e+00> : vector<64xf32>
    %137 = vector.multi_reduction <add>, %136, %cst_50 [1] : vector<64x128xf32> to vector<64xf32>
    %138 = vector.shape_cast %137 : vector<64xf32> to vector<64x1xf32>
    %139 = math.tanh %138 : vector<64x1xf32>
    %140 = tpu.transpose %138, [1, 0] : vector<64x1xf32> -> vector<1x64xf32>
    %141 = vector.broadcast %78 : vector<1x64xf32> to vector<64x64xf32>
    %142 = arith.mulf %8, %141 : vector<64x64xf32>
    %143 = vector.broadcast %140 : vector<1x64xf32> to vector<64x64xf32>
    %144 = vector.broadcast %138 : vector<64x1xf32> to vector<64x64xf32>
    %145 = arith.cmpf ogt, %143, %144 : vector<64x64xf32>
    %146 = vector.broadcast %140 : vector<1x64xf32> to vector<64x64xf32>
    %147 = vector.broadcast %138 : vector<64x1xf32> to vector<64x64xf32>
    %148 = arith.cmpf oeq, %146, %147 : vector<64x64xf32>
    %149 = arith.andi %148, %11 : vector<64x64xi1>
    %150 = arith.ori %145, %149 : vector<64x64xi1>
    %cst_51 = arith.constant 0.000000e+00 : f32
    %151 = vector.broadcast %cst_51 : f32 to vector<64x64xf32>
    %152 = arith.select %150, %142, %151 : vector<64x64xi1>, vector<64x64xf32>
    %cst_52 = arith.constant dense<0.000000e+00> : vector<64xf32>
    %153 = vector.multi_reduction <add>, %152, %cst_52 [1] : vector<64x64xf32> to vector<64xf32>
    %154 = vector.shape_cast %153 : vector<64xf32> to vector<64x1xf32>
    %cst_53 = arith.constant dense<0.000000e+00> : vector<64xf32>
    %155 = vector.multi_reduction <add>, %142, %cst_53 [1] : vector<64x64xf32> to vector<64xf32>
    %156 = vector.shape_cast %155 : vector<64xf32> to vector<64x1xf32>
    %cst_54 = arith.constant 2.000000e+00 : f32
    %157 = vector.broadcast %cst_54 : f32 to vector<64x1xf32>
    %158 = arith.mulf %157, %154 : vector<64x1xf32>
    %159 = arith.cmpf olt, %158, %156 : vector<64x1xf32>
    %160 = arith.extui %159 : vector<64x1xi1> to vector<64x1xi32>
    %161 = arith.sitofp %160 : vector<64x1xi32> to vector<64x1xf32>
    %162 = arith.mulf %73, %161 : vector<64x1xf32>
    %163 = vector.broadcast %139 : vector<64x1xf32> to vector<64x128xf32>
    %164 = arith.mulf %134, %163 : vector<64x128xf32>
    %165 = vector.broadcast %162 : vector<64x1xf32> to vector<64x128xf32>
    %166 = arith.mulf %164, %165 : vector<64x128xf32>
    %167 = tpu.transpose %162, [1, 0] : vector<64x1xf32> -> vector<1x64xf32>
    %168 = tpu.iota {dimensions = array<i32: 0>} : vector<2x64xi32>
    %169 = vector.broadcast %3 : vector<1x64xi32> to vector<2x64xi32>
    %170 = arith.cmpi eq, %169, %168 : vector<2x64xi32>
    %171 = arith.extui %170 : vector<2x64xi1> to vector<2x64xi32>
    %172 = arith.sitofp %171 : vector<2x64xi32> to vector<2x64xf32>
    %173 = vector.broadcast %167 : vector<1x64xf32> to vector<2x64xf32>
    %174 = arith.mulf %172, %173 : vector<2x64xf32>
    %cst_55 = arith.constant dense<0.000000e+00> : vector<2xf32>
    %175 = vector.multi_reduction <add>, %174, %cst_55 [1] : vector<2x64xf32> to vector<2xf32>
    %176 = vector.shape_cast %175 : vector<2xf32> to vector<2x1xf32>
    %cst_56 = arith.constant dense<0.000000e+00> : vector<2x128xf32>
    %177 = tpu.matmul %174, %166, %cst_56 {dimension_numbers = #tpu.dot_dimension_numbers<[1], [0], [0], [1], [0, 0, 1, 1], [], []>} : vector<2x64xf32>, vector<64x128xf32>, vector<2x128xf32> -> vector<2x128xf32>
    %cst_57 = arith.constant 1.000000e+00 : f32
    %178 = vector.broadcast %cst_57 : f32 to vector<2x1xf32>
    %179 = arith.maximumf %176, %178 : vector<2x1xf32>
    %180 = vector.broadcast %179 : vector<2x1xf32> to vector<2x128xf32>
    %181 = arith.divf %177, %180 : vector<2x128xf32>
    %c0_i32_58 = arith.constant 0 : i32
    %182 = vector.broadcast %c0_i32_58 : i32 to vector<64x1xi32>
    %183 = arith.cmpi eq, %2, %182 : vector<64x1xi32>
    %cst_59 = arith.constant 0.000000e+00 : f32
    %184 = vector.broadcast %cst_59 : f32 to vector<64x1xf32>
    %185 = arith.cmpf ogt, %162, %184 : vector<64x1xf32>
    %186 = arith.andi %183, %185 : vector<64x1xi1>
    %cst_60 = arith.constant -3.000000e+38 : f32
    %187 = vector.shape_cast %186 : vector<64x1xi1> to vector<64x1xi1>
    %188 = vector.broadcast %187 : vector<64x1xi1> to vector<64x128xi1>
    %189 = vector.broadcast %cst_60 : f32 to vector<64x128xf32>
    %190 = arith.select %188, %166, %189 : vector<64x128xi1>, vector<64x128xf32>
    %cst_61 = arith.constant dense<0xFF800000> : vector<128xf32>
    %191 = vector.multi_reduction <maximumf>, %190, %cst_61 [0] : vector<64x128xf32> to vector<128xf32>
    %192 = vector.shape_cast %191 : vector<128xf32> to vector<1x128xf32>
    %c1_i32_62 = arith.constant 1 : i32
    %193 = vector.broadcast %c1_i32_62 : i32 to vector<64x1xi32>
    %194 = arith.cmpi eq, %2, %193 : vector<64x1xi32>
    %cst_63 = arith.constant 0.000000e+00 : f32
    %195 = vector.broadcast %cst_63 : f32 to vector<64x1xf32>
    %196 = arith.cmpf ogt, %162, %195 : vector<64x1xf32>
    %197 = arith.andi %194, %196 : vector<64x1xi1>
    %cst_64 = arith.constant -3.000000e+38 : f32
    %198 = vector.shape_cast %197 : vector<64x1xi1> to vector<64x1xi1>
    %199 = vector.broadcast %198 : vector<64x1xi1> to vector<64x128xi1>
    %200 = vector.broadcast %cst_64 : f32 to vector<64x128xf32>
    %201 = arith.select %199, %166, %200 : vector<64x128xi1>, vector<64x128xf32>
    %cst_65 = arith.constant dense<0xFF800000> : vector<128xf32>
    %202 = vector.multi_reduction <maximumf>, %201, %cst_65 [0] : vector<64x128xf32> to vector<128xf32>
    %203 = vector.shape_cast %202 : vector<128xf32> to vector<1x128xf32>
    %204 = tpu.concatenate %192, %203 in 0 : vector<1x128xf32>, vector<1x128xf32> -> vector<2x128xf32>
    %205 = tpu.concatenate %204, %181 in 1 : vector<2x128xf32>, vector<2x128xf32> -> vector<2x256xf32>
    %206 = arith.addf %116, %205 : vector<2x256xf32>
    %207 = vector.broadcast %167 : vector<1x64xf32> to vector<64x64xf32>
    %208 = arith.mulf %1, %207 : vector<64x64xf32>
    %cst_66 = arith.constant dense<0.000000e+00> : vector<64xf32>
    %209 = vector.multi_reduction <add>, %208, %cst_66 [1] : vector<64x64xf32> to vector<64xf32>
    %210 = vector.shape_cast %209 : vector<64xf32> to vector<64x1xf32>
    %cst_67 = arith.constant 1.000000e+00 : f32
    %211 = vector.broadcast %cst_67 : f32 to vector<64x1xf32>
    %212 = arith.maximumf %210, %211 : vector<64x1xf32>
    %213 = tpu.reciprocal %212 {approx = true} : vector<64x1xf32> -> vector<64x1xf32>
    %214 = arith.truncf %166 : vector<64x128xf32> to vector<64x128xbf16>
    %cst_68 = arith.constant dense<0.000000e+00> : vector<64x128xf32>
    %215 = tpu.matmul %0, %214, %cst_68 {dimension_numbers = #tpu.dot_dimension_numbers<[1], [0], [0], [1], [0, 0, 1, 1], [], []>} : vector<64x64xbf16>, vector<64x128xbf16>, vector<64x128xf32> -> vector<64x128xf32>
    %216 = vector.broadcast %213 : vector<64x1xf32> to vector<64x128xf32>
    %217 = arith.mulf %215, %216 : vector<64x128xf32>
    %218 = tpu.concatenate %217, %166 in 1 : vector<64x128xf32>, vector<64x128xf32> -> vector<64x256xf32>
    %219 = arith.truncf %218 : vector<64x256xf32> to vector<64x256xbf16>
    %cst_69 = arith.constant dense<0.000000e+00> : vector<64x128xf32>
    %220 = tpu.matmul %219, %15, %cst_69 {dimension_numbers = #tpu.dot_dimension_numbers<[1], [0], [0], [1], [0, 0, 1, 1], [], []>} : vector<64x256xbf16>, vector<256x128xbf16>, vector<64x128xf32> -> vector<64x128xf32>
    %221 = vector.broadcast %23 : vector<1x128xf32> to vector<64x128xf32>
    %222 = arith.addf %220, %221 : vector<64x128xf32>
    %cst_70 = arith.constant 0.000000e+00 : f32
    %223 = vector.broadcast %cst_70 : f32 to vector<64x128xf32>
    %224 = arith.maximumf %222, %223 : vector<64x128xf32>
    %225 = vector.broadcast %24 : vector<1x128xf32> to vector<64x128xf32>
    %226 = arith.mulf %224, %225 : vector<64x128xf32>
    %cst_71 = arith.constant dense<0.000000e+00> : vector<64xf32>
    %227 = vector.multi_reduction <add>, %226, %cst_71 [1] : vector<64x128xf32> to vector<64xf32>
    %228 = vector.shape_cast %227 : vector<64xf32> to vector<64x1xf32>
    %229 = math.tanh %228 : vector<64x1xf32>
    %230 = tpu.transpose %228, [1, 0] : vector<64x1xf32> -> vector<1x64xf32>
    %231 = vector.broadcast %167 : vector<1x64xf32> to vector<64x64xf32>
    %232 = arith.mulf %8, %231 : vector<64x64xf32>
    %233 = vector.broadcast %230 : vector<1x64xf32> to vector<64x64xf32>
    %234 = vector.broadcast %228 : vector<64x1xf32> to vector<64x64xf32>
    %235 = arith.cmpf ogt, %233, %234 : vector<64x64xf32>
    %236 = vector.broadcast %230 : vector<1x64xf32> to vector<64x64xf32>
    %237 = vector.broadcast %228 : vector<64x1xf32> to vector<64x64xf32>
    %238 = arith.cmpf oeq, %236, %237 : vector<64x64xf32>
    %239 = arith.andi %238, %11 : vector<64x64xi1>
    %240 = arith.ori %235, %239 : vector<64x64xi1>
    %cst_72 = arith.constant 0.000000e+00 : f32
    %241 = vector.broadcast %cst_72 : f32 to vector<64x64xf32>
    %242 = arith.select %240, %232, %241 : vector<64x64xi1>, vector<64x64xf32>
    %cst_73 = arith.constant dense<0.000000e+00> : vector<64xf32>
    %243 = vector.multi_reduction <add>, %242, %cst_73 [1] : vector<64x64xf32> to vector<64xf32>
    %244 = vector.shape_cast %243 : vector<64xf32> to vector<64x1xf32>
    %cst_74 = arith.constant dense<0.000000e+00> : vector<64xf32>
    %245 = vector.multi_reduction <add>, %232, %cst_74 [1] : vector<64x64xf32> to vector<64xf32>
    %246 = vector.shape_cast %245 : vector<64xf32> to vector<64x1xf32>
    %cst_75 = arith.constant 2.000000e+00 : f32
    %247 = vector.broadcast %cst_75 : f32 to vector<64x1xf32>
    %248 = arith.mulf %247, %244 : vector<64x1xf32>
    %249 = arith.cmpf olt, %248, %246 : vector<64x1xf32>
    %250 = arith.extui %249 : vector<64x1xi1> to vector<64x1xi32>
    %251 = arith.sitofp %250 : vector<64x1xi32> to vector<64x1xf32>
    %252 = arith.mulf %162, %251 : vector<64x1xf32>
    %253 = vector.broadcast %229 : vector<64x1xf32> to vector<64x128xf32>
    %254 = arith.mulf %224, %253 : vector<64x128xf32>
    %255 = vector.broadcast %252 : vector<64x1xf32> to vector<64x128xf32>
    %256 = arith.mulf %254, %255 : vector<64x128xf32>
    %257 = tpu.transpose %252, [1, 0] : vector<64x1xf32> -> vector<1x64xf32>
    %258 = tpu.iota {dimensions = array<i32: 0>} : vector<2x64xi32>
    %259 = vector.broadcast %3 : vector<1x64xi32> to vector<2x64xi32>
    %260 = arith.cmpi eq, %259, %258 : vector<2x64xi32>
    %261 = arith.extui %260 : vector<2x64xi1> to vector<2x64xi32>
    %262 = arith.sitofp %261 : vector<2x64xi32> to vector<2x64xf32>
    %263 = vector.broadcast %257 : vector<1x64xf32> to vector<2x64xf32>
    %264 = arith.mulf %262, %263 : vector<2x64xf32>
    %cst_76 = arith.constant dense<0.000000e+00> : vector<2xf32>
    %265 = vector.multi_reduction <add>, %264, %cst_76 [1] : vector<2x64xf32> to vector<2xf32>
    %266 = vector.shape_cast %265 : vector<2xf32> to vector<2x1xf32>
    %cst_77 = arith.constant dense<0.000000e+00> : vector<2x128xf32>
    %267 = tpu.matmul %264, %256, %cst_77 {dimension_numbers = #tpu.dot_dimension_numbers<[1], [0], [0], [1], [0, 0, 1, 1], [], []>} : vector<2x64xf32>, vector<64x128xf32>, vector<2x128xf32> -> vector<2x128xf32>
    %cst_78 = arith.constant 1.000000e+00 : f32
    %268 = vector.broadcast %cst_78 : f32 to vector<2x1xf32>
    %269 = arith.maximumf %266, %268 : vector<2x1xf32>
    %270 = vector.broadcast %269 : vector<2x1xf32> to vector<2x128xf32>
    %271 = arith.divf %267, %270 : vector<2x128xf32>
    %c0_i32_79 = arith.constant 0 : i32
    %272 = vector.broadcast %c0_i32_79 : i32 to vector<64x1xi32>
    %273 = arith.cmpi eq, %2, %272 : vector<64x1xi32>
    %cst_80 = arith.constant 0.000000e+00 : f32
    %274 = vector.broadcast %cst_80 : f32 to vector<64x1xf32>
    %275 = arith.cmpf ogt, %252, %274 : vector<64x1xf32>
    %276 = arith.andi %273, %275 : vector<64x1xi1>
    %cst_81 = arith.constant -3.000000e+38 : f32
    %277 = vector.shape_cast %276 : vector<64x1xi1> to vector<64x1xi1>
    %278 = vector.broadcast %277 : vector<64x1xi1> to vector<64x128xi1>
    %279 = vector.broadcast %cst_81 : f32 to vector<64x128xf32>
    %280 = arith.select %278, %256, %279 : vector<64x128xi1>, vector<64x128xf32>
    %cst_82 = arith.constant dense<0xFF800000> : vector<128xf32>
    %281 = vector.multi_reduction <maximumf>, %280, %cst_82 [0] : vector<64x128xf32> to vector<128xf32>
    %282 = vector.shape_cast %281 : vector<128xf32> to vector<1x128xf32>
    %c1_i32_83 = arith.constant 1 : i32
    %283 = vector.broadcast %c1_i32_83 : i32 to vector<64x1xi32>
    %284 = arith.cmpi eq, %2, %283 : vector<64x1xi32>
    %cst_84 = arith.constant 0.000000e+00 : f32
    %285 = vector.broadcast %cst_84 : f32 to vector<64x1xf32>
    %286 = arith.cmpf ogt, %252, %285 : vector<64x1xf32>
    %287 = arith.andi %284, %286 : vector<64x1xi1>
    %cst_85 = arith.constant -3.000000e+38 : f32
    %288 = vector.shape_cast %287 : vector<64x1xi1> to vector<64x1xi1>
    %289 = vector.broadcast %288 : vector<64x1xi1> to vector<64x128xi1>
    %290 = vector.broadcast %cst_85 : f32 to vector<64x128xf32>
    %291 = arith.select %289, %256, %290 : vector<64x128xi1>, vector<64x128xf32>
    %cst_86 = arith.constant dense<0xFF800000> : vector<128xf32>
    %292 = vector.multi_reduction <maximumf>, %291, %cst_86 [0] : vector<64x128xf32> to vector<128xf32>
    %293 = vector.shape_cast %292 : vector<128xf32> to vector<1x128xf32>
    %294 = tpu.concatenate %282, %293 in 0 : vector<1x128xf32>, vector<1x128xf32> -> vector<2x128xf32>
    %295 = tpu.concatenate %294, %271 in 1 : vector<2x128xf32>, vector<2x128xf32> -> vector<2x256xf32>
    %296 = arith.addf %206, %295 : vector<2x256xf32>
    %297 = arith.truncf %296 : vector<2x256xf32> to vector<2x256xbf16>
    %cst_87 = arith.constant dense<0.000000e+00> : vector<2x128xf32>
    %298 = tpu.matmul %297, %16, %cst_87 {dimension_numbers = #tpu.dot_dimension_numbers<[1], [0], [0], [1], [0, 0, 1, 1], [], []>} : vector<2x256xbf16>, vector<256x128xbf16>, vector<2x128xf32> -> vector<2x128xf32>
    %299 = vector.broadcast %25 : vector<1x128xf32> to vector<2x128xf32>
    %300 = arith.addf %298, %299 : vector<2x128xf32>
    %cst_88 = arith.constant 0.000000e+00 : f32
    %301 = vector.broadcast %cst_88 : f32 to vector<2x128xf32>
    %302 = arith.maximumf %300, %301 : vector<2x128xf32>
    %303 = arith.truncf %302 : vector<2x128xf32> to vector<2x128xbf16>
    %cst_89 = arith.constant dense<0.000000e+00> : vector<2x128xf32>
    %304 = tpu.matmul %303, %17, %cst_89 {dimension_numbers = #tpu.dot_dimension_numbers<[1], [0], [0], [1], [0, 0, 1, 1], [], []>} : vector<2x128xbf16>, vector<128x128xbf16>, vector<2x128xf32> -> vector<2x128xf32>
    %305 = vector.broadcast %26 : vector<1x128xf32> to vector<2x128xf32>
    %306 = arith.addf %304, %305 : vector<2x128xf32>
    %cst_90 = arith.constant 0.000000e+00 : f32
    %307 = vector.broadcast %cst_90 : f32 to vector<2x128xf32>
    %308 = arith.maximumf %306, %307 : vector<2x128xf32>
    %309 = arith.truncf %308 : vector<2x128xf32> to vector<2x128xbf16>
    %cst_91 = arith.constant dense<0.000000e+00> : vector<2x128xf32>
    %310 = tpu.matmul %309, %18, %cst_91 {dimension_numbers = #tpu.dot_dimension_numbers<[1], [0], [0], [1], [0, 0, 1, 1], [], []>} : vector<2x128xbf16>, vector<128x128xbf16>, vector<2x128xf32> -> vector<2x128xf32>
    %311 = vector.broadcast %27 : vector<1x128xf32> to vector<2x128xf32>
    %312 = arith.addf %310, %311 : vector<2x128xf32>
    %cst_92 = arith.constant dense<0xFF800000> : vector<2xf32>
    %313 = vector.multi_reduction <maximumf>, %312, %cst_92 [1] : vector<2x128xf32> to vector<2xf32>
    %314 = vector.shape_cast %313 : vector<2xf32> to vector<2x1xf32>
    %315 = vector.broadcast %314 : vector<2x1xf32> to vector<2x128xf32>
    %316 = arith.subf %312, %315 : vector<2x128xf32>
    %317 = math.exp %316 : vector<2x128xf32>
    %cst_93 = arith.constant dense<0.000000e+00> : vector<2xf32>
    %318 = vector.multi_reduction <add>, %317, %cst_93 [1] : vector<2x128xf32> to vector<2xf32>
    %319 = vector.shape_cast %318 : vector<2xf32> to vector<2x1xf32>
    %320 = math.log %319 : vector<2x1xf32>
    %321 = arith.addf %320, %314 : vector<2x1xf32>
    %322 = vector.broadcast %321 : vector<2x1xf32> to vector<2x128xf32>
    %323 = arith.subf %312, %322 : vector<2x128xf32>
    %c0_94 = arith.constant 0 : index
    %c0_95 = arith.constant 0 : index
    %324 = vector.load %arg6[%c0_94, %c0_95] : memref<2x128xf32, #tpu.memory_space<vmem>>, vector<2x128xf32>
    tpu.vector_store %arg6[%c0_94, %c0_95], %323 {strides = array<i32>} : memref<2x128xf32, #tpu.memory_space<vmem>>, vector<2x128xf32>,
    return
  }
}

</mosaic_0001>

<llo_original>
// kernel: net1_forward.1
$region0: #{net1_forward.1}
  #allocation0 [shape = 'u32[]', space=smem, size = 0x4, offset = 0x4, fixed_abs, tag = 'smem constant byte address 0x4 - core index']
  #allocation1 [shape = 'u32[144,128]{1,0:T(1,128)}', space=vmem, size = 0x12000, scoped, tag = 'internal scratch']
  %s0 = inlined_call_operand.vmem [shape: f32[64,32], index: 0, kind: input, shape index: {}]
  %s1 = inlined_call_operand.vmem [shape: bf16[64,64], index: 1, kind: input, shape index: {}]
  %s2 = inlined_call_operand.vmem [shape: s32[64,1], index: 2, kind: input, shape index: {}]
  %s3 = inlined_call_operand.vmem [shape: s32[1,64], index: 3, kind: input, shape index: {}]
  %s4 = inlined_call_operand.vmem [shape: bf16[1088,128], index: 4, kind: input, shape index: {}]
  %s5 = inlined_call_operand.vmem [shape: f32[9,128], index: 5, kind: input, shape index: {}]
  %s6 = inlined_call_operand.hbm [shape: f32[2,128], index: 6, kind: output, shape index: {}]
  %s7 = sld [smem:[#allocation0]]
  $region34: #{net1_forward.1} parent=0
    _
  %s9 = ssub.s32 1, %s7
  %s10 = scalar_select 0, %s9, %s7
  $region1: #{net1_forward.1} parent=0
    #allocation2 [shape = 'u8[1024]{0}', space=vmem, size = 0x400, scoped, tag = 'output window, operand 0, single buffered']
    #allocation3 [shape = 's32[1]{0}', space=sflag, size = 0x4, scoped, tag = 'scoped memory for net1_forward.1']
    %11 = vsyncpa [#allocation3], 0
    // Predicated region
    $region2: #{net1_forward.1} parent=1 // pred_check
      _
    $region3: #{net1_forward.1} parent=1 // pred_check_branch
      %13 = sbr.rel (0) target = $region5
    $region4: #{net1_forward.1} parent=1 // pred_region
      _
    $region5: #{net1_forward.1} parent=1 // pred_fallthru
      _
    // Predicated region
    $region6: #{net1_forward.1} parent=1 // pred_check
      _
    $region7: #{net1_forward.1} parent=1 // pred_check_branch
      %15 = sbr.rel (0) target = $region9
    $region8: #{net1_forward.1} parent=1 // pred_region
      _
    $region9: #{net1_forward.1} parent=1 // pred_fallthru
      _
    // Predicated region
    $region10: #{net1_forward.1} parent=1 // pred_check
      _
    $region11: #{net1_forward.1} parent=1 // pred_check_branch
      %17 = sbr.rel (0) target = $region13
    $region12: #{net1_forward.1} parent=1 // pred_region
      _
    $region13: #{net1_forward.1} parent=1 // pred_fallthru
      _
    // Predicated region
    $region14: #{net1_forward.1} parent=1 // pred_check
      _
    $region15: #{net1_forward.1} parent=1 // pred_check_branch
      %19 = sbr.rel (0) target = $region17
    $region16: #{net1_forward.1} parent=1 // pred_region
      _
    $region17: #{net1_forward.1} parent=1 // pred_fallthru
      _
    // Predicated region
    $region18: #{net1_forward.1} parent=1 // pred_check
      _
    $region19: #{net1_forward.1} parent=1 // pred_check_branch
      %21 = sbr.rel (0) target = $region21
    $region20: #{net1_forward.1} parent=1 // pred_region
      _
    $region21: #{net1_forward.1} parent=1 // pred_fallthru
      _
    // Predicated region
    $region22: #{net1_forward.1} parent=1 // pred_check
      _
    $region23: #{net1_forward.1} parent=1 // pred_check_branch
      %23 = sbr.rel (0) target = $region25
    $region24: #{net1_forward.1} parent=1 // pred_region
      _
    $region25: #{net1_forward.1} parent=1 // pred_fallthru
      _
    %v25 = vld [vmem:[%s1] sm:$0xf]
    %v26 = vld [vmem:[%s1 + $0x4] sm:$0xf]
    %v27 = vld [vmem:[%s1 + $0x8] sm:$0xf]
    %v28 = vld [vmem:[%s1 + $0xc] sm:$0xf]
    %v29 = vld [vmem:[%s1 + $0x10] sm:$0xf]
    %v30 = vld [vmem:[%s1 + $0x14] sm:$0xf]
    %v31 = vld [vmem:[%s1 + $0x18] sm:$0xf]
    %v32 = vld [vmem:[%s1 + $0x1c] sm:$0xf]
    %v33 = vunpack.c.l.bf16 %v25
    %v34 = vunpack.c.l.bf16 %v26
    %v35 = vunpack.c.l.bf16 %v27
    %v36 = vunpack.c.l.bf16 %v28
    %v37 = vunpack.c.l.bf16 %v29
    %v38 = vunpack.c.l.bf16 %v30
    %v39 = vunpack.c.l.bf16 %v31
    %v40 = vunpack.c.l.bf16 %v32
    %v41 = vld [vmem:[%s2] sm:$0xff]
    %v42 = vld [vmem:[%s2 + $0x8] sm:$0xff]
    %v43 = vld [vmem:[%s2 + $0x10] sm:$0xff]
    %v44 = vld [vmem:[%s2 + $0x18] sm:$0xff]
    %v45 = vld [vmem:[%s2 + $0x20] sm:$0xff]
    %v46 = vld [vmem:[%s2 + $0x28] sm:$0xff]
    %v47 = vld [vmem:[%s2 + $0x30] sm:$0xff]
    %v48 = vld [vmem:[%s2 + $0x38] sm:$0xff]
    %v49 = vld [vmem:[%s3] sm:$0x1]
    %50 = vset.pattern.permute.xlu0 0
    %51 = vperm.xlu0 %50, %v41
    %v52 = vpop.permute.xlu0 %51
    %53 = vset.pattern.permute.xlu0 0
    %54 = vperm.xlu0 %53, %v42
    %v55 = vpop.permute.xlu0 %54
    %56 = vset.pattern.permute.xlu0 0
    %57 = vperm.xlu0 %56, %v43
    %v58 = vpop.permute.xlu0 %57
    %59 = vset.pattern.permute.xlu0 0
    %60 = vperm.xlu0 %59, %v44
    %v61 = vpop.permute.xlu0 %60
    %62 = vset.pattern.permute.xlu0 0
    %63 = vperm.xlu0 %62, %v45
    %v64 = vpop.permute.xlu0 %63
    %65 = vset.pattern.permute.xlu0 0
    %66 = vperm.xlu0 %65, %v46
    %v67 = vpop.permute.xlu0 %66
    %68 = vset.pattern.permute.xlu0 0
    %69 = vperm.xlu0 %68, %v47
    %v70 = vpop.permute.xlu0 %69
    %71 = vset.pattern.permute.xlu0 0
    %72 = vperm.xlu0 %71, %v48
    %v73 = vpop.permute.xlu0 %72
    %v74 = vlaneseq
    %v75 = vshrl.u32 %v74, 7
    %v76 = vsub.s32 0, %v75
    %v77 = vrot.slane %v49, %v76
    %vm78 = vcmp.eq.s32.totalorder %v52, %v77
    %vm79 = vcmp.eq.s32.totalorder %v55, %v77
    %vm80 = vcmp.eq.s32.totalorder %v58, %v77
    %vm81 = vcmp.eq.s32.totalorder %v61, %v77
    %vm82 = vcmp.eq.s32.totalorder %v64, %v77
    %vm83 = vcmp.eq.s32.totalorder %v67, %v77
    %vm84 = vcmp.eq.s32.totalorder %v70, %v77
    %vm85 = vcmp.eq.s32.totalorder %v73, %v77
    %v86 = vsel %vm78, 1, 0
    %v87 = vsel %vm79, 1, 0
    %v88 = vsel %vm80, 1, 0
    %v89 = vsel %vm81, 1, 0
    %v90 = vsel %vm82, 1, 0
    %v91 = vsel %vm83, 1, 0
    %v92 = vsel %vm84, 1, 0
    %v93 = vsel %vm85, 1, 0
    %v94 = vcvt.s32.f32 %v86
    %v95 = vcvt.s32.f32 %v87
    %v96 = vcvt.s32.f32 %v88
    %v97 = vcvt.s32.f32 %v89
    %v98 = vcvt.s32.f32 %v90
    %v99 = vcvt.s32.f32 %v91
    %v100 = vcvt.s32.f32 %v92
    %v101 = vcvt.s32.f32 %v93
    %v102 = vlaneseq
    %v103 = vshrl.u32 %v102, 7
    %v104 = vadd.s32 %v103, 8
    %v105 = vadd.s32 %v103, 16
    %v106 = vadd.s32 %v103, 24
    %v107 = vadd.s32 %v103, 32
    %v108 = vadd.s32 %v103, 40
    %v109 = vadd.s32 %v103, 48
    %v110 = vadd.s32 %v103, 56
    %v111 = vlaneseq
    %v112 = vand.u32 %v111, 127
    %vm113 = vcmp.lt.s32.totalorder %v112, %v103
    %vm114 = vcmp.lt.s32.totalorder %v112, %v104
    %vm115 = vcmp.lt.s32.totalorder %v112, %v105
    %vm116 = vcmp.lt.s32.totalorder %v112, %v106
    %vm117 = vcmp.lt.s32.totalorder %v112, %v107
    %vm118 = vcmp.lt.s32.totalorder %v112, %v108
    %vm119 = vcmp.lt.s32.totalorder %v112, %v109
    %vm120 = vcmp.lt.s32.totalorder %v112, %v110
    %v121 = vld [vmem:[%s4] sm:$0xf]
    %v122 = vld [vmem:[%s4 + $0x4] sm:$0xf]
    %v123 = vld [vmem:[%s4 + $0x8] sm:$0xf]
    %v124 = vld [vmem:[%s4 + $0xc] sm:$0xf]
    %v125 = vld [vmem:[%s4 + $0x10] sm:$0xf]
    %v126 = vld [vmem:[%s4 + $0x14] sm:$0xf]
    %v127 = vld [vmem:[%s4 + $0x18] sm:$0xf]
    %v128 = vld [vmem:[%s4 + $0x1c] sm:$0xf]
    %v129 = vld [vmem:[%s4 + $0x20] sm:$0xf]
    %v130 = vld [vmem:[%s4 + $0x24] sm:$0xf]
    %v131 = vld [vmem:[%s4 + $0x28] sm:$0xf]
    %v132 = vld [vmem:[%s4 + $0x2c] sm:$0xf]
    %v133 = vld [vmem:[%s4 + $0x30] sm:$0xf]
    %v134 = vld [vmem:[%s4 + $0x34] sm:$0xf]
    %v135 = vld [vmem:[%s4 + $0x38] sm:$0xf]
    %v136 = vld [vmem:[%s4 + $0x3c] sm:$0xf]
    %v137 = vld [vmem:[%s4 + $0x40] sm:$0xf]
    %v138 = vld [vmem:[%s4 + $0x44] sm:$0xf]
    %v139 = vld [vmem:[%s4 + $0x48] sm:$0xf]
    %v140 = vld [vmem:[%s4 + $0x4c] sm:$0xf]
    %v141 = vld [vmem:[%s4 + $0x50] sm:$0xf]
    %v142 = vld [vmem:[%s4 + $0x54] sm:$0xf]
    %v143 = vld [vmem:[%s4 + $0x58] sm:$0xf]
    %v144 = vld [vmem:[%s4 + $0x5c] sm:$0xf]
    %v145 = vld [vmem:[%s4 + $0x60] sm:$0xf]
    %v146 = vld [vmem:[%s4 + $0x64] sm:$0xf]
    %v147 = vld [vmem:[%s4 + $0x68] sm:$0xf]
    %v148 = vld [vmem:[%s4 + $0x6c] sm:$0xf]
    %v149 = vld [vmem:[%s4 + $0x70] sm:$0xf]
    %v150 = vld [vmem:[%s4 + $0x74] sm:$0xf]
    %v151 = vld [vmem:[%s4 + $0x78] sm:$0xf]
    %v152 = vld [vmem:[%s4 + $0x7c] sm:$0xf]
    %v153 = vld [vmem:[%s4 + $0x80] sm:$0xf]
    %v154 = vld [vmem:[%s4 + $0x84] sm:$0xf]
    %v155 = vld [vmem:[%s4 + $0x88] sm:$0xf]
    %v156 = vld [vmem:[%s4 + $0x8c] sm:$0xf]
    %v157 = vld [vmem:[%s4 + $0x90] sm:$0xf]
    %v158 = vld [vmem:[%s4 + $0x94] sm:$0xf]
    %v159 = vld [vmem:[%s4 + $0x98] sm:$0xf]
    %v160 = vld [vmem:[%s4 + $0x9c] sm:$0xf]
    %v161 = vld [vmem:[%s4 + $0xa0] sm:$0xf]
    %v162 = vld [vmem:[%s4 + $0xa4] sm:$0xf]
    %v163 = vld [vmem:[%s4 + $0xa8] sm:$0xf]
    %v164 = vld [vmem:[%s4 + $0xac] sm:$0xf]
    %v165 = vld [vmem:[%s4 + $0xb0] sm:$0xf]
    %v166 = vld [vmem:[%s4 + $0xb4] sm:$0xf]
    %v167 = vld [vmem:[%s4 + $0xb8] sm:$0xf]
    %v168 = vld [vmem:[%s4 + $0xbc] sm:$0xf]
    %v169 = vld [vmem:[%s4 + $0xc0] sm:$0xf]
    %v170 = vld [vmem:[%s4 + $0xc4] sm:$0xf]
    %v171 = vld [vmem:[%s4 + $0xc8] sm:$0xf]
    %v172 = vld [vmem:[%s4 + $0xcc] sm:$0xf]
    %v173 = vld [vmem:[%s4 + $0xd0] sm:$0xf]
    %v174 = vld [vmem:[%s4 + $0xd4] sm:$0xf]
    %v175 = vld [vmem:[%s4 + $0xd8] sm:$0xf]
    %v176 = vld [vmem:[%s4 + $0xdc] sm:$0xf]
    %v177 = vld [vmem:[%s4 + $0xe0] sm:$0xf]
    %v178 = vld [vmem:[%s4 + $0xe4] sm:$0xf]
    %v179 = vld [vmem:[%s4 + $0xe8] sm:$0xf]
    %v180 = vld [vmem:[%s4 + $0xec] sm:$0xf]
    %v181 = vld [vmem:[%s4 + $0xf0] sm:$0xf]
    %v182 = vld [vmem:[%s4 + $0xf4] sm:$0xf]
    %v183 = vld [vmem:[%s4 + $0xf8] sm:$0xf]
    %v184 = vld [vmem:[%s4 + $0xfc] sm:$0xf]
    %v185 = vld [vmem:[%s4 + $0x100] sm:$0xf]
    %v186 = vld [vmem:[%s4 + $0x104] sm:$0xf]
    %v187 = vld [vmem:[%s4 + $0x108] sm:$0xf]
    %v188 = vld [vmem:[%s4 + $0x10c] sm:$0xf]
    %v189 = vld [vmem:[%s4 + $0x110] sm:$0xf]
    %v190 = vld [vmem:[%s4 + $0x114] sm:$0xf]
    %v191 = vld [vmem:[%s4 + $0x118] sm:$0xf]
    %v192 = vld [vmem:[%s4 + $0x11c] sm:$0xf]
    %v193 = vld [vmem:[%s4 + $0x120] sm:$0xf]
    %v194 = vld [vmem:[%s4 + $0x124] sm:$0xf]
    %v195 = vld [vmem:[%s4 + $0x128] sm:$0xf]
    %v196 = vld [vmem:[%s4 + $0x12c] sm:$0xf]
    %v197 = vld [vmem:[%s4 + $0x130] sm:$0xf]
    %v198 = vld [vmem:[%s4 + $0x134] sm:$0xf]
    %v199 = vld [vmem:[%s4 + $0x138] sm:$0xf]
    %v200 = vld [vmem:[%s4 + $0x13c] sm:$0xf]
    %v201 = vld [vmem:[%s4 + $0x140] sm:$0xf]
    %v202 = vld [vmem:[%s4 + $0x144] sm:$0xf]
    %v203 = vld [vmem:[%s4 + $0x148] sm:$0xf]
    %v204 = vld [vmem:[%s4 + $0x14c] sm:$0xf]
    %v205 = vld [vmem:[%s4 + $0x150] sm:$0xf]
    %v206 = vld [vmem:[%s4 + $0x154] sm:$0xf]
    %v207 = vld [vmem:[%s4 + $0x158] sm:$0xf]
    %v208 = vld [vmem:[%s4 + $0x15c] sm:$0xf]
    %v209 = vld [vmem:[%s4 + $0x160] sm:$0xf]
    %v210 = vld [vmem:[%s4 + $0x164] sm:$0xf]
    %v211 = vld [vmem:[%s4 + $0x168] sm:$0xf]
    %v212 = vld [vmem:[%s4 + $0x16c] sm:$0xf]
    %v213 = vld [vmem:[%s4 + $0x170] sm:$0xf]
    %v214 = vld [vmem:[%s4 + $0x174] sm:$0xf]
    %v215 = vld [vmem:[%s4 + $0x178] sm:$0xf]
    %v216 = vld [vmem:[%s4 + $0x17c] sm:$0xf]
    %v217 = vld [vmem:[%s4 + $0x180] sm:$0xf]
    %v218 = vld [vmem:[%s4 + $0x184] sm:$0xf]
    %v219 = vld [vmem:[%s4 + $0x188] sm:$0xf]
    %v220 = vld [vmem:[%s4 + $0x18c] sm:$0xf]
    %v221 = vld [vmem:[%s4 + $0x190] sm:$0xf]
    %v222 = vld [vmem:[%s4 + $0x194] sm:$0xf]
    %v223 = vld [vmem:[%s4 + $0x198] sm:$0xf]
    %v224 = vld [vmem:[%s4 + $0x19c] sm:$0xf]
    %v225 = vld [vmem:[%s4 + $0x1a0] sm:$0xf]
    %v226 = vld [vmem:[%s4 + $0x1a4] sm:$0xf]
    %v227 = vld [vmem:[%s4 + $0x1a8] sm:$0xf]
    %v228 = vld [vmem:[%s4 + $0x1ac] sm:$0xf]
    %v229 = vld [vmem:[%s4 + $0x1b0] sm:$0xf]
    %v230 = vld [vmem:[%s4 + $0x1b4] sm:$0xf]
    %v231 = vld [vmem:[%s4 + $0x1b8] sm:$0xf]
    %v232 = vld [vmem:[%s4 + $0x1bc] sm:$0xf]
    %v233 = vld [vmem:[%s4 + $0x1c0] sm:$0xf]
    %v234 = vld [vmem:[%s4 + $0x1c4] sm:$0xf]
    %v235 = vld [vmem:[%s4 + $0x1c8] sm:$0xf]
    %v236 = vld [vmem:[%s4 + $0x1cc] sm:$0xf]
    %v237 = vld [vmem:[%s4 + $0x1d0] sm:$0xf]
    %v238 = vld [vmem:[%s4 + $0x1d4] sm:$0xf]
    %v239 = vld [vmem:[%s4 + $0x1d8] sm:$0xf]
    %v240 = vld [vmem:[%s4 + $0x1dc] sm:$0xf]
    %v241 = vld [vmem:[%s4 + $0x1e0] sm:$0xf]
    %v242 = vld [vmem:[%s4 + $0x1e4] sm:$0xf]
    %v243 = vld [vmem:[%s4 + $0x1e8] sm:$0xf]
    %v244 = vld [vmem:[%s4 + $0x1ec] sm:$0xf]
    %v245 = vld [vmem:[%s4 + $0x1f0] sm:$0xf]
    %v246 = vld [vmem:[%s4 + $0x1f4] sm:$0xf]
    %v247 = vld [vmem:[%s4 + $0x1f8] sm:$0xf]
    %v248 = vld [vmem:[%s4 + $0x1fc] sm:$0xf]
    %v249 = vld [vmem:[%s4 + $0x200] sm:$0xf]
    %v250 = vld [vmem:[%s4 + $0x204] sm:$0xf]
    %v251 = vld [vmem:[%s4 + $0x208] sm:$0xf]
    %v252 = vld [vmem:[%s4 + $0x20c] sm:$0xf]
    %v253 = vld [vmem:[%s4 + $0x210] sm:$0xf]
    %v254 = vld [vmem:[%s4 + $0x214] sm:$0xf]
    %v255 = vld [vmem:[%s4 + $0x218] sm:$0xf]
    %v256 = vld [vmem:[%s4 + $0x21c] sm:$0xf]
    %v257 = vld [vmem:[%s5] sm:$0x1]
    %v258 = vld [vmem:[%s5 + $0x1] sm:$0x1]
    %v259 = vld [vmem:[%s5 + $0x2] sm:$0x1]
    %v260 = vld [vmem:[%s5 + $0x3] sm:$0x1]
    %v261 = vld [vmem:[%s5 + $0x4] sm:$0x1]
    %v262 = vld [vmem:[%s5 + $0x5] sm:$0x1]
    %v263 = vld [vmem:[%s5 + $0x6] sm:$0x1]
    %v264 = vld [vmem:[%s5 + $0x7] sm:$0x1]
    %v265 = vld [vmem:[%s5 + $0x8] sm:$0x1]
    %v266 = vld [vmem:[%s0] sm:$0xff]
    %v267 = vld [vmem:[%s0 + $0x8] sm:$0xff]
    %v268 = vld [vmem:[%s0 + $0x10] sm:$0xff]
    %v269 = vld [vmem:[%s0 + $0x18] sm:$0xff]
    %v270 = vld [vmem:[%s0 + $0x20] sm:$0xff]
    %v271 = vld [vmem:[%s0 + $0x28] sm:$0xff]
    %v272 = vld [vmem:[%s0 + $0x30] sm:$0xff]
    %v273 = vld [vmem:[%s0 + $0x38] sm:$0xff]
    %vm274 = vcmask 523264
    %v275 = vsel %vm274, %v33, 0.0
    %276 = vadd.xlane.f32.xlu0 %v275
    %v277 = vpop.xlane.xlu0 %276
    %v278 = vsel %vm274, %v34, 0.0
    %279 = vadd.xlane.f32.xlu0 %v278
    %v280 = vpop.xlane.xlu0 %279
    %v281 = vsel %vm274, %v35, 0.0
    %282 = vadd.xlane.f32.xlu0 %v281
    %v283 = vpop.xlane.xlu0 %282
    %v284 = vsel %vm274, %v36, 0.0
    %285 = vadd.xlane.f32.xlu0 %v284
    %v286 = vpop.xlane.xlu0 %285
    %v287 = vsel %vm274, %v37, 0.0
    %288 = vadd.xlane.f32.xlu0 %v287
    %v289 = vpop.xlane.xlu0 %288
    %v290 = vsel %vm274, %v38, 0.0
    %291 = vadd.xlane.f32.xlu0 %v290
    %v292 = vpop.xlane.xlu0 %291
    %v293 = vsel %vm274, %v39, 0.0
    %294 = vadd.xlane.f32.xlu0 %v293
    %v295 = vpop.xlane.xlu0 %294
    %v296 = vsel %vm274, %v40, 0.0
    %297 = vadd.xlane.f32.xlu0 %v296
    %v298 = vpop.xlane.xlu0 %297
    %v299 = vmax.f32 %v277, 1.0
    %v300 = vmax.f32 %v280, 1.0
    %v301 = vmax.f32 %v283, 1.0
    %v302 = vmax.f32 %v286, 1.0
    %v303 = vmax.f32 %v289, 1.0
    %v304 = vmax.f32 %v292, 1.0
    %v305 = vmax.f32 %v295, 1.0
    %v306 = vmax.f32 %v298, 1.0
    %v307 = vrcp.pop %v299
    %v308 = vrcp.pop %v300
    %v309 = vrcp.pop %v301
    %v310 = vrcp.pop %v302
    %v311 = vrcp.pop %v303
    %v312 = vrcp.pop %v304
    %v313 = vrcp.pop %v305
    %v314 = vrcp.pop %v306
    %v315 = vpack.c.bf16 %v267, %v266
    %v316 = vpack.c.bf16 %v269, %v268
    %v317 = vpack.c.bf16 %v271, %v270
    %v318 = vpack.c.bf16 %v273, %v272
    %v327 = vunpack.c.l.b16 %v25
    %v328 = vunpack.c.l.b16 %v26
    %v329 = vunpack.c.l.b16 %v27
    %v330 = vunpack.c.l.b16 %v28
    %v331 = vunpack.c.l.b16 %v29
    %v332 = vunpack.c.l.b16 %v30
    %v333 = vunpack.c.l.b16 %v31
    %v334 = vunpack.c.l.b16 %v32
    %v335 = vpack.c.b16 %v328, %v327
    %v336 = vpack.c.b16 %v330, %v329
    %v337 = vpack.c.b16 %v332, %v331
    %v338 = vpack.c.b16 %v334, %v333
    %v340 = vsel %vm274, %v335, 0
    %v343 = vsel %vm274, %v336, 0
    %v346 = vsel %vm274, %v337, 0
    %v349 = vsel %vm274, %v338, 0
    %351 = vmatprep.subr.bf16.mxu0 0
    %352 = vmatpush1.bf16.msra.mxu0 %v315
    %353 = vmatprep.subr.bf16.mxu0 0
    %354 = vmatpush1.bf16.msra.mxu0 %v316
    %355 = vmatprep.subr.bf16.mxu0 0
    %356 = vmatpush1.bf16.msra.mxu0 %v317
    %357 = vmatprep.subr.bf16.mxu0 0
    %358 = vmatpush1.bf16.msra.mxu0 %v318
    %359 = vmatprep.subr.bf16.mxu0 0
    %360 = vmatpush1.bf16.msra.mxu0 0
    %361 = vmatprep.subr.bf16.mxu0 0
    %362 = vmatpush1.bf16.msra.mxu0 0
    %363 = vmatprep.subr.bf16.mxu0 0
    %364 = vmatpush1.bf16.msra.mxu0 0
    %365 = vmatprep.subr.bf16.mxu0 0
    %366 = vmatpush1.bf16.msra.mxu0 0
    %367 = vmatprep.subr.bf16.mxu0 0
    %368 = vmatpush1.bf16.msra.mxu0 0
    %369 = vmatprep.subr.bf16.mxu0 0
    %370 = vmatpush1.bf16.msra.mxu0 0
    %371 = vmatprep.subr.bf16.mxu0 0
    %372 = vmatpush1.bf16.msra.mxu0 0
    %373 = vmatprep.subr.bf16.mxu0 0
    %374 = vmatpush1.bf16.msra.mxu0 0
    %375 = vmatprep.subr.bf16.mxu0 0
    %376 = vmatpush1.bf16.msra.mxu0 0
    %377 = vmatprep.subr.bf16.mxu0 0
    %378 = vmatpush1.bf16.msra.mxu0 0
    %379 = vmatprep.subr.bf16.mxu0 0
    %380 = vmatpush1.bf16.msra.mxu0 0
    %381 = vmatprep.subr.bf16.mxu0 0
    %382 = vmatpush1.bf16.msra.mxu0 0
    %383 = vmatprep.mubr.bf16.mxu0 0
    %384 = vmatmul.mubr.bf16.gmra.mrb[0].mxu0 %v340
    %v385 = vpop.f32.mrb[0].mxu0
    %v386 = vadd.f32 0.0, %v385
    %v387 = vpop.f32.mrb[0].mxu0
    %v388 = vpop.f32.mrb[0].mxu0
    %v389 = vadd.f32 0.0, %v388
    %v390 = vpop.f32.mrb[0].mxu0
    %391 = vmatprep.mubr.bf16.mxu0 0
    %392 = vmatmul.mubr.bf16.gmra.mrb[0].mxu0 %v343
    %v393 = vpop.f32.mrb[0].mxu0
    %v394 = vadd.f32 0.0, %v393
    %v395 = vpop.f32.mrb[0].mxu0
    %v396 = vpop.f32.mrb[0].mxu0
    %v397 = vadd.f32 0.0, %v396
    %v398 = vpop.f32.mrb[0].mxu0
    %399 = vmatprep.mubr.bf16.mxu0 0
    %400 = vmatmul.mubr.bf16.gmra.mrb[0].mxu0 %v346
    %v401 = vpop.f32.mrb[0].mxu0
    %v402 = vadd.f32 0.0, %v401
    %v403 = vpop.f32.mrb[0].mxu0
    %v404 = vpop.f32.mrb[0].mxu0
    %v405 = vadd.f32 0.0, %v404
    %v406 = vpop.f32.mrb[0].mxu0
    %407 = vmatprep.mubr.bf16.mxu0 0
    %408 = vmatmul.mubr.bf16.gmra.mrb[0].mxu0 %v349
    %v409 = vpop.f32.mrb[0].mxu0
    %v410 = vadd.f32 0.0, %v409
    %v411 = vpop.f32.mrb[0].mxu0
    %v412 = vpop.f32.mrb[0].mxu0
    %v413 = vadd.f32 0.0, %v412
    %v414 = vpop.f32.mrb[0].mxu0
    %415 = vdwg.mxu0
    %v416 = vmul.f32 %v386, %v307
    %v417 = vmul.f32 %v389, %v308
    %v418 = vmul.f32 %v394, %v309
    %v419 = vmul.f32 %v397, %v310
    %v420 = vmul.f32 %v402, %v311
    %v421 = vmul.f32 %v405, %v312
    %v422 = vmul.f32 %v410, %v313
    %v423 = vmul.f32 %v413, %v314
    %v424 = vpack.c.bf16 %v417, %v416
    %v425 = vpack.c.bf16 %v419, %v418
    %v426 = vpack.c.bf16 %v421, %v420
    %v427 = vpack.c.bf16 %v423, %v422
    %v432 = vunpack.c.l.b16 %v125
    %v433 = vunpack.c.l.b16 %v126
    %v434 = vunpack.c.l.b16 %v127
    %v435 = vunpack.c.l.b16 %v128
    %v436 = vpack.c.b16 %v433, %v432
    %v437 = vpack.c.b16 %v435, %v434
    %vm440 = vcmask 261120
    %v442 = vsel %vm440, %v315, 0
    %v445 = vsel %vm440, %v316, 0
    %v448 = vsel %vm440, %v317, 0
    %v451 = vsel %vm440, %v318, 0
    %453 = vmatprep.subr.bf16.mxu0 0
    %454 = vmatpush1.bf16.msra.mxu0 %v436
    %455 = vmatprep.subr.bf16.mxu0 0
    %456 = vmatpush1.bf16.msra.mxu0 %v437
    %457 = vmatprep.subr.bf16.mxu0 0
    %458 = vmatpush1.bf16.msra.mxu0 0
    %459 = vmatprep.subr.bf16.mxu0 0
    %460 = vmatpush1.bf16.msra.mxu0 0
    %461 = vmatprep.subr.bf16.mxu0 0
    %462 = vmatpush1.bf16.msra.mxu0 0
    %463 = vmatprep.subr.bf16.mxu0 0
    %464 = vmatpush1.bf16.msra.mxu0 0
    %465 = vmatprep.subr.bf16.mxu0 0
    %466 = vmatpush1.bf16.msra.mxu0 0
    %467 = vmatprep.subr.bf16.mxu0 0
    %468 = vmatpush1.bf16.msra.mxu0 0
    %469 = vmatprep.subr.bf16.mxu0 0
    %470 = vmatpush1.bf16.msra.mxu0 0
    %471 = vmatprep.subr.bf16.mxu0 0
    %472 = vmatpush1.bf16.msra.mxu0 0
    %473 = vmatprep.subr.bf16.mxu0 0
    %474 = vmatpush1.bf16.msra.mxu0 0
    %475 = vmatprep.subr.bf16.mxu0 0
    %476 = vmatpush1.bf16.msra.mxu0 0
    %477 = vmatprep.subr.bf16.mxu0 0
    %478 = vmatpush1.bf16.msra.mxu0 0
    %479 = vmatprep.subr.bf16.mxu0 0
    %480 = vmatpush1.bf16.msra.mxu0 0
    %481 = vmatprep.subr.bf16.mxu0 0
    %482 = vmatpush1.bf16.msra.mxu0 0
    %483 = vmatprep.subr.bf16.mxu0 0
    %484 = vmatpush1.bf16.msra.mxu0 0
    %485 = vmatprep.mubr.bf16.mxu0 0
    %486 = vmatmul.mubr.bf16.gmra.mrb[0].mxu0 %v442
    %v487 = vpop.f32.mrb[0].mxu0
    %v488 = vadd.f32 0.0, %v487
    %v489 = vpop.f32.mrb[0].mxu0
    %v490 = vpop.f32.mrb[0].mxu0
    %v491 = vadd.f32 0.0, %v490
    %v492 = vpop.f32.mrb[0].mxu0
    %493 = vmatprep.mubr.bf16.mxu0 0
    %494 = vmatmul.mubr.bf16.gmra.mrb[0].mxu0 %v445
    %v495 = vpop.f32.mrb[0].mxu0
    %v496 = vadd.f32 0.0, %v495
    %v497 = vpop.f32.mrb[0].mxu0
    %v498 = vpop.f32.mrb[0].mxu0
    %v499 = vadd.f32 0.0, %v498
    %v500 = vpop.f32.mrb[0].mxu0
    %501 = vmatprep.mubr.bf16.mxu0 0
    %502 = vmatmul.mubr.bf16.gmra.mrb[0].mxu0 %v448
    %v503 = vpop.f32.mrb[0].mxu0
    %v504 = vadd.f32 0.0, %v503
    %v505 = vpop.f32.mrb[0].mxu0
    %v506 = vpop.f32.mrb[0].mxu0
    %v507 = vadd.f32 0.0, %v506
    %v508 = vpop.f32.mrb[0].mxu0
    %509 = vmatprep.mubr.bf16.mxu0 0
    %510 = vmatmul.mubr.bf16.gmra.mrb[0].mxu0 %v451
    %v511 = vpop.f32.mrb[0].mxu0
    %v512 = vadd.f32 0.0, %v511
    %v513 = vpop.f32.mrb[0].mxu0
    %v514 = vpop.f32.mrb[0].mxu0
    %v515 = vadd.f32 0.0, %v514
    %v516 = vpop.f32.mrb[0].mxu0
    %517 = vdwg.mxu0
    %v522 = vunpack.c.l.b16 %v121
    %v523 = vunpack.c.l.b16 %v122
    %v524 = vunpack.c.l.b16 %v123
    %v525 = vunpack.c.l.b16 %v124
    %v526 = vpack.c.b16 %v523, %v522
    %v527 = vpack.c.b16 %v525, %v524
    %v531 = vsel %vm440, %v424, 0
    %v534 = vsel %vm440, %v425, 0
    %v537 = vsel %vm440, %v426, 0
    %v540 = vsel %vm440, %v427, 0
    %542 = vmatprep.subr.bf16.mxu0 0
    %543 = vmatpush1.bf16.msra.mxu0 %v526
    %544 = vmatprep.subr.bf16.mxu0 0
    %545 = vmatpush1.bf16.msra.mxu0 %v527
    %546 = vmatprep.subr.bf16.mxu0 0
    %547 = vmatpush1.bf16.msra.mxu0 0
    %548 = vmatprep.subr.bf16.mxu0 0
    %549 = vmatpush1.bf16.msra.mxu0 0
    %550 = vmatprep.subr.bf16.mxu0 0
    %551 = vmatpush1.bf16.msra.mxu0 0
    %552 = vmatprep.subr.bf16.mxu0 0
    %553 = vmatpush1.bf16.msra.mxu0 0
    %554 = vmatprep.subr.bf16.mxu0 0
    %555 = vmatpush1.bf16.msra.mxu0 0
    %556 = vmatprep.subr.bf16.mxu0 0
    %557 = vmatpush1.bf16.msra.mxu0 0
    %558 = vmatprep.subr.bf16.mxu0 0
    %559 = vmatpush1.bf16.msra.mxu0 0
    %560 = vmatprep.subr.bf16.mxu0 0
    %561 = vmatpush1.bf16.msra.mxu0 0
    %562 = vmatprep.subr.bf16.mxu0 0
    %563 = vmatpush1.bf16.msra.mxu0 0
    %564 = vmatprep.subr.bf16.mxu0 0
    %565 = vmatpush1.bf16.msra.mxu0 0
    %566 = vmatprep.subr.bf16.mxu0 0
    %567 = vmatpush1.bf16.msra.mxu0 0
    %568 = vmatprep.subr.bf16.mxu0 0
    %569 = vmatpush1.bf16.msra.mxu0 0
    %570 = vmatprep.subr.bf16.mxu0 0
    %571 = vmatpush1.bf16.msra.mxu0 0
    %572 = vmatprep.subr.bf16.mxu0 0
    %573 = vmatpush1.bf16.msra.mxu0 0
    %574 = vmatprep.mubr.bf16.mxu0 0
    %575 = vmatmul.mubr.bf16.gmra.mrb[0].mxu0 %v531
    %v576 = vpop.f32.mrb[0].mxu0
    %v577 = vadd.f32 %v488, %v576
    %v578 = vpop.f32.mrb[0].mxu0
    %v579 = vpop.f32.mrb[0].mxu0
    %v580 = vadd.f32 %v491, %v579
    %v581 = vpop.f32.mrb[0].mxu0
    %582 = vmatprep.mubr.bf16.mxu0 0
    %583 = vmatmul.mubr.bf16.gmra.mrb[0].mxu0 %v534
    %v584 = vpop.f32.mrb[0].mxu0
    %v585 = vadd.f32 %v496, %v584
    %v586 = vpop.f32.mrb[0].mxu0
    %v587 = vpop.f32.mrb[0].mxu0
    %v588 = vadd.f32 %v499, %v587
    %v589 = vpop.f32.mrb[0].mxu0
    %590 = vmatprep.mubr.bf16.mxu0 0
    %591 = vmatmul.mubr.bf16.gmra.mrb[0].mxu0 %v537
    %v592 = vpop.f32.mrb[0].mxu0
    %v593 = vadd.f32 %v504, %v592
    %v594 = vpop.f32.mrb[0].mxu0
    %v595 = vpop.f32.mrb[0].mxu0
    %v596 = vadd.f32 %v507, %v595
    %v597 = vpop.f32.mrb[0].mxu0
    %598 = vmatprep.mubr.bf16.mxu0 0
    %599 = vmatmul.mubr.bf16.gmra.mrb[0].mxu0 %v540
    %v600 = vpop.f32.mrb[0].mxu0
    %v601 = vadd.f32 %v512, %v600
    %v602 = vpop.f32.mrb[0].mxu0
    %v603 = vpop.f32.mrb[0].mxu0
    %v604 = vadd.f32 %v515, %v603
    %v605 = vpop.f32.mrb[0].mxu0
    %606 = vdwg.mxu0
    %v607 = vlaneseq
    %v608 = vshrl.u32 %v607, 7
    %v609 = vsub.s32 0, %v608
    %v610 = vrot.slane %v257, %v609
    %v611 = vadd.f32 %v577, %v610
    %v612 = vadd.f32 %v580, %v610
    %v613 = vadd.f32 %v585, %v610
    %v614 = vadd.f32 %v588, %v610
    %v615 = vadd.f32 %v593, %v610
    %v616 = vadd.f32 %v596, %v610
    %v617 = vadd.f32 %v601, %v610
    %v618 = vadd.f32 %v604, %v610
    %v619 = vmax.f32 %v611, 0.0
    %v620 = vmax.f32 %v612, 0.0
    %v621 = vmax.f32 %v613, 0.0
    %v622 = vmax.f32 %v614, 0.0
    %v623 = vmax.f32 %v615, 0.0
    %v624 = vmax.f32 %v616, 0.0
    %v625 = vmax.f32 %v617, 0.0
    %v626 = vmax.f32 %v618, 0.0
    %v627 = vlaneseq
    %v628 = vshrl.u32 %v627, 7
    %v629 = vsub.s32 0, %v628
    %v630 = vrot.slane %v258, %v629
    %v631 = vmul.f32 %v619, %v630
    %v632 = vmul.f32 %v620, %v630
    %v633 = vmul.f32 %v621, %v630
    %v634 = vmul.f32 %v622, %v630
    %v635 = vmul.f32 %v623, %v630
    %v636 = vmul.f32 %v624, %v630
    %v637 = vmul.f32 %v625, %v630
    %v638 = vmul.f32 %v626, %v630
    %639 = vadd.xlane.f32.xlu0 %v631
    %v640 = vpop.xlane.xlu0 %639
    %641 = vadd.xlane.f32.xlu0 %v632
    %v642 = vpop.xlane.xlu0 %641
    %643 = vadd.xlane.f32.xlu0 %v633
    %v644 = vpop.xlane.xlu0 %643
    %645 = vadd.xlane.f32.xlu0 %v634
    %v646 = vpop.xlane.xlu0 %645
    %647 = vadd.xlane.f32.xlu0 %v635
    %v648 = vpop.xlane.xlu0 %647
    %649 = vadd.xlane.f32.xlu0 %v636
    %v650 = vpop.xlane.xlu0 %649
    %651 = vadd.xlane.f32.xlu0 %v637
    %v652 = vpop.xlane.xlu0 %651
    %653 = vadd.xlane.f32.xlu0 %v638
    %v654 = vpop.xlane.xlu0 %653
    %v655 = vtanh.pop %v640
    %v656 = vtanh.pop %v642
    %v657 = vtanh.pop %v644
    %v658 = vtanh.pop %v646
    %v659 = vtanh.pop %v648
    %v660 = vtanh.pop %v650
    %v661 = vtanh.pop %v652
    %v662 = vtanh.pop %v654
    %663 = vxpose.xlu0.b32.start [1/16] %v640, 128
    %664 = vxpose.xlu0.b32.cont [2/16] %v642, 128
    %665 = vxpose.xlu0.b32.cont [3/16] %v644, 128
    %666 = vxpose.xlu0.b32.cont [4/16] %v646, 128
    %667 = vxpose.xlu0.b32.cont [5/16] %v648, 128
    %668 = vxpose.xlu0.b32.cont [6/16] %v650, 128
    %669 = vxpose.xlu0.b32.cont [7/16] %v652, 128
    %670 = vxpose.xlu0.b32.cont [8/16] %v654, 128
    %671 = vxpose.xlu0.b32.cont [9/16] 0.0, 128
    %672 = vxpose.xlu0.b32.cont [10/16] 0.0, 128
    %673 = vxpose.xlu0.b32.cont [11/16] 0.0, 128
    %674 = vxpose.xlu0.b32.cont [12/16] 0.0, 128
    %675 = vxpose.xlu0.b32.cont [13/16] 0.0, 128
    %676 = vxpose.xlu0.b32.cont [14/16] 0.0, 128
    %677 = vxpose.xlu0.b32.cont [15/16] 0.0, 128
    %678 = vxpose.xlu0.b32.end [16/16] 0.0, 128
    %v679 = vpop.trf.xlu0
    %v680 = vpop.trf.xlu0
    %v681 = vpop.trf.xlu0
    %v682 = vpop.trf.xlu0
    %v683 = vpop.trf.xlu0
    %v684 = vpop.trf.xlu0
    %v685 = vpop.trf.xlu0
    %v686 = vpop.trf.xlu0
    %v687 = vpop.trf.xlu0
    %v688 = vpop.trf.xlu0
    %v689 = vpop.trf.xlu0
    %v690 = vpop.trf.xlu0
    %v691 = vpop.trf.xlu0
    %v692 = vpop.trf.xlu0
    %v693 = vpop.trf.xlu0
    %v694 = vpop.trf.xlu0
    %v695 = vlaneseq
    %v696 = vshrl.u32 %v695, 7
    %v697 = vsub.s32 0, %v696
    %v698 = vrot.slane %v679, %v697
    %vm699 = vcmp.gt.f32.partialorder %v698, %v640
    %vm700 = vcmp.gt.f32.partialorder %v698, %v642
    %vm701 = vcmp.gt.f32.partialorder %v698, %v644
    %vm702 = vcmp.gt.f32.partialorder %v698, %v646
    %vm703 = vcmp.gt.f32.partialorder %v698, %v648
    %vm704 = vcmp.gt.f32.partialorder %v698, %v650
    %vm705 = vcmp.gt.f32.partialorder %v698, %v652
    %vm706 = vcmp.gt.f32.partialorder %v698, %v654
    %vm707 = vcmp.eq.f32.partialorder %v698, %v640
    %vm708 = vcmp.eq.f32.partialorder %v698, %v642
    %vm709 = vcmp.eq.f32.partialorder %v698, %v644
    %vm710 = vcmp.eq.f32.partialorder %v698, %v646
    %vm711 = vcmp.eq.f32.partialorder %v698, %v648
    %vm712 = vcmp.eq.f32.partialorder %v698, %v650
    %vm713 = vcmp.eq.f32.partialorder %v698, %v652
    %vm714 = vcmp.eq.f32.partialorder %v698, %v654
    %vm715 = vmand %vm707, %vm113
    %vm716 = vmand %vm708, %vm114
    %vm717 = vmand %vm709, %vm115
    %vm718 = vmand %vm710, %vm116
    %vm719 = vmand %vm711, %vm117
    %vm720 = vmand %vm712, %vm118
    %vm721 = vmand %vm713, %vm119
    %vm722 = vmand %vm714, %vm120
    %vm723 = vmor %vm699, %vm715
    %vm724 = vmor %vm700, %vm716
    %vm725 = vmor %vm701, %vm717
    %vm726 = vmor %vm702, %vm718
    %vm727 = vmor %vm703, %vm719
    %vm728 = vmor %vm704, %vm720
    %vm729 = vmor %vm705, %vm721
    %vm730 = vmor %vm706, %vm722
    %v731 = vsel %vm723, %v94, 0.0
    %v732 = vsel %vm724, %v95, 0.0
    %v733 = vsel %vm725, %v96, 0.0
    %v734 = vsel %vm726, %v97, 0.0
    %v735 = vsel %vm727, %v98, 0.0
    %v736 = vsel %vm728, %v99, 0.0
    %v737 = vsel %vm729, %v100, 0.0
    %v738 = vsel %vm730, %v101, 0.0
    %v739 = vsel %vm274, %v731, 0.0
    %740 = vadd.xlane.f32.xlu0 %v739
    %v741 = vpop.xlane.xlu0 %740
    %v742 = vsel %vm274, %v732, 0.0
    %743 = vadd.xlane.f32.xlu0 %v742
    %v744 = vpop.xlane.xlu0 %743
    %v745 = vsel %vm274, %v733, 0.0
    %746 = vadd.xlane.f32.xlu0 %v745
    %v747 = vpop.xlane.xlu0 %746
    %v748 = vsel %vm274, %v734, 0.0
    %749 = vadd.xlane.f32.xlu0 %v748
    %v750 = vpop.xlane.xlu0 %749
    %v751 = vsel %vm274, %v735, 0.0
    %752 = vadd.xlane.f32.xlu0 %v751
    %v753 = vpop.xlane.xlu0 %752
    %v754 = vsel %vm274, %v736, 0.0
    %755 = vadd.xlane.f32.xlu0 %v754
    %v756 = vpop.xlane.xlu0 %755
    %v757 = vsel %vm274, %v737, 0.0
    %758 = vadd.xlane.f32.xlu0 %v757
    %v759 = vpop.xlane.xlu0 %758
    %v760 = vsel %vm274, %v738, 0.0
    %761 = vadd.xlane.f32.xlu0 %v760
    %v762 = vpop.xlane.xlu0 %761
    %v763 = vsel %vm274, %v94, 0.0
    %764 = vadd.xlane.f32.xlu0 %v763
    %v765 = vpop.xlane.xlu0 %764
    %v766 = vsel %vm274, %v95, 0.0
    %767 = vadd.xlane.f32.xlu0 %v766
    %v768 = vpop.xlane.xlu0 %767
    %v769 = vsel %vm274, %v96, 0.0
    %770 = vadd.xlane.f32.xlu0 %v769
    %v771 = vpop.xlane.xlu0 %770
    %v772 = vsel %vm274, %v97, 0.0
    %773 = vadd.xlane.f32.xlu0 %v772
    %v774 = vpop.xlane.xlu0 %773
    %v775 = vsel %vm274, %v98, 0.0
    %776 = vadd.xlane.f32.xlu0 %v775
    %v777 = vpop.xlane.xlu0 %776
    %v778 = vsel %vm274, %v99, 0.0
    %779 = vadd.xlane.f32.xlu0 %v778
    %v780 = vpop.xlane.xlu0 %779
    %v781 = vsel %vm274, %v100, 0.0
    %782 = vadd.xlane.f32.xlu0 %v781
    %v783 = vpop.xlane.xlu0 %782
    %v784 = vsel %vm274, %v101, 0.0
    %785 = vadd.xlane.f32.xlu0 %v784
    %v786 = vpop.xlane.xlu0 %785
    %v787 = vmul.f32 %v741, 2.0
    %v788 = vmul.f32 %v744, 2.0
    %v789 = vmul.f32 %v747, 2.0
    %v790 = vmul.f32 %v750, 2.0
    %v791 = vmul.f32 %v753, 2.0
    %v792 = vmul.f32 %v756, 2.0
    %v793 = vmul.f32 %v759, 2.0
    %v794 = vmul.f32 %v762, 2.0
    %vm795 = vcmp.lt.f32.partialorder %v787, %v765
    %vm796 = vcmp.lt.f32.partialorder %v788, %v768
    %vm797 = vcmp.lt.f32.partialorder %v789, %v771
    %vm798 = vcmp.lt.f32.partialorder %v790, %v774
    %vm799 = vcmp.lt.f32.partialorder %v791, %v777
    %vm800 = vcmp.lt.f32.partialorder %v792, %v780
    %vm801 = vcmp.lt.f32.partialorder %v793, %v783
    %vm802 = vcmp.lt.f32.partialorder %v794, %v786
    %v803 = vsel %vm795, 1, 0
    %v804 = vsel %vm796, 1, 0
    %v805 = vsel %vm797, 1, 0
    %v806 = vsel %vm798, 1, 0
    %v807 = vsel %vm799, 1, 0
    %v808 = vsel %vm800, 1, 0
    %v809 = vsel %vm801, 1, 0
    %v810 = vsel %vm802, 1, 0
    %v811 = vcvt.s32.f32 %v803
    %v812 = vcvt.s32.f32 %v804
    %v813 = vcvt.s32.f32 %v805
    %v814 = vcvt.s32.f32 %v806
    %v815 = vcvt.s32.f32 %v807
    %v816 = vcvt.s32.f32 %v808
    %v817 = vcvt.s32.f32 %v809
    %v818 = vcvt.s32.f32 %v810
    %v819 = vmul.f32 %v619, %v655
    %v820 = vmul.f32 %v620, %v656
    %v821 = vmul.f32 %v621, %v657
    %v822 = vmul.f32 %v622, %v658
    %v823 = vmul.f32 %v623, %v659
    %v824 = vmul.f32 %v624, %v660
    %v825 = vmul.f32 %v625, %v661
    %v826 = vmul.f32 %v626, %v662
    %v827 = vmul.f32 %v819, %v811
    %v828 = vmul.f32 %v820, %v812
    %v829 = vmul.f32 %v821, %v813
    %v830 = vmul.f32 %v822, %v814
    %v831 = vmul.f32 %v823, %v815
    %v832 = vmul.f32 %v824, %v816
    %v833 = vmul.f32 %v825, %v817
    %v834 = vmul.f32 %v826, %v818
    %835 = vxpose.xlu0.b32.start [1/16] %v811, 128
    %836 = vxpose.xlu0.b32.cont [2/16] %v812, 128
    %837 = vxpose.xlu0.b32.cont [3/16] %v813, 128
    %838 = vxpose.xlu0.b32.cont [4/16] %v814, 128
    %839 = vxpose.xlu0.b32.cont [5/16] %v815, 128
    %840 = vxpose.xlu0.b32.cont [6/16] %v816, 128
    %841 = vxpose.xlu0.b32.cont [7/16] %v817, 128
    %842 = vxpose.xlu0.b32.cont [8/16] %v818, 128
    %843 = vxpose.xlu0.b32.cont [9/16] 0.0, 128
    %844 = vxpose.xlu0.b32.cont [10/16] 0.0, 128
    %845 = vxpose.xlu0.b32.cont [11/16] 0.0, 128
    %846 = vxpose.xlu0.b32.cont [12/16] 0.0, 128
    %847 = vxpose.xlu0.b32.cont [13/16] 0.0, 128
    %848 = vxpose.xlu0.b32.cont [14/16] 0.0, 128
    %849 = vxpose.xlu0.b32.cont [15/16] 0.0, 128
    %850 = vxpose.xlu0.b32.end [16/16] 0.0, 128
    %v851 = vpop.trf.xlu0
    %v852 = vpop.trf.xlu0
    %v853 = vpop.trf.xlu0
    %v854 = vpop.trf.xlu0
    %v855 = vpop.trf.xlu0
    %v856 = vpop.trf.xlu0
    %v857 = vpop.trf.xlu0
    %v858 = vpop.trf.xlu0
    %v859 = vpop.trf.xlu0
    %v860 = vpop.trf.xlu0
    %v861 = vpop.trf.xlu0
    %v862 = vpop.trf.xlu0
    %v863 = vpop.trf.xlu0
    %v864 = vpop.trf.xlu0
    %v865 = vpop.trf.xlu0
    %v866 = vpop.trf.xlu0
    %vm867 = vcmp.eq.s32.totalorder %v77, %v103
    %v868 = vsel %vm867, 1, 0
    %v869 = vcvt.s32.f32 %v868
    %v870 = vlaneseq
    %v871 = vshrl.u32 %v870, 7
    %v872 = vsub.s32 0, %v871
    %v873 = vrot.slane %v851, %v872
    %v874 = vmul.f32 %v869, %v873
    %vm875 = vcmask 517120
    %v876 = vsel %vm875, %v874, 0.0
    %877 = vadd.xlane.f32.xlu0 %v876
    %v878 = vpop.xlane.xlu0 %877
    %v880 = vsel %vm274, %v874, 0
    %882 = vmatprep.subr.mxu0 0.0
    %883 = vmatpush1.msra.mxu0 %v827
    %884 = vmatprep.subr.mxu0 0.0
    %885 = vmatpush1.msra.mxu0 %v828
    %886 = vmatprep.subr.mxu0 0.0
    %887 = vmatpush1.msra.mxu0 %v829
    %888 = vmatprep.subr.mxu0 0.0
    %889 = vmatpush1.msra.mxu0 %v830
    %890 = vmatprep.subr.mxu0 0.0
    %891 = vmatpush1.msra.mxu0 %v831
    %892 = vmatprep.subr.mxu0 0.0
    %893 = vmatpush1.msra.mxu0 %v832
    %894 = vmatprep.subr.mxu0 0.0
    %895 = vmatpush1.msra.mxu0 %v833
    %896 = vmatprep.subr.mxu0 0.0
    %897 = vmatpush1.msra.mxu0 %v834
    %898 = vmatprep.subr.mxu0 0.0
    %899 = vmatpush1.msra.mxu0 0.0
    %900 = vmatprep.subr.mxu0 0.0
    %901 = vmatpush1.msra.mxu0 0.0
    %902 = vmatprep.subr.mxu0 0.0
    %903 = vmatpush1.msra.mxu0 0.0
    %904 = vmatprep.subr.mxu0 0.0
    %905 = vmatpush1.msra.mxu0 0.0
    %906 = vmatprep.subr.mxu0 0.0
    %907 = vmatpush1.msra.mxu0 0.0
    %908 = vmatprep.subr.mxu0 0.0
    %909 = vmatpush1.msra.mxu0 0.0
    %910 = vmatprep.subr.mxu0 0.0
    %911 = vmatpush1.msra.mxu0 0.0
    %912 = vmatprep.subr.mxu0 0.0
    %913 = vmatpush1.msra.mxu0 0.0
    %914 = vmatprep.subr.mxu0 0.0
    %915 = vmatpush1.msra.mxu0 0.0
    %916 = vmatprep.subr.mxu0 0.0
    %917 = vmatpush1.msra.mxu0 0.0
    %918 = vmatprep.subr.mxu0 0.0
    %919 = vmatpush1.msra.mxu0 0.0
    %920 = vmatprep.subr.mxu0 0.0
    %921 = vmatpush1.msra.mxu0 0.0
    %922 = vmatprep.subr.mxu0 0.0
    %923 = vmatpush1.msra.mxu0 0.0
    %924 = vmatprep.subr.mxu0 0.0
    %925 = vmatpush1.msra.mxu0 0.0
    %926 = vmatprep.subr.mxu0 0.0
    %927 = vmatpush1.msra.mxu0 0.0
    %928 = vmatprep.subr.mxu0 0.0
    %929 = vmatpush1.msra.mxu0 0.0
    %930 = vmatprep.subr.mxu0 0.0
    %931 = vmatpush1.msra.mxu0 0.0
    %932 = vmatprep.subr.mxu0 0.0
    %933 = vmatpush1.msra.mxu0 0.0
    %934 = vmatprep.subr.mxu0 0.0
    %935 = vmatpush1.msra.mxu0 0.0
    %936 = vmatprep.subr.mxu0 0.0
    %937 = vmatpush1.msra.mxu0 0.0
    %938 = vmatprep.subr.mxu0 0.0
    %939 = vmatpush1.msra.mxu0 0.0
    %940 = vmatprep.subr.mxu0 0.0
    %941 = vmatpush1.msra.mxu0 0.0
    %942 = vmatprep.subr.mxu0 0.0
    %943 = vmatpush1.msra.mxu0 0.0
    %944 = vmatprep.subr.mxu0 0.0
    %945 = vmatpush1.msra.mxu0 0.0
    %946 = vmatprep.mubr.f32.mxu0 0.0
    %947 = vmatmul.mubr.f32.gmra.mrb[0].mxu0 %v880
    %v948 = vpop.f32.mrb[0].mxu0
    %v949 = vadd.f32 0.0, %v948
    %v950 = vpop.f32.mrb[0].mxu0
    %951 = vdwg.mxu0
    %v952 = vmax.f32 %v878, 1.0
    %v953 = vrcp.pop %v952
    %v954 = vmul.f32 %v949, %v953
    %vm955 = vcmp.eq.s32.totalorder %v41, 0
    %vm956 = vcmp.eq.s32.totalorder %v42, 0
    %vm957 = vcmp.eq.s32.totalorder %v43, 0
    %vm958 = vcmp.eq.s32.totalorder %v44, 0
    %vm959 = vcmp.eq.s32.totalorder %v45, 0
    %vm960 = vcmp.eq.s32.totalorder %v46, 0
    %vm961 = vcmp.eq.s32.totalorder %v47, 0
    %vm962 = vcmp.eq.s32.totalorder %v48, 0
    %vm963 = vcmp.gt.f32.partialorder %v811, 0.0
    %vm964 = vcmp.gt.f32.partialorder %v812, 0.0
    %vm965 = vcmp.gt.f32.partialorder %v813, 0.0
    %vm966 = vcmp.gt.f32.partialorder %v814, 0.0
    %vm967 = vcmp.gt.f32.partialorder %v815, 0.0
    %vm968 = vcmp.gt.f32.partialorder %v816, 0.0
    %vm969 = vcmp.gt.f32.partialorder %v817, 0.0
    %vm970 = vcmp.gt.f32.partialorder %v818, 0.0
    %vm971 = vmand %vm955, %vm963
    %vm972 = vmand %vm956, %vm964
    %vm973 = vmand %vm957, %vm965
    %vm974 = vmand %vm958, %vm966
    %vm975 = vmand %vm959, %vm967
    %vm976 = vmand %vm960, %vm968
    %vm977 = vmand %vm961, %vm969
    %vm978 = vmand %vm962, %vm970
    %v979 = vsel %vm971, 1, 0
    %v980 = vsel %vm972, 1, 0
    %v981 = vsel %vm973, 1, 0
    %v982 = vsel %vm974, 1, 0
    %v983 = vsel %vm975, 1, 0
    %v984 = vsel %vm976, 1, 0
    %v985 = vsel %vm977, 1, 0
    %v986 = vsel %vm978, 1, 0
    %987 = vset.pattern.permute.xlu0 0
    %988 = vperm.xlu0 %987, %v979
    %v989 = vpop.permute.xlu0 %988
    %990 = vset.pattern.permute.xlu0 0
    %991 = vperm.xlu0 %990, %v980
    %v992 = vpop.permute.xlu0 %991
    %993 = vset.pattern.permute.xlu0 0
    %994 = vperm.xlu0 %993, %v981
    %v995 = vpop.permute.xlu0 %994
    %996 = vset.pattern.permute.xlu0 0
    %997 = vperm.xlu0 %996, %v982
    %v998 = vpop.permute.xlu0 %997
    %999 = vset.pattern.permute.xlu0 0
    %1000 = vperm.xlu0 %999, %v983
    %v1001 = vpop.permute.xlu0 %1000
    %1002 = vset.pattern.permute.xlu0 0
    %1003 = vperm.xlu0 %1002, %v984
    %v1004 = vpop.permute.xlu0 %1003
    %1005 = vset.pattern.permute.xlu0 0
    %1006 = vperm.xlu0 %1005, %v985
    %v1007 = vpop.permute.xlu0 %1006
    %1008 = vset.pattern.permute.xlu0 0
    %1009 = vperm.xlu0 %1008, %v986
    %v1010 = vpop.permute.xlu0 %1009
    %vm1011 = vcmp.eq.s32.totalorder %v989, 1
    %vm1012 = vcmp.eq.s32.totalorder %v992, 1
    %vm1013 = vcmp.eq.s32.totalorder %v995, 1
    %vm1014 = vcmp.eq.s32.totalorder %v998, 1
    %vm1015 = vcmp.eq.s32.totalorder %v1001, 1
    %vm1016 = vcmp.eq.s32.totalorder %v1004, 1
    %vm1017 = vcmp.eq.s32.totalorder %v1007, 1
    %vm1018 = vcmp.eq.s32.totalorder %v1010, 1
    %v1019 = vsel %vm1011, %v827, -3e+38
    %v1020 = vsel %vm1012, %v828, -3e+38
    %v1021 = vsel %vm1013, %v829, -3e+38
    %v1022 = vsel %vm1014, %v830, -3e+38
    %v1023 = vsel %vm1015, %v831, -3e+38
    %v1024 = vsel %vm1016, %v832, -3e+38
    %v1025 = vsel %vm1017, %v833, -3e+38
    %v1026 = vsel %vm1018, %v834, -3e+38
    %v1027 = vmax.f32 %v1019, %v1023
    %v1028 = vmax.f32 %v1020, %v1024
    %v1029 = vmax.f32 %v1021, %v1025
    %v1030 = vmax.f32 %v1022, %v1026
    %v1031 = vmax.f32 %v1027, %v1028
    %v1032 = vmax.f32 %v1029, %v1030
    %v1033 = vmax.f32 %v1031, %v1032
    %v1034 = vrot.slane %v1033, 4
    %v1035 = vmax.f32 %v1033, %v1034
    %v1036 = vrot.slane %v1035, 2
    %v1037 = vmax.f32 %v1035, %v1036
    %v1038 = vrot.slane %v1037, 1
    %v1039 = vmax.f32 %v1037, %v1038
    %vm1040 = vcmp.eq.s32.totalorder %v41, 1
    %vm1041 = vcmp.eq.s32.totalorder %v42, 1
    %vm1042 = vcmp.eq.s32.totalorder %v43, 1
    %vm1043 = vcmp.eq.s32.totalorder %v44, 1
    %vm1044 = vcmp.eq.s32.totalorder %v45, 1
    %vm1045 = vcmp.eq.s32.totalorder %v46, 1
    %vm1046 = vcmp.eq.s32.totalorder %v47, 1
    %vm1047 = vcmp.eq.s32.totalorder %v48, 1
    %vm1048 = vmand %vm1040, %vm963
    %vm1049 = vmand %vm1041, %vm964
    %vm1050 = vmand %vm1042, %vm965
    %vm1051 = vmand %vm1043, %vm966
    %vm1052 = vmand %vm1044, %vm967
    %vm1053 = vmand %vm1045, %vm968
    %vm1054 = vmand %vm1046, %vm969
    %vm1055 = vmand %vm1047, %vm970
    %v1056 = vsel %vm1048, 1, 0
    %v1057 = vsel %vm1049, 1, 0
    %v1058 = vsel %vm1050, 1, 0
    %v1059 = vsel %vm1051, 1, 0
    %v1060 = vsel %vm1052, 1, 0
    %v1061 = vsel %vm1053, 1, 0
    %v1062 = vsel %vm1054, 1, 0
    %v1063 = vsel %vm1055, 1, 0
    %1064 = vset.pattern.permute.xlu0 0
    %1065 = vperm.xlu0 %1064, %v1056
    %v1066 = vpop.permute.xlu0 %1065
    %1067 = vset.pattern.permute.xlu0 0
    %1068 = vperm.xlu0 %1067, %v1057
    %v1069 = vpop.permute.xlu0 %1068
    %1070 = vset.pattern.permute.xlu0 0
    %1071 = vperm.xlu0 %1070, %v1058
    %v1072 = vpop.permute.xlu0 %1071
    %1073 = vset.pattern.permute.xlu0 0
    %1074 = vperm.xlu0 %1073, %v1059
    %v1075 = vpop.permute.xlu0 %1074
    %1076 = vset.pattern.permute.xlu0 0
    %1077 = vperm.xlu0 %1076, %v1060
    %v1078 = vpop.permute.xlu0 %1077
    %1079 = vset.pattern.permute.xlu0 0
    %1080 = vperm.xlu0 %1079, %v1061
    %v1081 = vpop.permute.xlu0 %1080
    %1082 = vset.pattern.permute.xlu0 0
    %1083 = vperm.xlu0 %1082, %v1062
    %v1084 = vpop.permute.xlu0 %1083
    %1085 = vset.pattern.permute.xlu0 0
    %1086 = vperm.xlu0 %1085, %v1063
    %v1087 = vpop.permute.xlu0 %1086
    %vm1088 = vcmp.eq.s32.totalorder %v1066, 1
    %vm1089 = vcmp.eq.s32.totalorder %v1069, 1
    %vm1090 = vcmp.eq.s32.totalorder %v1072, 1
    %vm1091 = vcmp.eq.s32.totalorder %v1075, 1
    %vm1092 = vcmp.eq.s32.totalorder %v1078, 1
    %vm1093 = vcmp.eq.s32.totalorder %v1081, 1
    %vm1094 = vcmp.eq.s32.totalorder %v1084, 1
    %vm1095 = vcmp.eq.s32.totalorder %v1087, 1
    %v1096 = vsel %vm1088, %v827, -3e+38
    %v1097 = vsel %vm1089, %v828, -3e+38
    %v1098 = vsel %vm1090, %v829, -3e+38
    %v1099 = vsel %vm1091, %v830, -3e+38
    %v1100 = vsel %vm1092, %v831, -3e+38
    %v1101 = vsel %vm1093, %v832, -3e+38
    %v1102 = vsel %vm1094, %v833, -3e+38
    %v1103 = vsel %vm1095, %v834, -3e+38
    %v1104 = vmax.f32 %v1096, %v1100
    %v1105 = vmax.f32 %v1097, %v1101
    %v1106 = vmax.f32 %v1098, %v1102
    %v1107 = vmax.f32 %v1099, %v1103
    %v1108 = vmax.f32 %v1104, %v1105
    %v1109 = vmax.f32 %v1106, %v1107
    %v1110 = vmax.f32 %v1108, %v1109
    %v1111 = vrot.slane %v1110, 4
    %v1112 = vmax.f32 %v1110, %v1111
    %v1113 = vrot.slane %v1112, 2
    %v1114 = vmax.f32 %v1112, %v1113
    %v1115 = vrot.slane %v1114, 1
    %v1116 = vmax.f32 %v1114, %v1115
    %vm1117 = vcmask 1040384
    %v1118 = vsel %vm1117, %v1039, %v1116
    %v1119 = vmul.f32 %v33, %v873
    %v1120 = vmul.f32 %v34, %v873
    %v1121 = vmul.f32 %v35, %v873
    %v1122 = vmul.f32 %v36, %v873
    %v1123 = vmul.f32 %v37, %v873
    %v1124 = vmul.f32 %v38, %v873
    %v1125 = vmul.f32 %v39, %v873
    %v1126 = vmul.f32 %v40, %v873
    %v1127 = vsel %vm274, %v1119, 0.0
    %1128 = vadd.xlane.f32.xlu0 %v1127
    %v1129 = vpop.xlane.xlu0 %1128
    %v1130 = vsel %vm274, %v1120, 0.0
    %1131 = vadd.xlane.f32.xlu0 %v1130
    %v1132 = vpop.xlane.xlu0 %1131
    %v1133 = vsel %vm274, %v1121, 0.0
    %1134 = vadd.xlane.f32.xlu0 %v1133
    %v1135 = vpop.xlane.xlu0 %1134
    %v1136 = vsel %vm274, %v1122, 0.0
    %1137 = vadd.xlane.f32.xlu0 %v1136
    %v1138 = vpop.xlane.xlu0 %1137
    %v1139 = vsel %vm274, %v1123, 0.0
    %1140 = vadd.xlane.f32.xlu0 %v1139
    %v1141 = vpop.xlane.xlu0 %1140
    %v1142 = vsel %vm274, %v1124, 0.0
    %1143 = vadd.xlane.f32.xlu0 %v1142
    %v1144 = vpop.xlane.xlu0 %1143
    %v1145 = vsel %vm274, %v1125, 0.0
    %1146 = vadd.xlane.f32.xlu0 %v1145
    %v1147 = vpop.xlane.xlu0 %1146
    %v1148 = vsel %vm274, %v1126, 0.0
    %1149 = vadd.xlane.f32.xlu0 %v1148
    %v1150 = vpop.xlane.xlu0 %1149
    %v1151 = vmax.f32 %v1129, 1.0
    %v1152 = vmax.f32 %v1132, 1.0
    %v1153 = vmax.f32 %v1135, 1.0
    %v1154 = vmax.f32 %v1138, 1.0
    %v1155 = vmax.f32 %v1141, 1.0
    %v1156 = vmax.f32 %v1144, 1.0
    %v1157 = vmax.f32 %v1147, 1.0
    %v1158 = vmax.f32 %v1150, 1.0
    %v1159 = vrcp.pop %v1151
    %v1160 = vrcp.pop %v1152
    %v1161 = vrcp.pop %v1153
    %v1162 = vrcp.pop %v1154
    %v1163 = vrcp.pop %v1155
    %v1164 = vrcp.pop %v1156
    %v1165 = vrcp.pop %v1157
    %v1166 = vrcp.pop %v1158
    %v1167 = vpack.c.bf16 %v828, %v827
    %v1168 = vpack.c.bf16 %v830, %v829
    %v1169 = vpack.c.bf16 %v832, %v831
    %v1170 = vpack.c.bf16 %v834, %v833
    %1171 = vmatprep.subr.bf16.mxu0 0
    %1172 = vmatpush1.bf16.msra.mxu0 %v1167
    %1173 = vmatprep.subr.bf16.mxu0 0
    %1174 = vmatpush1.bf16.msra.mxu0 %v1168
    %1175 = vmatprep.subr.bf16.mxu0 0
    %1176 = vmatpush1.bf16.msra.mxu0 %v1169
    %1177 = vmatprep.subr.bf16.mxu0 0
    %1178 = vmatpush1.bf16.msra.mxu0 %v1170
    %1179 = vmatprep.subr.bf16.mxu0 0
    %1180 = vmatpush1.bf16.msra.mxu0 0
    %1181 = vmatprep.subr.bf16.mxu0 0
    %1182 = vmatpush1.bf16.msra.mxu0 0
    %1183 = vmatprep.subr.bf16.mxu0 0
    %1184 = vmatpush1.bf16.msra.mxu0 0
    %1185 = vmatprep.subr.bf16.mxu0 0
    %1186 = vmatpush1.bf16.msra.mxu0 0
    %1187 = vmatprep.subr.bf16.mxu0 0
    %1188 = vmatpush1.bf16.msra.mxu0 0
    %1189 = vmatprep.subr.bf16.mxu0 0
    %1190 = vmatpush1.bf16.msra.mxu0 0
    %1191 = vmatprep.subr.bf16.mxu0 0
    %1192 = vmatpush1.bf16.msra.mxu0 0
    %1193 = vmatprep.subr.bf16.mxu0 0
    %1194 = vmatpush1.bf16.msra.mxu0 0
    %1195 = vmatprep.subr.bf16.mxu0 0
    %1196 = vmatpush1.bf16.msra.mxu0 0
    %1197 = vmatprep.subr.bf16.mxu0 0
    %1198 = vmatpush1.bf16.msra.mxu0 0
    %1199 = vmatprep.subr.bf16.mxu0 0
    %1200 = vmatpush1.bf16.msra.mxu0 0
    %1201 = vmatprep.subr.bf16.mxu0 0
    %1202 = vmatpush1.bf16.msra.mxu0 0
    %1203 = vmatprep.mubr.bf16.mxu0 0
    %1204 = vmatmul.mubr.bf16.gmra.mrb[0].mxu0 %v340
    %v1205 = vpop.f32.mrb[0].mxu0
    %v1206 = vadd.f32 0.0, %v1205
    %v1207 = vpop.f32.mrb[0].mxu0
    %v1208 = vpop.f32.mrb[0].mxu0
    %v1209 = vadd.f32 0.0, %v1208
    %v1210 = vpop.f32.mrb[0].mxu0
    %1211 = vmatprep.mubr.bf16.mxu0 0
    %1212 = vmatmul.mubr.bf16.gmra.mrb[0].mxu0 %v343
    %v1213 = vpop.f32.mrb[0].mxu0
    %v1214 = vadd.f32 0.0, %v1213
    %v1215 = vpop.f32.mrb[0].mxu0
    %v1216 = vpop.f32.mrb[0].mxu0
    %v1217 = vadd.f32 0.0, %v1216
    %v1218 = vpop.f32.mrb[0].mxu0
    %1219 = vmatprep.mubr.bf16.mxu0 0
    %1220 = vmatmul.mubr.bf16.gmra.mrb[0].mxu0 %v346
    %v1221 = vpop.f32.mrb[0].mxu0
    %v1222 = vadd.f32 0.0, %v1221
    %v1223 = vpop.f32.mrb[0].mxu0
    %v1224 = vpop.f32.mrb[0].mxu0
    %v1225 = vadd.f32 0.0, %v1224
    %v1226 = vpop.f32.mrb[0].mxu0
    %1227 = vmatprep.mubr.bf16.mxu0 0
    %1228 = vmatmul.mubr.bf16.gmra.mrb[0].mxu0 %v349
    %v1229 = vpop.f32.mrb[0].mxu0
    %v1230 = vadd.f32 0.0, %v1229
    %v1231 = vpop.f32.mrb[0].mxu0
    %v1232 = vpop.f32.mrb[0].mxu0
    %v1233 = vadd.f32 0.0, %v1232
    %v1234 = vpop.f32.mrb[0].mxu0
    %1235 = vdwg.mxu0
    %v1236 = vmul.f32 %v1206, %v1159
    %v1237 = vmul.f32 %v1209, %v1160
    %v1238 = vmul.f32 %v1214, %v1161
    %v1239 = vmul.f32 %v1217, %v1162
    %v1240 = vmul.f32 %v1222, %v1163
    %v1241 = vmul.f32 %v1225, %v1164
    %v1242 = vmul.f32 %v1230, %v1165
    %v1243 = vmul.f32 %v1233, %v1166
    %v1244 = vpack.c.bf16 %v1237, %v1236
    %v1245 = vpack.c.bf16 %v1239, %v1238
    %v1246 = vpack.c.bf16 %v1241, %v1240
    %v1247 = vpack.c.bf16 %v1243, %v1242
    %v1248 = vlaneseq
    %v1249 = vshrl.u32 %v1248, 7
    %v1250 = vsub.s32 0, %v1249
    %v1251 = vrot.slane %v259, %v1250
    %v1284 = vunpack.c.l.b16 %v129
    %v1285 = vunpack.c.l.b16 %v130
    %v1286 = vunpack.c.l.b16 %v131
    %v1287 = vunpack.c.l.b16 %v132
    %v1288 = vunpack.c.l.b16 %v133
    %v1289 = vunpack.c.l.b16 %v134
    %v1290 = vunpack.c.l.b16 %v135
    %v1291 = vunpack.c.l.b16 %v136
    %v1292 = vunpack.c.l.b16 %v137
    %v1293 = vunpack.c.l.b16 %v138
    %v1294 = vunpack.c.l.b16 %v139
    %v1295 = vunpack.c.l.b16 %v140
    %v1296 = vunpack.c.l.b16 %v141
    %v1297 = vunpack.c.l.b16 %v142
    %v1298 = vunpack.c.l.b16 %v143
    %v1299 = vunpack.c.l.b16 %v144
    %v1300 = vunpack.c.l.b16 %v145
    %v1301 = vunpack.c.l.b16 %v146
    %v1302 = vunpack.c.l.b16 %v147
    %v1303 = vunpack.c.l.b16 %v148
    %v1304 = vunpack.c.l.b16 %v149
    %v1305 = vunpack.c.l.b16 %v150
    %v1306 = vunpack.c.l.b16 %v151
    %v1307 = vunpack.c.l.b16 %v152
    %v1308 = vunpack.c.l.b16 %v153
    %v1309 = vunpack.c.l.b16 %v154
    %v1310 = vunpack.c.l.b16 %v155
    %v1311 = vunpack.c.l.b16 %v156
    %v1312 = vunpack.c.l.b16 %v157
    %v1313 = vunpack.c.l.b16 %v158
    %v1314 = vunpack.c.l.b16 %v159
    %v1315 = vunpack.c.l.b16 %v160
    %v1316 = vpack.c.b16 %v1285, %v1284
    %v1317 = vpack.c.b16 %v1287, %v1286
    %v1318 = vpack.c.b16 %v1289, %v1288
    %v1319 = vpack.c.b16 %v1291, %v1290
    %v1320 = vpack.c.b16 %v1293, %v1292
    %v1321 = vpack.c.b16 %v1295, %v1294
    %v1322 = vpack.c.b16 %v1297, %v1296
    %v1323 = vpack.c.b16 %v1299, %v1298
    %v1324 = vpack.c.b16 %v1301, %v1300
    %v1325 = vpack.c.b16 %v1303, %v1302
    %v1326 = vpack.c.b16 %v1305, %v1304
    %v1327 = vpack.c.b16 %v1307, %v1306
    %v1328 = vpack.c.b16 %v1309, %v1308
    %v1329 = vpack.c.b16 %v1311, %v1310
    %v1330 = vpack.c.b16 %v1313, %v1312
    %v1331 = vpack.c.b16 %v1315, %v1314
    %1348 = vmatprep.subr.bf16.mxu0 0
    %1349 = vmatpush1.bf16.msra.mxu0 %v1316
    %1350 = vmatprep.subr.bf16.mxu0 0
    %1351 = vmatpush1.bf16.msra.mxu0 %v1317
    %1352 = vmatprep.subr.bf16.mxu0 0
    %1353 = vmatpush1.bf16.msra.mxu0 %v1318
    %1354 = vmatprep.subr.bf16.mxu0 0
    %1355 = vmatpush1.bf16.msra.mxu0 %v1319
    %1356 = vmatprep.subr.bf16.mxu0 0
    %1357 = vmatpush1.bf16.msra.mxu0 %v1320
    %1358 = vmatprep.subr.bf16.mxu0 0
    %1359 = vmatpush1.bf16.msra.mxu0 %v1321
    %1360 = vmatprep.subr.bf16.mxu0 0
    %1361 = vmatpush1.bf16.msra.mxu0 %v1322
    %1362 = vmatprep.subr.bf16.mxu0 0
    %1363 = vmatpush1.bf16.msra.mxu0 %v1323
    %1364 = vmatprep.subr.bf16.mxu0 0
    %1365 = vmatpush1.bf16.msra.mxu0 %v1324
    %1366 = vmatprep.subr.bf16.mxu0 0
    %1367 = vmatpush1.bf16.msra.mxu0 %v1325
    %1368 = vmatprep.subr.bf16.mxu0 0
    %1369 = vmatpush1.bf16.msra.mxu0 %v1326
    %1370 = vmatprep.subr.bf16.mxu0 0
    %1371 = vmatpush1.bf16.msra.mxu0 %v1327
    %1372 = vmatprep.subr.bf16.mxu0 0
    %1373 = vmatpush1.bf16.msra.mxu0 %v1328
    %1374 = vmatprep.subr.bf16.mxu0 0
    %1375 = vmatpush1.bf16.msra.mxu0 %v1329
    %1376 = vmatprep.subr.bf16.mxu0 0
    %1377 = vmatpush1.bf16.msra.mxu0 %v1330
    %1378 = vmatprep.subr.bf16.mxu0 0
    %1379 = vmatpush1.bf16.msra.mxu0 %v1331
    %1380 = vmatprep.mubr.bf16.mxu0 %v1167
    %1381 = vmatmul.mubr.bf16.gmra.mrb[0].mxu0 %v1244
    %v1382 = vpop.f32.mrb[0].mxu0
    %v1383 = vadd.f32 %v1251, %v1382
    %v1384 = vpop.f32.mrb[0].mxu0
    %v1385 = vpop.f32.mrb[0].mxu0
    %v1386 = vadd.f32 %v1251, %v1385
    %v1387 = vpop.f32.mrb[0].mxu0
    %1388 = vmatprep.mubr.bf16.mxu0 %v1168
    %1389 = vmatmul.mubr.bf16.gmra.mrb[0].mxu0 %v1245
    %v1390 = vpop.f32.mrb[0].mxu0
    %v1391 = vadd.f32 %v1251, %v1390
    %v1392 = vpop.f32.mrb[0].mxu0
    %v1393 = vpop.f32.mrb[0].mxu0
    %v1394 = vadd.f32 %v1251, %v1393
    %v1395 = vpop.f32.mrb[0].mxu0
    %1396 = vmatprep.mubr.bf16.mxu0 %v1169
    %1397 = vmatmul.mubr.bf16.gmra.mrb[0].mxu0 %v1246
    %v1398 = vpop.f32.mrb[0].mxu0
    %v1399 = vadd.f32 %v1251, %v1398
    %v1400 = vpop.f32.mrb[0].mxu0
    %v1401 = vpop.f32.mrb[0].mxu0
    %v1402 = vadd.f32 %v1251, %v1401
    %v1403 = vpop.f32.mrb[0].mxu0
    %1404 = vmatprep.mubr.bf16.mxu0 %v1170
    %1405 = vmatmul.mubr.bf16.gmra.mrb[0].mxu0 %v1247
    %v1406 = vpop.f32.mrb[0].mxu0
    %v1407 = vadd.f32 %v1251, %v1406
    %v1408 = vpop.f32.mrb[0].mxu0
    %v1409 = vpop.f32.mrb[0].mxu0
    %v1410 = vadd.f32 %v1251, %v1409
    %v1411 = vpop.f32.mrb[0].mxu0
    %1412 = vdwg.mxu0
    %v1413 = vmax.f32 %v1383, 0.0
    %v1414 = vmax.f32 %v1386, 0.0
    %v1415 = vmax.f32 %v1391, 0.0
    %v1416 = vmax.f32 %v1394, 0.0
    %v1417 = vmax.f32 %v1399, 0.0
    %v1418 = vmax.f32 %v1402, 0.0
    %v1419 = vmax.f32 %v1407, 0.0
    %v1420 = vmax.f32 %v1410, 0.0
    %v1421 = vlaneseq
    %v1422 = vshrl.u32 %v1421, 7
    %v1423 = vsub.s32 0, %v1422
    %v1424 = vrot.slane %v260, %v1423
    %v1425 = vmul.f32 %v1413, %v1424
    %v1426 = vmul.f32 %v1414, %v1424
    %v1427 = vmul.f32 %v1415, %v1424
    %v1428 = vmul.f32 %v1416, %v1424
    %v1429 = vmul.f32 %v1417, %v1424
    %v1430 = vmul.f32 %v1418, %v1424
    %v1431 = vmul.f32 %v1419, %v1424
    %v1432 = vmul.f32 %v1420, %v1424
    %1433 = vadd.xlane.f32.xlu0 %v1425
    %v1434 = vpop.xlane.xlu0 %1433
    %1435 = vadd.xlane.f32.xlu0 %v1426
    %v1436 = vpop.xlane.xlu0 %1435
    %1437 = vadd.xlane.f32.xlu0 %v1427
    %v1438 = vpop.xlane.xlu0 %1437
    %1439 = vadd.xlane.f32.xlu0 %v1428
    %v1440 = vpop.xlane.xlu0 %1439
    %1441 = vadd.xlane.f32.xlu0 %v1429
    %v1442 = vpop.xlane.xlu0 %1441
    %1443 = vadd.xlane.f32.xlu0 %v1430
    %v1444 = vpop.xlane.xlu0 %1443
    %1445 = vadd.xlane.f32.xlu0 %v1431
    %v1446 = vpop.xlane.xlu0 %1445
    %1447 = vadd.xlane.f32.xlu0 %v1432
    %v1448 = vpop.xlane.xlu0 %1447
    %v1449 = vtanh.pop %v1434
    %v1450 = vtanh.pop %v1436
    %v1451 = vtanh.pop %v1438
    %v1452 = vtanh.pop %v1440
    %v1453 = vtanh.pop %v1442
    %v1454 = vtanh.pop %v1444
    %v1455 = vtanh.pop %v1446
    %v1456 = vtanh.pop %v1448
    %1457 = vxpose.xlu0.b32.start [1/16] %v1434, 128
    %1458 = vxpose.xlu0.b32.cont [2/16] %v1436, 128
    %1459 = vxpose.xlu0.b32.cont [3/16] %v1438, 128
    %1460 = vxpose.xlu0.b32.cont [4/16] %v1440, 128
    %1461 = vxpose.xlu0.b32.cont [5/16] %v1442, 128
    %1462 = vxpose.xlu0.b32.cont [6/16] %v1444, 128
    %1463 = vxpose.xlu0.b32.cont [7/16] %v1446, 128
    %1464 = vxpose.xlu0.b32.cont [8/16] %v1448, 128
    %1465 = vxpose.xlu0.b32.cont [9/16] 0.0, 128
    %1466 = vxpose.xlu0.b32.cont [10/16] 0.0, 128
    %1467 = vxpose.xlu0.b32.cont [11/16] 0.0, 128
    %1468 = vxpose.xlu0.b32.cont [12/16] 0.0, 128
    %1469 = vxpose.xlu0.b32.cont [13/16] 0.0, 128
    %1470 = vxpose.xlu0.b32.cont [14/16] 0.0, 128
    %1471 = vxpose.xlu0.b32.cont [15/16] 0.0, 128
    %1472 = vxpose.xlu0.b32.end [16/16] 0.0, 128
    %v1473 = vpop.trf.xlu0
    %v1474 = vpop.trf.xlu0
    %v1475 = vpop.trf.xlu0
    %v1476 = vpop.trf.xlu0
    %v1477 = vpop.trf.xlu0
    %v1478 = vpop.trf.xlu0
    %v1479 = vpop.trf.xlu0
    %v1480 = vpop.trf.xlu0
    %v1481 = vpop.trf.xlu0
    %v1482 = vpop.trf.xlu0
    %v1483 = vpop.trf.xlu0
    %v1484 = vpop.trf.xlu0
    %v1485 = vpop.trf.xlu0
    %v1486 = vpop.trf.xlu0
    %v1487 = vpop.trf.xlu0
    %v1488 = vpop.trf.xlu0
    %v1489 = vmul.f32 %v94, %v873
    %v1490 = vmul.f32 %v95, %v873
    %v1491 = vmul.f32 %v96, %v873
    %v1492 = vmul.f32 %v97, %v873
    %v1493 = vmul.f32 %v98, %v873
    %v1494 = vmul.f32 %v99, %v873
    %v1495 = vmul.f32 %v100, %v873
    %v1496 = vmul.f32 %v101, %v873
    %v1497 = vlaneseq
    %v1498 = vshrl.u32 %v1497, 7
    %v1499 = vsub.s32 0, %v1498
    %v1500 = vrot.slane %v1473, %v1499
    %vm1501 = vcmp.gt.f32.partialorder %v1500, %v1434
    %vm1502 = vcmp.gt.f32.partialorder %v1500, %v1436
    %vm1503 = vcmp.gt.f32.partialorder %v1500, %v1438
    %vm1504 = vcmp.gt.f32.partialorder %v1500, %v1440
    %vm1505 = vcmp.gt.f32.partialorder %v1500, %v1442
    %vm1506 = vcmp.gt.f32.partialorder %v1500, %v1444
    %vm1507 = vcmp.gt.f32.partialorder %v1500, %v1446
    %vm1508 = vcmp.gt.f32.partialorder %v1500, %v1448
    %vm1509 = vcmp.eq.f32.partialorder %v1500, %v1434
    %vm1510 = vcmp.eq.f32.partialorder %v1500, %v1436
    %vm1511 = vcmp.eq.f32.partialorder %v1500, %v1438
    %vm1512 = vcmp.eq.f32.partialorder %v1500, %v1440
    %vm1513 = vcmp.eq.f32.partialorder %v1500, %v1442
    %vm1514 = vcmp.eq.f32.partialorder %v1500, %v1444
    %vm1515 = vcmp.eq.f32.partialorder %v1500, %v1446
    %vm1516 = vcmp.eq.f32.partialorder %v1500, %v1448
    %vm1517 = vmand %vm1509, %vm113
    %vm1518 = vmand %vm1510, %vm114
    %vm1519 = vmand %vm1511, %vm115
    %vm1520 = vmand %vm1512, %vm116
    %vm1521 = vmand %vm1513, %vm117
    %vm1522 = vmand %vm1514, %vm118
    %vm1523 = vmand %vm1515, %vm119
    %vm1524 = vmand %vm1516, %vm120
    %vm1525 = vmor %vm1501, %vm1517
    %vm1526 = vmor %vm1502, %vm1518
    %vm1527 = vmor %vm1503, %vm1519
    %vm1528 = vmor %vm1504, %vm1520
    %vm1529 = vmor %vm1505, %vm1521
    %vm1530 = vmor %vm1506, %vm1522
    %vm1531 = vmor %vm1507, %vm1523
    %vm1532 = vmor %vm1508, %vm1524
    %v1533 = vsel %vm1525, %v1489, 0.0
    %v1534 = vsel %vm1526, %v1490, 0.0
    %v1535 = vsel %vm1527, %v1491, 0.0
    %v1536 = vsel %vm1528, %v1492, 0.0
    %v1537 = vsel %vm1529, %v1493, 0.0
    %v1538 = vsel %vm1530, %v1494, 0.0
    %v1539 = vsel %vm1531, %v1495, 0.0
    %v1540 = vsel %vm1532, %v1496, 0.0
    %v1541 = vsel %vm274, %v1533, 0.0
    %1542 = vadd.xlane.f32.xlu0 %v1541
    %v1543 = vpop.xlane.xlu0 %1542
    %v1544 = vsel %vm274, %v1534, 0.0
    %1545 = vadd.xlane.f32.xlu0 %v1544
    %v1546 = vpop.xlane.xlu0 %1545
    %v1547 = vsel %vm274, %v1535, 0.0
    %1548 = vadd.xlane.f32.xlu0 %v1547
    %v1549 = vpop.xlane.xlu0 %1548
    %v1550 = vsel %vm274, %v1536, 0.0
    %1551 = vadd.xlane.f32.xlu0 %v1550
    %v1552 = vpop.xlane.xlu0 %1551
    %v1553 = vsel %vm274, %v1537, 0.0
    %1554 = vadd.xlane.f32.xlu0 %v1553
    %v1555 = vpop.xlane.xlu0 %1554
    %v1556 = vsel %vm274, %v1538, 0.0
    %1557 = vadd.xlane.f32.xlu0 %v1556
    %v1558 = vpop.xlane.xlu0 %1557
    %v1559 = vsel %vm274, %v1539, 0.0
    %1560 = vadd.xlane.f32.xlu0 %v1559
    %v1561 = vpop.xlane.xlu0 %1560
    %v1562 = vsel %vm274, %v1540, 0.0
    %1563 = vadd.xlane.f32.xlu0 %v1562
    %v1564 = vpop.xlane.xlu0 %1563
    %v1565 = vsel %vm274, %v1489, 0.0
    %1566 = vadd.xlane.f32.xlu0 %v1565
    %v1567 = vpop.xlane.xlu0 %1566
    %v1568 = vsel %vm274, %v1490, 0.0
    %1569 = vadd.xlane.f32.xlu0 %v1568
    %v1570 = vpop.xlane.xlu0 %1569
    %v1571 = vsel %vm274, %v1491, 0.0
    %1572 = vadd.xlane.f32.xlu0 %v1571
    %v1573 = vpop.xlane.xlu0 %1572
    %v1574 = vsel %vm274, %v1492, 0.0
    %1575 = vadd.xlane.f32.xlu0 %v1574
    %v1576 = vpop.xlane.xlu0 %1575
    %v1577 = vsel %vm274, %v1493, 0.0
    %1578 = vadd.xlane.f32.xlu0 %v1577
    %v1579 = vpop.xlane.xlu0 %1578
    %v1580 = vsel %vm274, %v1494, 0.0
    %1581 = vadd.xlane.f32.xlu0 %v1580
    %v1582 = vpop.xlane.xlu0 %1581
    %v1583 = vsel %vm274, %v1495, 0.0
    %1584 = vadd.xlane.f32.xlu0 %v1583
    %v1585 = vpop.xlane.xlu0 %1584
    %v1586 = vsel %vm274, %v1496, 0.0
    %1587 = vadd.xlane.f32.xlu0 %v1586
    %v1588 = vpop.xlane.xlu0 %1587
    %v1589 = vmul.f32 %v1543, 2.0
    %v1590 = vmul.f32 %v1546, 2.0
    %v1591 = vmul.f32 %v1549, 2.0
    %v1592 = vmul.f32 %v1552, 2.0
    %v1593 = vmul.f32 %v1555, 2.0
    %v1594 = vmul.f32 %v1558, 2.0
    %v1595 = vmul.f32 %v1561, 2.0
    %v1596 = vmul.f32 %v1564, 2.0
    %vm1597 = vcmp.lt.f32.partialorder %v1589, %v1567
    %vm1598 = vcmp.lt.f32.partialorder %v1590, %v1570
    %vm1599 = vcmp.lt.f32.partialorder %v1591, %v1573
    %vm1600 = vcmp.lt.f32.partialorder %v1592, %v1576
    %vm1601 = vcmp.lt.f32.partialorder %v1593, %v1579
    %vm1602 = vcmp.lt.f32.partialorder %v1594, %v1582
    %vm1603 = vcmp.lt.f32.partialorder %v1595, %v1585
    %vm1604 = vcmp.lt.f32.partialorder %v1596, %v1588
    %v1605 = vsel %vm1597, 1, 0
    %v1606 = vsel %vm1598, 1, 0
    %v1607 = vsel %vm1599, 1, 0
    %v1608 = vsel %vm1600, 1, 0
    %v1609 = vsel %vm1601, 1, 0
    %v1610 = vsel %vm1602, 1, 0
    %v1611 = vsel %vm1603, 1, 0
    %v1612 = vsel %vm1604, 1, 0
    %v1613 = vcvt.s32.f32 %v1605
    %v1614 = vcvt.s32.f32 %v1606
    %v1615 = vcvt.s32.f32 %v1607
    %v1616 = vcvt.s32.f32 %v1608
    %v1617 = vcvt.s32.f32 %v1609
    %v1618 = vcvt.s32.f32 %v1610
    %v1619 = vcvt.s32.f32 %v1611
    %v1620 = vcvt.s32.f32 %v1612
    %v1621 = vmul.f32 %v811, %v1613
    %v1622 = vmul.f32 %v812, %v1614
    %v1623 = vmul.f32 %v813, %v1615
    %v1624 = vmul.f32 %v814, %v1616
    %v1625 = vmul.f32 %v815, %v1617
    %v1626 = vmul.f32 %v816, %v1618
    %v1627 = vmul.f32 %v817, %v1619
    %v1628 = vmul.f32 %v818, %v1620
    %v1629 = vmul.f32 %v1413, %v1449
    %v1630 = vmul.f32 %v1414, %v1450
    %v1631 = vmul.f32 %v1415, %v1451
    %v1632 = vmul.f32 %v1416, %v1452
    %v1633 = vmul.f32 %v1417, %v1453
    %v1634 = vmul.f32 %v1418, %v1454
    %v1635 = vmul.f32 %v1419, %v1455
    %v1636 = vmul.f32 %v1420, %v1456
    %v1637 = vmul.f32 %v1629, %v1621
    %v1638 = vmul.f32 %v1630, %v1622
    %v1639 = vmul.f32 %v1631, %v1623
    %v1640 = vmul.f32 %v1632, %v1624
    %v1641 = vmul.f32 %v1633, %v1625
    %v1642 = vmul.f32 %v1634, %v1626
    %v1643 = vmul.f32 %v1635, %v1627
    %v1644 = vmul.f32 %v1636, %v1628
    %1645 = vxpose.xlu0.b32.start [1/16] %v1621, 128
    %1646 = vxpose.xlu0.b32.cont [2/16] %v1622, 128
    %1647 = vxpose.xlu0.b32.cont [3/16] %v1623, 128
    %1648 = vxpose.xlu0.b32.cont [4/16] %v1624, 128
    %1649 = vxpose.xlu0.b32.cont [5/16] %v1625, 128
    %1650 = vxpose.xlu0.b32.cont [6/16] %v1626, 128
    %1651 = vxpose.xlu0.b32.cont [7/16] %v1627, 128
    %1652 = vxpose.xlu0.b32.cont [8/16] %v1628, 128
    %1653 = vxpose.xlu0.b32.cont [9/16] 0.0, 128
    %1654 = vxpose.xlu0.b32.cont [10/16] 0.0, 128
    %1655 = vxpose.xlu0.b32.cont [11/16] 0.0, 128
    %1656 = vxpose.xlu0.b32.cont [12/16] 0.0, 128
    %1657 = vxpose.xlu0.b32.cont [13/16] 0.0, 128
    %1658 = vxpose.xlu0.b32.cont [14/16] 0.0, 128
    %1659 = vxpose.xlu0.b32.cont [15/16] 0.0, 128
    %1660 = vxpose.xlu0.b32.end [16/16] 0.0, 128
    %v1661 = vpop.trf.xlu0
    %v1662 = vpop.trf.xlu0
    %v1663 = vpop.trf.xlu0
    %v1664 = vpop.trf.xlu0
    %v1665 = vpop.trf.xlu0
    %v1666 = vpop.trf.xlu0
    %v1667 = vpop.trf.xlu0
    %v1668 = vpop.trf.xlu0
    %v1669 = vpop.trf.xlu0
    %v1670 = vpop.trf.xlu0
    %v1671 = vpop.trf.xlu0
    %v1672 = vpop.trf.xlu0
    %v1673 = vpop.trf.xlu0
    %v1674 = vpop.trf.xlu0
    %v1675 = vpop.trf.xlu0
    %v1676 = vpop.trf.xlu0
    %v1677 = vlaneseq
    %v1678 = vshrl.u32 %v1677, 7
    %v1679 = vsub.s32 0, %v1678
    %v1680 = vrot.slane %v1661, %v1679
    %v1681 = vmul.f32 %v869, %v1680
    %v1682 = vsel %vm875, %v1681, 0.0
    %1683 = vadd.xlane.f32.xlu0 %v1682
    %v1684 = vpop.xlane.xlu0 %1683
    %v1686 = vsel %vm274, %v1681, 0
    %1688 = vmatprep.subr.mxu0 0.0
    %1689 = vmatpush1.msra.mxu0 %v1637
    %1690 = vmatprep.subr.mxu0 0.0
    %1691 = vmatpush1.msra.mxu0 %v1638
    %1692 = vmatprep.subr.mxu0 0.0
    %1693 = vmatpush1.msra.mxu0 %v1639
    %1694 = vmatprep.subr.mxu0 0.0
    %1695 = vmatpush1.msra.mxu0 %v1640
    %1696 = vmatprep.subr.mxu0 0.0
    %1697 = vmatpush1.msra.mxu0 %v1641
    %1698 = vmatprep.subr.mxu0 0.0
    %1699 = vmatpush1.msra.mxu0 %v1642
    %1700 = vmatprep.subr.mxu0 0.0
    %1701 = vmatpush1.msra.mxu0 %v1643
    %1702 = vmatprep.subr.mxu0 0.0
    %1703 = vmatpush1.msra.mxu0 %v1644
    %1704 = vmatprep.subr.mxu0 0.0
    %1705 = vmatpush1.msra.mxu0 0.0
    %1706 = vmatprep.subr.mxu0 0.0
    %1707 = vmatpush1.msra.mxu0 0.0
    %1708 = vmatprep.subr.mxu0 0.0
    %1709 = vmatpush1.msra.mxu0 0.0
    %1710 = vmatprep.subr.mxu0 0.0
    %1711 = vmatpush1.msra.mxu0 0.0
    %1712 = vmatprep.subr.mxu0 0.0
    %1713 = vmatpush1.msra.mxu0 0.0
    %1714 = vmatprep.subr.mxu0 0.0
    %1715 = vmatpush1.msra.mxu0 0.0
    %1716 = vmatprep.subr.mxu0 0.0
    %1717 = vmatpush1.msra.mxu0 0.0
    %1718 = vmatprep.subr.mxu0 0.0
    %1719 = vmatpush1.msra.mxu0 0.0
    %1720 = vmatprep.subr.mxu0 0.0
    %1721 = vmatpush1.msra.mxu0 0.0
    %1722 = vmatprep.subr.mxu0 0.0
    %1723 = vmatpush1.msra.mxu0 0.0
    %1724 = vmatprep.subr.mxu0 0.0
    %1725 = vmatpush1.msra.mxu0 0.0
    %1726 = vmatprep.subr.mxu0 0.0
    %1727 = vmatpush1.msra.mxu0 0.0
    %1728 = vmatprep.subr.mxu0 0.0
    %1729 = vmatpush1.msra.mxu0 0.0
    %1730 = vmatprep.subr.mxu0 0.0
    %1731 = vmatpush1.msra.mxu0 0.0
    %1732 = vmatprep.subr.mxu0 0.0
    %1733 = vmatpush1.msra.mxu0 0.0
    %1734 = vmatprep.subr.mxu0 0.0
    %1735 = vmatpush1.msra.mxu0 0.0
    %1736 = vmatprep.subr.mxu0 0.0
    %1737 = vmatpush1.msra.mxu0 0.0
    %1738 = vmatprep.subr.mxu0 0.0
    %1739 = vmatpush1.msra.mxu0 0.0
    %1740 = vmatprep.subr.mxu0 0.0
    %1741 = vmatpush1.msra.mxu0 0.0
    %1742 = vmatprep.subr.mxu0 0.0
    %1743 = vmatpush1.msra.mxu0 0.0
    %1744 = vmatprep.subr.mxu0 0.0
    %1745 = vmatpush1.msra.mxu0 0.0
    %1746 = vmatprep.subr.mxu0 0.0
    %1747 = vmatpush1.msra.mxu0 0.0
    %1748 = vmatprep.subr.mxu0 0.0
    %1749 = vmatpush1.msra.mxu0 0.0
    %1750 = vmatprep.subr.mxu0 0.0
    %1751 = vmatpush1.msra.mxu0 0.0
    %1752 = vmatprep.mubr.f32.mxu0 0.0
    %1753 = vmatmul.mubr.f32.gmra.mrb[0].mxu0 %v1686
    %v1754 = vpop.f32.mrb[0].mxu0
    %v1755 = vadd.f32 0.0, %v1754
    %v1756 = vpop.f32.mrb[0].mxu0
    %1757 = vdwg.mxu0
    %v1758 = vmax.f32 %v1684, 1.0
    %v1759 = vrcp.pop %v1758
    %v1760 = vmul.f32 %v1755, %v1759
    %vm1761 = vcmp.gt.f32.partialorder %v1621, 0.0
    %vm1762 = vcmp.gt.f32.partialorder %v1622, 0.0
    %vm1763 = vcmp.gt.f32.partialorder %v1623, 0.0
    %vm1764 = vcmp.gt.f32.partialorder %v1624, 0.0
    %vm1765 = vcmp.gt.f32.partialorder %v1625, 0.0
    %vm1766 = vcmp.gt.f32.partialorder %v1626, 0.0
    %vm1767 = vcmp.gt.f32.partialorder %v1627, 0.0
    %vm1768 = vcmp.gt.f32.partialorder %v1628, 0.0
    %vm1769 = vmand %vm955, %vm1761
    %vm1770 = vmand %vm956, %vm1762
    %vm1771 = vmand %vm957, %vm1763
    %vm1772 = vmand %vm958, %vm1764
    %vm1773 = vmand %vm959, %vm1765
    %vm1774 = vmand %vm960, %vm1766
    %vm1775 = vmand %vm961, %vm1767
    %vm1776 = vmand %vm962, %vm1768
    %v1777 = vsel %vm1769, 1, 0
    %v1778 = vsel %vm1770, 1, 0
    %v1779 = vsel %vm1771, 1, 0
    %v1780 = vsel %vm1772, 1, 0
    %v1781 = vsel %vm1773, 1, 0
    %v1782 = vsel %vm1774, 1, 0
    %v1783 = vsel %vm1775, 1, 0
    %v1784 = vsel %vm1776, 1, 0
    %1785 = vset.pattern.permute.xlu0 0
    %1786 = vperm.xlu0 %1785, %v1777
    %v1787 = vpop.permute.xlu0 %1786
    %1788 = vset.pattern.permute.xlu0 0
    %1789 = vperm.xlu0 %1788, %v1778
    %v1790 = vpop.permute.xlu0 %1789
    %1791 = vset.pattern.permute.xlu0 0
    %1792 = vperm.xlu0 %1791, %v1779
    %v1793 = vpop.permute.xlu0 %1792
    %1794 = vset.pattern.permute.xlu0 0
    %1795 = vperm.xlu0 %1794, %v1780
    %v1796 = vpop.permute.xlu0 %1795
    %1797 = vset.pattern.permute.xlu0 0
    %1798 = vperm.xlu0 %1797, %v1781
    %v1799 = vpop.permute.xlu0 %1798
    %1800 = vset.pattern.permute.xlu0 0
    %1801 = vperm.xlu0 %1800, %v1782
    %v1802 = vpop.permute.xlu0 %1801
    %1803 = vset.pattern.permute.xlu0 0
    %1804 = vperm.xlu0 %1803, %v1783
    %v1805 = vpop.permute.xlu0 %1804
    %1806 = vset.pattern.permute.xlu0 0
    %1807 = vperm.xlu0 %1806, %v1784
    %v1808 = vpop.permute.xlu0 %1807
    %vm1809 = vcmp.eq.s32.totalorder %v1787, 1
    %vm1810 = vcmp.eq.s32.totalorder %v1790, 1
    %vm1811 = vcmp.eq.s32.totalorder %v1793, 1
    %vm1812 = vcmp.eq.s32.totalorder %v1796, 1
    %vm1813 = vcmp.eq.s32.totalorder %v1799, 1
    %vm1814 = vcmp.eq.s32.totalorder %v1802, 1
    %vm1815 = vcmp.eq.s32.totalorder %v1805, 1
    %vm1816 = vcmp.eq.s32.totalorder %v1808, 1
    %v1817 = vsel %vm1809, %v1637, -3e+38
    %v1818 = vsel %vm1810, %v1638, -3e+38
    %v1819 = vsel %vm1811, %v1639, -3e+38
    %v1820 = vsel %vm1812, %v1640, -3e+38
    %v1821 = vsel %vm1813, %v1641, -3e+38
    %v1822 = vsel %vm1814, %v1642, -3e+38
    %v1823 = vsel %vm1815, %v1643, -3e+38
    %v1824 = vsel %vm1816, %v1644, -3e+38
    %v1825 = vmax.f32 %v1817, %v1821
    %v1826 = vmax.f32 %v1818, %v1822
    %v1827 = vmax.f32 %v1819, %v1823
    %v1828 = vmax.f32 %v1820, %v1824
    %v1829 = vmax.f32 %v1825, %v1826
    %v1830 = vmax.f32 %v1827, %v1828
    %v1831 = vmax.f32 %v1829, %v1830
    %v1832 = vrot.slane %v1831, 4
    %v1833 = vmax.f32 %v1831, %v1832
    %v1834 = vrot.slane %v1833, 2
    %v1835 = vmax.f32 %v1833, %v1834
    %v1836 = vrot.slane %v1835, 1
    %v1837 = vmax.f32 %v1835, %v1836
    %vm1838 = vmand %vm1040, %vm1761
    %vm1839 = vmand %vm1041, %vm1762
    %vm1840 = vmand %vm1042, %vm1763
    %vm1841 = vmand %vm1043, %vm1764
    %vm1842 = vmand %vm1044, %vm1765
    %vm1843 = vmand %vm1045, %vm1766
    %vm1844 = vmand %vm1046, %vm1767
    %vm1845 = vmand %vm1047, %vm1768
    %v1846 = vsel %vm1838, 1, 0
    %v1847 = vsel %vm1839, 1, 0
    %v1848 = vsel %vm1840, 1, 0
    %v1849 = vsel %vm1841, 1, 0
    %v1850 = vsel %vm1842, 1, 0
    %v1851 = vsel %vm1843, 1, 0
    %v1852 = vsel %vm1844, 1, 0
    %v1853 = vsel %vm1845, 1, 0
    %1854 = vset.pattern.permute.xlu0 0
    %1855 = vperm.xlu0 %1854, %v1846
    %v1856 = vpop.permute.xlu0 %1855
    %1857 = vset.pattern.permute.xlu0 0
    %1858 = vperm.xlu0 %1857, %v1847
    %v1859 = vpop.permute.xlu0 %1858
    %1860 = vset.pattern.permute.xlu0 0
    %1861 = vperm.xlu0 %1860, %v1848
    %v1862 = vpop.permute.xlu0 %1861
    %1863 = vset.pattern.permute.xlu0 0
    %1864 = vperm.xlu0 %1863, %v1849
    %v1865 = vpop.permute.xlu0 %1864
    %1866 = vset.pattern.permute.xlu0 0
    %1867 = vperm.xlu0 %1866, %v1850
    %v1868 = vpop.permute.xlu0 %1867
    %1869 = vset.pattern.permute.xlu0 0
    %1870 = vperm.xlu0 %1869, %v1851
    %v1871 = vpop.permute.xlu0 %1870
    %1872 = vset.pattern.permute.xlu0 0
    %1873 = vperm.xlu0 %1872, %v1852
    %v1874 = vpop.permute.xlu0 %1873
    %1875 = vset.pattern.permute.xlu0 0
    %1876 = vperm.xlu0 %1875, %v1853
    %v1877 = vpop.permute.xlu0 %1876
    %vm1878 = vcmp.eq.s32.totalorder %v1856, 1
    %vm1879 = vcmp.eq.s32.totalorder %v1859, 1
    %vm1880 = vcmp.eq.s32.totalorder %v1862, 1
    %vm1881 = vcmp.eq.s32.totalorder %v1865, 1
    %vm1882 = vcmp.eq.s32.totalorder %v1868, 1
    %vm1883 = vcmp.eq.s32.totalorder %v1871, 1
    %vm1884 = vcmp.eq.s32.totalorder %v1874, 1
    %vm1885 = vcmp.eq.s32.totalorder %v1877, 1
    %v1886 = vsel %vm1878, %v1637, -3e+38
    %v1887 = vsel %vm1879, %v1638, -3e+38
    %v1888 = vsel %vm1880, %v1639, -3e+38
    %v1889 = vsel %vm1881, %v1640, -3e+38
    %v1890 = vsel %vm1882, %v1641, -3e+38
    %v1891 = vsel %vm1883, %v1642, -3e+38
    %v1892 = vsel %vm1884, %v1643, -3e+38
    %v1893 = vsel %vm1885, %v1644, -3e+38
    %v1894 = vmax.f32 %v1886, %v1890
    %v1895 = vmax.f32 %v1887, %v1891
    %v1896 = vmax.f32 %v1888, %v1892
    %v1897 = vmax.f32 %v1889, %v1893
    %v1898 = vmax.f32 %v1894, %v1895
    %v1899 = vmax.f32 %v1896, %v1897
    %v1900 = vmax.f32 %v1898, %v1899
    %v1901 = vrot.slane %v1900, 4
    %v1902 = vmax.f32 %v1900, %v1901
    %v1903 = vrot.slane %v1902, 2
    %v1904 = vmax.f32 %v1902, %v1903
    %v1905 = vrot.slane %v1904, 1
    %v1906 = vmax.f32 %v1904, %v1905
    %v1907 = vsel %vm1117, %v1837, %v1906
    %v1908 = vadd.f32 %v1118, %v1907
    %v1909 = vadd.f32 %v954, %v1760
    %v1910 = vmul.f32 %v33, %v1680
    %v1911 = vmul.f32 %v34, %v1680
    %v1912 = vmul.f32 %v35, %v1680
    %v1913 = vmul.f32 %v36, %v1680
    %v1914 = vmul.f32 %v37, %v1680
    %v1915 = vmul.f32 %v38, %v1680
    %v1916 = vmul.f32 %v39, %v1680
    %v1917 = vmul.f32 %v40, %v1680
    %v1918 = vsel %vm274, %v1910, 0.0
    %1919 = vadd.xlane.f32.xlu0 %v1918
    %v1920 = vpop.xlane.xlu0 %1919
    %v1921 = vsel %vm274, %v1911, 0.0
    %1922 = vadd.xlane.f32.xlu0 %v1921
    %v1923 = vpop.xlane.xlu0 %1922
    %v1924 = vsel %vm274, %v1912, 0.0
    %1925 = vadd.xlane.f32.xlu0 %v1924
    %v1926 = vpop.xlane.xlu0 %1925
    %v1927 = vsel %vm274, %v1913, 0.0
    %1928 = vadd.xlane.f32.xlu0 %v1927
    %v1929 = vpop.xlane.xlu0 %1928
    %v1930 = vsel %vm274, %v1914, 0.0
    %1931 = vadd.xlane.f32.xlu0 %v1930
    %v1932 = vpop.xlane.xlu0 %1931
    %v1933 = vsel %vm274, %v1915, 0.0
    %1934 = vadd.xlane.f32.xlu0 %v1933
    %v1935 = vpop.xlane.xlu0 %1934
    %v1936 = vsel %vm274, %v1916, 0.0
    %1937 = vadd.xlane.f32.xlu0 %v1936
    %v1938 = vpop.xlane.xlu0 %1937
    %v1939 = vsel %vm274, %v1917, 0.0
    %1940 = vadd.xlane.f32.xlu0 %v1939
    %v1941 = vpop.xlane.xlu0 %1940
    %v1942 = vmax.f32 %v1920, 1.0
    %v1943 = vmax.f32 %v1923, 1.0
    %v1944 = vmax.f32 %v1926, 1.0
    %v1945 = vmax.f32 %v1929, 1.0
    %v1946 = vmax.f32 %v1932, 1.0
    %v1947 = vmax.f32 %v1935, 1.0
    %v1948 = vmax.f32 %v1938, 1.0
    %v1949 = vmax.f32 %v1941, 1.0
    %v1950 = vrcp.pop %v1942
    %v1951 = vrcp.pop %v1943
    %v1952 = vrcp.pop %v1944
    %v1953 = vrcp.pop %v1945
    %v1954 = vrcp.pop %v1946
    %v1955 = vrcp.pop %v1947
    %v1956 = vrcp.pop %v1948
    %v1957 = vrcp.pop %v1949
    %v1958 = vpack.c.bf16 %v1638, %v1637
    %v1959 = vpack.c.bf16 %v1640, %v1639
    %v1960 = vpack.c.bf16 %v1642, %v1641
    %v1961 = vpack.c.bf16 %v1644, %v1643
    %1962 = vmatprep.subr.bf16.mxu0 0
    %1963 = vmatpush1.bf16.msra.mxu0 %v1958
    %1964 = vmatprep.subr.bf16.mxu0 0
    %1965 = vmatpush1.bf16.msra.mxu0 %v1959
    %1966 = vmatprep.subr.bf16.mxu0 0
    %1967 = vmatpush1.bf16.msra.mxu0 %v1960
    %1968 = vmatprep.subr.bf16.mxu0 0
    %1969 = vmatpush1.bf16.msra.mxu0 %v1961
    %1970 = vmatprep.subr.bf16.mxu0 0
    %1971 = vmatpush1.bf16.msra.mxu0 0
    %1972 = vmatprep.subr.bf16.mxu0 0
    %1973 = vmatpush1.bf16.msra.mxu0 0
    %1974 = vmatprep.subr.bf16.mxu0 0
    %1975 = vmatpush1.bf16.msra.mxu0 0
    %1976 = vmatprep.subr.bf16.mxu0 0
    %1977 = vmatpush1.bf16.msra.mxu0 0
    %1978 = vmatprep.subr.bf16.mxu0 0
    %1979 = vmatpush1.bf16.msra.mxu0 0
    %1980 = vmatprep.subr.bf16.mxu0 0
    %1981 = vmatpush1.bf16.msra.mxu0 0
    %1982 = vmatprep.subr.bf16.mxu0 0
    %1983 = vmatpush1.bf16.msra.mxu0 0
    %1984 = vmatprep.subr.bf16.mxu0 0
    %1985 = vmatpush1.bf16.msra.mxu0 0
    %1986 = vmatprep.subr.bf16.mxu0 0
    %1987 = vmatpush1.bf16.msra.mxu0 0
    %1988 = vmatprep.subr.bf16.mxu0 0
    %1989 = vmatpush1.bf16.msra.mxu0 0
    %1990 = vmatprep.subr.bf16.mxu0 0
    %1991 = vmatpush1.bf16.msra.mxu0 0
    %1992 = vmatprep.subr.bf16.mxu0 0
    %1993 = vmatpush1.bf16.msra.mxu0 0
    %1994 = vmatprep.mubr.bf16.mxu0 0
    %1995 = vmatmul.mubr.bf16.gmra.mrb[0].mxu0 %v340
    %v1996 = vpop.f32.mrb[0].mxu0
    %v1997 = vadd.f32 0.0, %v1996
    %v1998 = vpop.f32.mrb[0].mxu0
    %v1999 = vpop.f32.mrb[0].mxu0
    %v2000 = vadd.f32 0.0, %v1999
    %v2001 = vpop.f32.mrb[0].mxu0
    %2002 = vmatprep.mubr.bf16.mxu0 0
    %2003 = vmatmul.mubr.bf16.gmra.mrb[0].mxu0 %v343
    %v2004 = vpop.f32.mrb[0].mxu0
    %v2005 = vadd.f32 0.0, %v2004
    %v2006 = vpop.f32.mrb[0].mxu0
    %v2007 = vpop.f32.mrb[0].mxu0
    %v2008 = vadd.f32 0.0, %v2007
    %v2009 = vpop.f32.mrb[0].mxu0
    %2010 = vmatprep.mubr.bf16.mxu0 0
    %2011 = vmatmul.mubr.bf16.gmra.mrb[0].mxu0 %v346
    %v2012 = vpop.f32.mrb[0].mxu0
    %v2013 = vadd.f32 0.0, %v2012
    %v2014 = vpop.f32.mrb[0].mxu0
    %v2015 = vpop.f32.mrb[0].mxu0
    %v2016 = vadd.f32 0.0, %v2015
    %v2017 = vpop.f32.mrb[0].mxu0
    %2018 = vmatprep.mubr.bf16.mxu0 0
    %2019 = vmatmul.mubr.bf16.gmra.mrb[0].mxu0 %v349
    %v2020 = vpop.f32.mrb[0].mxu0
    %v2021 = vadd.f32 0.0, %v2020
    %v2022 = vpop.f32.mrb[0].mxu0
    %v2023 = vpop.f32.mrb[0].mxu0
    %v2024 = vadd.f32 0.0, %v2023
    %v2025 = vpop.f32.mrb[0].mxu0
    %2026 = vdwg.mxu0
    %v2027 = vmul.f32 %v1997, %v1950
    %v2028 = vmul.f32 %v2000, %v1951
    %v2029 = vmul.f32 %v2005, %v1952
    %v2030 = vmul.f32 %v2008, %v1953
    %v2031 = vmul.f32 %v2013, %v1954
    %v2032 = vmul.f32 %v2016, %v1955
    %v2033 = vmul.f32 %v2021, %v1956
    %v2034 = vmul.f32 %v2024, %v1957
    %v2035 = vpack.c.bf16 %v2028, %v2027
    %v2036 = vpack.c.bf16 %v2030, %v2029
    %v2037 = vpack.c.bf16 %v2032, %v2031
    %v2038 = vpack.c.bf16 %v2034, %v2033
    %v2039 = vlaneseq
    %v2040 = vshrl.u32 %v2039, 7
    %v2041 = vsub.s32 0, %v2040
    %v2042 = vrot.slane %v261, %v2041
    %v2075 = vunpack.c.l.b16 %v161
    %v2076 = vunpack.c.l.b16 %v162
    %v2077 = vunpack.c.l.b16 %v163
    %v2078 = vunpack.c.l.b16 %v164
    %v2079 = vunpack.c.l.b16 %v165
    %v2080 = vunpack.c.l.b16 %v166
    %v2081 = vunpack.c.l.b16 %v167
    %v2082 = vunpack.c.l.b16 %v168
    %v2083 = vunpack.c.l.b16 %v169
    %v2084 = vunpack.c.l.b16 %v170
    %v2085 = vunpack.c.l.b16 %v171
    %v2086 = vunpack.c.l.b16 %v172
    %v2087 = vunpack.c.l.b16 %v173
    %v2088 = vunpack.c.l.b16 %v174
    %v2089 = vunpack.c.l.b16 %v175
    %v2090 = vunpack.c.l.b16 %v176
    %v2091 = vunpack.c.l.b16 %v177
    %v2092 = vunpack.c.l.b16 %v178
    %v2093 = vunpack.c.l.b16 %v179
    %v2094 = vunpack.c.l.b16 %v180
    %v2095 = vunpack.c.l.b16 %v181
    %v2096 = vunpack.c.l.b16 %v182
    %v2097 = vunpack.c.l.b16 %v183
    %v2098 = vunpack.c.l.b16 %v184
    %v2099 = vunpack.c.l.b16 %v185
    %v2100 = vunpack.c.l.b16 %v186
    %v2101 = vunpack.c.l.b16 %v187
    %v2102 = vunpack.c.l.b16 %v188
    %v2103 = vunpack.c.l.b16 %v189
    %v2104 = vunpack.c.l.b16 %v190
    %v2105 = vunpack.c.l.b16 %v191
    %v2106 = vunpack.c.l.b16 %v192
    %v2107 = vpack.c.b16 %v2076, %v2075
    %v2108 = vpack.c.b16 %v2078, %v2077
    %v2109 = vpack.c.b16 %v2080, %v2079
    %v2110 = vpack.c.b16 %v2082, %v2081
    %v2111 = vpack.c.b16 %v2084, %v2083
    %v2112 = vpack.c.b16 %v2086, %v2085
    %v2113 = vpack.c.b16 %v2088, %v2087
    %v2114 = vpack.c.b16 %v2090, %v2089
    %v2115 = vpack.c.b16 %v2092, %v2091
    %v2116 = vpack.c.b16 %v2094, %v2093
    %v2117 = vpack.c.b16 %v2096, %v2095
    %v2118 = vpack.c.b16 %v2098, %v2097
    %v2119 = vpack.c.b16 %v2100, %v2099
    %v2120 = vpack.c.b16 %v2102, %v2101
    %v2121 = vpack.c.b16 %v2104, %v2103
    %v2122 = vpack.c.b16 %v2106, %v2105
    %2139 = vmatprep.subr.bf16.mxu0 0
    %2140 = vmatpush1.bf16.msra.mxu0 %v2107
    %2141 = vmatprep.subr.bf16.mxu0 0
    %2142 = vmatpush1.bf16.msra.mxu0 %v2108
    %2143 = vmatprep.subr.bf16.mxu0 0
    %2144 = vmatpush1.bf16.msra.mxu0 %v2109
    %2145 = vmatprep.subr.bf16.mxu0 0
    %2146 = vmatpush1.bf16.msra.mxu0 %v2110
    %2147 = vmatprep.subr.bf16.mxu0 0
    %2148 = vmatpush1.bf16.msra.mxu0 %v2111
    %2149 = vmatprep.subr.bf16.mxu0 0
    %2150 = vmatpush1.bf16.msra.mxu0 %v2112
    %2151 = vmatprep.subr.bf16.mxu0 0
    %2152 = vmatpush1.bf16.msra.mxu0 %v2113
    %2153 = vmatprep.subr.bf16.mxu0 0
    %2154 = vmatpush1.bf16.msra.mxu0 %v2114
    %2155 = vmatprep.subr.bf16.mxu0 0
    %2156 = vmatpush1.bf16.msra.mxu0 %v2115
    %2157 = vmatprep.subr.bf16.mxu0 0
    %2158 = vmatpush1.bf16.msra.mxu0 %v2116
    %2159 = vmatprep.subr.bf16.mxu0 0
    %2160 = vmatpush1.bf16.msra.mxu0 %v2117
    %2161 = vmatprep.subr.bf16.mxu0 0
    %2162 = vmatpush1.bf16.msra.mxu0 %v2118
    %2163 = vmatprep.subr.bf16.mxu0 0
    %2164 = vmatpush1.bf16.msra.mxu0 %v2119
    %2165 = vmatprep.subr.bf16.mxu0 0
    %2166 = vmatpush1.bf16.msra.mxu0 %v2120
    %2167 = vmatprep.subr.bf16.mxu0 0
    %2168 = vmatpush1.bf16.msra.mxu0 %v2121
    %2169 = vmatprep.subr.bf16.mxu0 0
    %2170 = vmatpush1.bf16.msra.mxu0 %v2122
    %2171 = vmatprep.mubr.bf16.mxu0 %v1958
    %2172 = vmatmul.mubr.bf16.gmra.mrb[0].mxu0 %v2035
    %v2173 = vpop.f32.mrb[0].mxu0
    %v2174 = vadd.f32 %v2042, %v2173
    %v2175 = vpop.f32.mrb[0].mxu0
    %v2176 = vpop.f32.mrb[0].mxu0
    %v2177 = vadd.f32 %v2042, %v2176
    %v2178 = vpop.f32.mrb[0].mxu0
    %2179 = vmatprep.mubr.bf16.mxu0 %v1959
    %2180 = vmatmul.mubr.bf16.gmra.mrb[0].mxu0 %v2036
    %v2181 = vpop.f32.mrb[0].mxu0
    %v2182 = vadd.f32 %v2042, %v2181
    %v2183 = vpop.f32.mrb[0].mxu0
    %v2184 = vpop.f32.mrb[0].mxu0
    %v2185 = vadd.f32 %v2042, %v2184
    %v2186 = vpop.f32.mrb[0].mxu0
    %2187 = vmatprep.mubr.bf16.mxu0 %v1960
    %2188 = vmatmul.mubr.bf16.gmra.mrb[0].mxu0 %v2037
    %v2189 = vpop.f32.mrb[0].mxu0
    %v2190 = vadd.f32 %v2042, %v2189
    %v2191 = vpop.f32.mrb[0].mxu0
    %v2192 = vpop.f32.mrb[0].mxu0
    %v2193 = vadd.f32 %v2042, %v2192
    %v2194 = vpop.f32.mrb[0].mxu0
    %2195 = vmatprep.mubr.bf16.mxu0 %v1961
    %2196 = vmatmul.mubr.bf16.gmra.mrb[0].mxu0 %v2038
    %v2197 = vpop.f32.mrb[0].mxu0
    %v2198 = vadd.f32 %v2042, %v2197
    %v2199 = vpop.f32.mrb[0].mxu0
    %v2200 = vpop.f32.mrb[0].mxu0
    %v2201 = vadd.f32 %v2042, %v2200
    %v2202 = vpop.f32.mrb[0].mxu0
    %2203 = vdwg.mxu0
    %v2204 = vmax.f32 %v2174, 0.0
    %v2205 = vmax.f32 %v2177, 0.0
    %v2206 = vmax.f32 %v2182, 0.0
    %v2207 = vmax.f32 %v2185, 0.0
    %v2208 = vmax.f32 %v2190, 0.0
    %v2209 = vmax.f32 %v2193, 0.0
    %v2210 = vmax.f32 %v2198, 0.0
    %v2211 = vmax.f32 %v2201, 0.0
    %v2212 = vlaneseq
    %v2213 = vshrl.u32 %v2212, 7
    %v2214 = vsub.s32 0, %v2213
    %v2215 = vrot.slane %v262, %v2214
    %v2216 = vmul.f32 %v2204, %v2215
    %v2217 = vmul.f32 %v2205, %v2215
    %v2218 = vmul.f32 %v2206, %v2215
    %v2219 = vmul.f32 %v2207, %v2215
    %v2220 = vmul.f32 %v2208, %v2215
    %v2221 = vmul.f32 %v2209, %v2215
    %v2222 = vmul.f32 %v2210, %v2215
    %v2223 = vmul.f32 %v2211, %v2215
    %2224 = vadd.xlane.f32.xlu0 %v2216
    %v2225 = vpop.xlane.xlu0 %2224
    %2226 = vadd.xlane.f32.xlu0 %v2217
    %v2227 = vpop.xlane.xlu0 %2226
    %2228 = vadd.xlane.f32.xlu0 %v2218
    %v2229 = vpop.xlane.xlu0 %2228
    %2230 = vadd.xlane.f32.xlu0 %v2219
    %v2231 = vpop.xlane.xlu0 %2230
    %2232 = vadd.xlane.f32.xlu0 %v2220
    %v2233 = vpop.xlane.xlu0 %2232
    %2234 = vadd.xlane.f32.xlu0 %v2221
    %v2235 = vpop.xlane.xlu0 %2234
    %2236 = vadd.xlane.f32.xlu0 %v2222
    %v2237 = vpop.xlane.xlu0 %2236
    %2238 = vadd.xlane.f32.xlu0 %v2223
    %v2239 = vpop.xlane.xlu0 %2238
    %v2240 = vtanh.pop %v2225
    %v2241 = vtanh.pop %v2227
    %v2242 = vtanh.pop %v2229
    %v2243 = vtanh.pop %v2231
    %v2244 = vtanh.pop %v2233
    %v2245 = vtanh.pop %v2235
    %v2246 = vtanh.pop %v2237
    %v2247 = vtanh.pop %v2239
    %2248 = vxpose.xlu0.b32.start [1/16] %v2225, 128
    %2249 = vxpose.xlu0.b32.cont [2/16] %v2227, 128
    %2250 = vxpose.xlu0.b32.cont [3/16] %v2229, 128
    %2251 = vxpose.xlu0.b32.cont [4/16] %v2231, 128
    %2252 = vxpose.xlu0.b32.cont [5/16] %v2233, 128
    %2253 = vxpose.xlu0.b32.cont [6/16] %v2235, 128
    %2254 = vxpose.xlu0.b32.cont [7/16] %v2237, 128
    %2255 = vxpose.xlu0.b32.cont [8/16] %v2239, 128
    %2256 = vxpose.xlu0.b32.cont [9/16] 0.0, 128
    %2257 = vxpose.xlu0.b32.cont [10/16] 0.0, 128
    %2258 = vxpose.xlu0.b32.cont [11/16] 0.0, 128
    %2259 = vxpose.xlu0.b32.cont [12/16] 0.0, 128
    %2260 = vxpose.xlu0.b32.cont [13/16] 0.0, 128
    %2261 = vxpose.xlu0.b32.cont [14/16] 0.0, 128
    %2262 = vxpose.xlu0.b32.cont [15/16] 0.0, 128
    %2263 = vxpose.xlu0.b32.end [16/16] 0.0, 128
    %v2264 = vpop.trf.xlu0
    %v2265 = vpop.trf.xlu0
    %v2266 = vpop.trf.xlu0
    %v2267 = vpop.trf.xlu0
    %v2268 = vpop.trf.xlu0
    %v2269 = vpop.trf.xlu0
    %v2270 = vpop.trf.xlu0
    %v2271 = vpop.trf.xlu0
    %v2272 = vpop.trf.xlu0
    %v2273 = vpop.trf.xlu0
    %v2274 = vpop.trf.xlu0
    %v2275 = vpop.trf.xlu0
    %v2276 = vpop.trf.xlu0
    %v2277 = vpop.trf.xlu0
    %v2278 = vpop.trf.xlu0
    %v2279 = vpop.trf.xlu0
    %v2280 = vmul.f32 %v94, %v1680
    %v2281 = vmul.f32 %v95, %v1680
    %v2282 = vmul.f32 %v96, %v1680
    %v2283 = vmul.f32 %v97, %v1680
    %v2284 = vmul.f32 %v98, %v1680
    %v2285 = vmul.f32 %v99, %v1680
    %v2286 = vmul.f32 %v100, %v1680
    %v2287 = vmul.f32 %v101, %v1680
    %v2288 = vlaneseq
    %v2289 = vshrl.u32 %v2288, 7
    %v2290 = vsub.s32 0, %v2289
    %v2291 = vrot.slane %v2264, %v2290
    %vm2292 = vcmp.gt.f32.partialorder %v2291, %v2225
    %vm2293 = vcmp.gt.f32.partialorder %v2291, %v2227
    %vm2294 = vcmp.gt.f32.partialorder %v2291, %v2229
    %vm2295 = vcmp.gt.f32.partialorder %v2291, %v2231
    %vm2296 = vcmp.gt.f32.partialorder %v2291, %v2233
    %vm2297 = vcmp.gt.f32.partialorder %v2291, %v2235
    %vm2298 = vcmp.gt.f32.partialorder %v2291, %v2237
    %vm2299 = vcmp.gt.f32.partialorder %v2291, %v2239
    %vm2300 = vcmp.eq.f32.partialorder %v2291, %v2225
    %vm2301 = vcmp.eq.f32.partialorder %v2291, %v2227
    %vm2302 = vcmp.eq.f32.partialorder %v2291, %v2229
    %vm2303 = vcmp.eq.f32.partialorder %v2291, %v2231
    %vm2304 = vcmp.eq.f32.partialorder %v2291, %v2233
    %vm2305 = vcmp.eq.f32.partialorder %v2291, %v2235
    %vm2306 = vcmp.eq.f32.partialorder %v2291, %v2237
    %vm2307 = vcmp.eq.f32.partialorder %v2291, %v2239
    %vm2308 = vmand %vm2300, %vm113
    %vm2309 = vmand %vm2301, %vm114
    %vm2310 = vmand %vm2302, %vm115
    %vm2311 = vmand %vm2303, %vm116
    %vm2312 = vmand %vm2304, %vm117
    %vm2313 = vmand %vm2305, %vm118
    %vm2314 = vmand %vm2306, %vm119
    %vm2315 = vmand %vm2307, %vm120
    %vm2316 = vmor %vm2292, %vm2308
    %vm2317 = vmor %vm2293, %vm2309
    %vm2318 = vmor %vm2294, %vm2310
    %vm2319 = vmor %vm2295, %vm2311
    %vm2320 = vmor %vm2296, %vm2312
    %vm2321 = vmor %vm2297, %vm2313
    %vm2322 = vmor %vm2298, %vm2314
    %vm2323 = vmor %vm2299, %vm2315
    %v2324 = vsel %vm2316, %v2280, 0.0
    %v2325 = vsel %vm2317, %v2281, 0.0
    %v2326 = vsel %vm2318, %v2282, 0.0
    %v2327 = vsel %vm2319, %v2283, 0.0
    %v2328 = vsel %vm2320, %v2284, 0.0
    %v2329 = vsel %vm2321, %v2285, 0.0
    %v2330 = vsel %vm2322, %v2286, 0.0
    %v2331 = vsel %vm2323, %v2287, 0.0
    %v2332 = vsel %vm274, %v2324, 0.0
    %2333 = vadd.xlane.f32.xlu0 %v2332
    %v2334 = vpop.xlane.xlu0 %2333
    %v2335 = vsel %vm274, %v2325, 0.0
    %2336 = vadd.xlane.f32.xlu0 %v2335
    %v2337 = vpop.xlane.xlu0 %2336
    %v2338 = vsel %vm274, %v2326, 0.0
    %2339 = vadd.xlane.f32.xlu0 %v2338
    %v2340 = vpop.xlane.xlu0 %2339
    %v2341 = vsel %vm274, %v2327, 0.0
    %2342 = vadd.xlane.f32.xlu0 %v2341
    %v2343 = vpop.xlane.xlu0 %2342
    %v2344 = vsel %vm274, %v2328, 0.0
    %2345 = vadd.xlane.f32.xlu0 %v2344
    %v2346 = vpop.xlane.xlu0 %2345
    %v2347 = vsel %vm274, %v2329, 0.0
    %2348 = vadd.xlane.f32.xlu0 %v2347
    %v2349 = vpop.xlane.xlu0 %2348
    %v2350 = vsel %vm274, %v2330, 0.0
    %2351 = vadd.xlane.f32.xlu0 %v2350
    %v2352 = vpop.xlane.xlu0 %2351
    %v2353 = vsel %vm274, %v2331, 0.0
    %2354 = vadd.xlane.f32.xlu0 %v2353
    %v2355 = vpop.xlane.xlu0 %2354
    %v2356 = vsel %vm274, %v2280, 0.0
    %2357 = vadd.xlane.f32.xlu0 %v2356
    %v2358 = vpop.xlane.xlu0 %2357
    %v2359 = vsel %vm274, %v2281, 0.0
    %2360 = vadd.xlane.f32.xlu0 %v2359
    %v2361 = vpop.xlane.xlu0 %2360
    %v2362 = vsel %vm274, %v2282, 0.0
    %2363 = vadd.xlane.f32.xlu0 %v2362
    %v2364 = vpop.xlane.xlu0 %2363
    %v2365 = vsel %vm274, %v2283, 0.0
    %2366 = vadd.xlane.f32.xlu0 %v2365
    %v2367 = vpop.xlane.xlu0 %2366
    %v2368 = vsel %vm274, %v2284, 0.0
    %2369 = vadd.xlane.f32.xlu0 %v2368
    %v2370 = vpop.xlane.xlu0 %2369
    %v2371 = vsel %vm274, %v2285, 0.0
    %2372 = vadd.xlane.f32.xlu0 %v2371
    %v2373 = vpop.xlane.xlu0 %2372
    %v2374 = vsel %vm274, %v2286, 0.0
    %2375 = vadd.xlane.f32.xlu0 %v2374
    %v2376 = vpop.xlane.xlu0 %2375
    %v2377 = vsel %vm274, %v2287, 0.0
    %2378 = vadd.xlane.f32.xlu0 %v2377
    %v2379 = vpop.xlane.xlu0 %2378
    %v2380 = vmul.f32 %v2334, 2.0
    %v2381 = vmul.f32 %v2337, 2.0
    %v2382 = vmul.f32 %v2340, 2.0
    %v2383 = vmul.f32 %v2343, 2.0
    %v2384 = vmul.f32 %v2346, 2.0
    %v2385 = vmul.f32 %v2349, 2.0
    %v2386 = vmul.f32 %v2352, 2.0
    %v2387 = vmul.f32 %v2355, 2.0
    %vm2388 = vcmp.lt.f32.partialorder %v2380, %v2358
    %vm2389 = vcmp.lt.f32.partialorder %v2381, %v2361
    %vm2390 = vcmp.lt.f32.partialorder %v2382, %v2364
    %vm2391 = vcmp.lt.f32.partialorder %v2383, %v2367
    %vm2392 = vcmp.lt.f32.partialorder %v2384, %v2370
    %vm2393 = vcmp.lt.f32.partialorder %v2385, %v2373
    %vm2394 = vcmp.lt.f32.partialorder %v2386, %v2376
    %vm2395 = vcmp.lt.f32.partialorder %v2387, %v2379
    %v2396 = vsel %vm2388, 1, 0
    %v2397 = vsel %vm2389, 1, 0
    %v2398 = vsel %vm2390, 1, 0
    %v2399 = vsel %vm2391, 1, 0
    %v2400 = vsel %vm2392, 1, 0
    %v2401 = vsel %vm2393, 1, 0
    %v2402 = vsel %vm2394, 1, 0
    %v2403 = vsel %vm2395, 1, 0
    %v2404 = vcvt.s32.f32 %v2396
    %v2405 = vcvt.s32.f32 %v2397
    %v2406 = vcvt.s32.f32 %v2398
    %v2407 = vcvt.s32.f32 %v2399
    %v2408 = vcvt.s32.f32 %v2400
    %v2409 = vcvt.s32.f32 %v2401
    %v2410 = vcvt.s32.f32 %v2402
    %v2411 = vcvt.s32.f32 %v2403
    %v2412 = vmul.f32 %v1621, %v2404
    %v2413 = vmul.f32 %v1622, %v2405
    %v2414 = vmul.f32 %v1623, %v2406
    %v2415 = vmul.f32 %v1624, %v2407
    %v2416 = vmul.f32 %v1625, %v2408
    %v2417 = vmul.f32 %v1626, %v2409
    %v2418 = vmul.f32 %v1627, %v2410
    %v2419 = vmul.f32 %v1628, %v2411
    %v2420 = vmul.f32 %v2204, %v2240
    %v2421 = vmul.f32 %v2205, %v2241
    %v2422 = vmul.f32 %v2206, %v2242
    %v2423 = vmul.f32 %v2207, %v2243
    %v2424 = vmul.f32 %v2208, %v2244
    %v2425 = vmul.f32 %v2209, %v2245
    %v2426 = vmul.f32 %v2210, %v2246
    %v2427 = vmul.f32 %v2211, %v2247
    %v2428 = vmul.f32 %v2420, %v2412
    %v2429 = vmul.f32 %v2421, %v2413
    %v2430 = vmul.f32 %v2422, %v2414
    %v2431 = vmul.f32 %v2423, %v2415
    %v2432 = vmul.f32 %v2424, %v2416
    %v2433 = vmul.f32 %v2425, %v2417
    %v2434 = vmul.f32 %v2426, %v2418
    %v2435 = vmul.f32 %v2427, %v2419
    %2436 = vxpose.xlu0.b32.start [1/16] %v2412, 128
    %2437 = vxpose.xlu0.b32.cont [2/16] %v2413, 128
    %2438 = vxpose.xlu0.b32.cont [3/16] %v2414, 128
    %2439 = vxpose.xlu0.b32.cont [4/16] %v2415, 128
    %2440 = vxpose.xlu0.b32.cont [5/16] %v2416, 128
    %2441 = vxpose.xlu0.b32.cont [6/16] %v2417, 128
    %2442 = vxpose.xlu0.b32.cont [7/16] %v2418, 128
    %2443 = vxpose.xlu0.b32.cont [8/16] %v2419, 128
    %2444 = vxpose.xlu0.b32.cont [9/16] 0.0, 128
    %2445 = vxpose.xlu0.b32.cont [10/16] 0.0, 128
    %2446 = vxpose.xlu0.b32.cont [11/16] 0.0, 128
    %2447 = vxpose.xlu0.b32.cont [12/16] 0.0, 128
    %2448 = vxpose.xlu0.b32.cont [13/16] 0.0, 128
    %2449 = vxpose.xlu0.b32.cont [14/16] 0.0, 128
    %2450 = vxpose.xlu0.b32.cont [15/16] 0.0, 128
    %2451 = vxpose.xlu0.b32.end [16/16] 0.0, 128
    %v2452 = vpop.trf.xlu0
    %v2453 = vpop.trf.xlu0
    %v2454 = vpop.trf.xlu0
    %v2455 = vpop.trf.xlu0
    %v2456 = vpop.trf.xlu0
    %v2457 = vpop.trf.xlu0
    %v2458 = vpop.trf.xlu0
    %v2459 = vpop.trf.xlu0
    %v2460 = vpop.trf.xlu0
    %v2461 = vpop.trf.xlu0
    %v2462 = vpop.trf.xlu0
    %v2463 = vpop.trf.xlu0
    %v2464 = vpop.trf.xlu0
    %v2465 = vpop.trf.xlu0
    %v2466 = vpop.trf.xlu0
    %v2467 = vpop.trf.xlu0
    %v2468 = vlaneseq
    %v2469 = vshrl.u32 %v2468, 7
    %v2470 = vsub.s32 0, %v2469
    %v2471 = vrot.slane %v2452, %v2470
    %v2472 = vmul.f32 %v869, %v2471
    %v2473 = vsel %vm875, %v2472, 0.0
    %2474 = vadd.xlane.f32.xlu0 %v2473
    %v2475 = vpop.xlane.xlu0 %2474
    %v2477 = vsel %vm274, %v2472, 0
    %2479 = vmatprep.subr.mxu0 0.0
    %2480 = vmatpush1.msra.mxu0 %v2428
    %2481 = vmatprep.subr.mxu0 0.0
    %2482 = vmatpush1.msra.mxu0 %v2429
    %2483 = vmatprep.subr.mxu0 0.0
    %2484 = vmatpush1.msra.mxu0 %v2430
    %2485 = vmatprep.subr.mxu0 0.0
    %2486 = vmatpush1.msra.mxu0 %v2431
    %2487 = vmatprep.subr.mxu0 0.0
    %2488 = vmatpush1.msra.mxu0 %v2432
    %2489 = vmatprep.subr.mxu0 0.0
    %2490 = vmatpush1.msra.mxu0 %v2433
    %2491 = vmatprep.subr.mxu0 0.0
    %2492 = vmatpush1.msra.mxu0 %v2434
    %2493 = vmatprep.subr.mxu0 0.0
    %2494 = vmatpush1.msra.mxu0 %v2435
    %2495 = vmatprep.subr.mxu0 0.0
    %2496 = vmatpush1.msra.mxu0 0.0
    %2497 = vmatprep.subr.mxu0 0.0
    %2498 = vmatpush1.msra.mxu0 0.0
    %2499 = vmatprep.subr.mxu0 0.0
    %2500 = vmatpush1.msra.mxu0 0.0
    %2501 = vmatprep.subr.mxu0 0.0
    %2502 = vmatpush1.msra.mxu0 0.0
    %2503 = vmatprep.subr.mxu0 0.0
    %2504 = vmatpush1.msra.mxu0 0.0
    %2505 = vmatprep.subr.mxu0 0.0
    %2506 = vmatpush1.msra.mxu0 0.0
    %2507 = vmatprep.subr.mxu0 0.0
    %2508 = vmatpush1.msra.mxu0 0.0
    %2509 = vmatprep.subr.mxu0 0.0
    %2510 = vmatpush1.msra.mxu0 0.0
    %2511 = vmatprep.subr.mxu0 0.0
    %2512 = vmatpush1.msra.mxu0 0.0
    %2513 = vmatprep.subr.mxu0 0.0
    %2514 = vmatpush1.msra.mxu0 0.0
    %2515 = vmatprep.subr.mxu0 0.0
    %2516 = vmatpush1.msra.mxu0 0.0
    %2517 = vmatprep.subr.mxu0 0.0
    %2518 = vmatpush1.msra.mxu0 0.0
    %2519 = vmatprep.subr.mxu0 0.0
    %2520 = vmatpush1.msra.mxu0 0.0
    %2521 = vmatprep.subr.mxu0 0.0
    %2522 = vmatpush1.msra.mxu0 0.0
    %2523 = vmatprep.subr.mxu0 0.0
    %2524 = vmatpush1.msra.mxu0 0.0
    %2525 = vmatprep.subr.mxu0 0.0
    %2526 = vmatpush1.msra.mxu0 0.0
    %2527 = vmatprep.subr.mxu0 0.0
    %2528 = vmatpush1.msra.mxu0 0.0
    %2529 = vmatprep.subr.mxu0 0.0
    %2530 = vmatpush1.msra.mxu0 0.0
    %2531 = vmatprep.subr.mxu0 0.0
    %2532 = vmatpush1.msra.mxu0 0.0
    %2533 = vmatprep.subr.mxu0 0.0
    %2534 = vmatpush1.msra.mxu0 0.0
    %2535 = vmatprep.subr.mxu0 0.0
    %2536 = vmatpush1.msra.mxu0 0.0
    %2537 = vmatprep.subr.mxu0 0.0
    %2538 = vmatpush1.msra.mxu0 0.0
    %2539 = vmatprep.subr.mxu0 0.0
    %2540 = vmatpush1.msra.mxu0 0.0
    %2541 = vmatprep.subr.mxu0 0.0
    %2542 = vmatpush1.msra.mxu0 0.0
    %2543 = vmatprep.mubr.f32.mxu0 0.0
    %2544 = vmatmul.mubr.f32.gmra.mrb[0].mxu0 %v2477
    %v2545 = vpop.f32.mrb[0].mxu0
    %v2546 = vadd.f32 0.0, %v2545
    %v2547 = vpop.f32.mrb[0].mxu0
    %2548 = vdwg.mxu0
    %v2549 = vmax.f32 %v2475, 1.0
    %v2550 = vrcp.pop %v2549
    %v2551 = vmul.f32 %v2546, %v2550
    %vm2552 = vcmp.gt.f32.partialorder %v2412, 0.0
    %vm2553 = vcmp.gt.f32.partialorder %v2413, 0.0
    %vm2554 = vcmp.gt.f32.partialorder %v2414, 0.0
    %vm2555 = vcmp.gt.f32.partialorder %v2415, 0.0
    %vm2556 = vcmp.gt.f32.partialorder %v2416, 0.0
    %vm2557 = vcmp.gt.f32.partialorder %v2417, 0.0
    %vm2558 = vcmp.gt.f32.partialorder %v2418, 0.0
    %vm2559 = vcmp.gt.f32.partialorder %v2419, 0.0
    %vm2560 = vmand %vm955, %vm2552
    %vm2561 = vmand %vm956, %vm2553
    %vm2562 = vmand %vm957, %vm2554
    %vm2563 = vmand %vm958, %vm2555
    %vm2564 = vmand %vm959, %vm2556
    %vm2565 = vmand %vm960, %vm2557
    %vm2566 = vmand %vm961, %vm2558
    %vm2567 = vmand %vm962, %vm2559
    %v2568 = vsel %vm2560, 1, 0
    %v2569 = vsel %vm2561, 1, 0
    %v2570 = vsel %vm2562, 1, 0
    %v2571 = vsel %vm2563, 1, 0
    %v2572 = vsel %vm2564, 1, 0
    %v2573 = vsel %vm2565, 1, 0
    %v2574 = vsel %vm2566, 1, 0
    %v2575 = vsel %vm2567, 1, 0
    %2576 = vset.pattern.permute.xlu0 0
    %2577 = vperm.xlu0 %2576, %v2568
    %v2578 = vpop.permute.xlu0 %2577
    %2579 = vset.pattern.permute.xlu0 0
    %2580 = vperm.xlu0 %2579, %v2569
    %v2581 = vpop.permute.xlu0 %2580
    %2582 = vset.pattern.permute.xlu0 0
    %2583 = vperm.xlu0 %2582, %v2570
    %v2584 = vpop.permute.xlu0 %2583
    %2585 = vset.pattern.permute.xlu0 0
    %2586 = vperm.xlu0 %2585, %v2571
    %v2587 = vpop.permute.xlu0 %2586
    %2588 = vset.pattern.permute.xlu0 0
    %2589 = vperm.xlu0 %2588, %v2572
    %v2590 = vpop.permute.xlu0 %2589
    %2591 = vset.pattern.permute.xlu0 0
    %2592 = vperm.xlu0 %2591, %v2573
    %v2593 = vpop.permute.xlu0 %2592
    %2594 = vset.pattern.permute.xlu0 0
    %2595 = vperm.xlu0 %2594, %v2574
    %v2596 = vpop.permute.xlu0 %2595
    %2597 = vset.pattern.permute.xlu0 0
    %2598 = vperm.xlu0 %2597, %v2575
    %v2599 = vpop.permute.xlu0 %2598
    %vm2600 = vcmp.eq.s32.totalorder %v2578, 1
    %vm2601 = vcmp.eq.s32.totalorder %v2581, 1
    %vm2602 = vcmp.eq.s32.totalorder %v2584, 1
    %vm2603 = vcmp.eq.s32.totalorder %v2587, 1
    %vm2604 = vcmp.eq.s32.totalorder %v2590, 1
    %vm2605 = vcmp.eq.s32.totalorder %v2593, 1
    %vm2606 = vcmp.eq.s32.totalorder %v2596, 1
    %vm2607 = vcmp.eq.s32.totalorder %v2599, 1
    %v2608 = vsel %vm2600, %v2428, -3e+38
    %v2609 = vsel %vm2601, %v2429, -3e+38
    %v2610 = vsel %vm2602, %v2430, -3e+38
    %v2611 = vsel %vm2603, %v2431, -3e+38
    %v2612 = vsel %vm2604, %v2432, -3e+38
    %v2613 = vsel %vm2605, %v2433, -3e+38
    %v2614 = vsel %vm2606, %v2434, -3e+38
    %v2615 = vsel %vm2607, %v2435, -3e+38
    %v2616 = vmax.f32 %v2608, %v2612
    %v2617 = vmax.f32 %v2609, %v2613
    %v2618 = vmax.f32 %v2610, %v2614
    %v2619 = vmax.f32 %v2611, %v2615
    %v2620 = vmax.f32 %v2616, %v2617
    %v2621 = vmax.f32 %v2618, %v2619
    %v2622 = vmax.f32 %v2620, %v2621
    %v2623 = vrot.slane %v2622, 4
    %v2624 = vmax.f32 %v2622, %v2623
    %v2625 = vrot.slane %v2624, 2
    %v2626 = vmax.f32 %v2624, %v2625
    %v2627 = vrot.slane %v2626, 1
    %v2628 = vmax.f32 %v2626, %v2627
    %vm2629 = vmand %vm1040, %vm2552
    %vm2630 = vmand %vm1041, %vm2553
    %vm2631 = vmand %vm1042, %vm2554
    %vm2632 = vmand %vm1043, %vm2555
    %vm2633 = vmand %vm1044, %vm2556
    %vm2634 = vmand %vm1045, %vm2557
    %vm2635 = vmand %vm1046, %vm2558
    %vm2636 = vmand %vm1047, %vm2559
    %v2637 = vsel %vm2629, 1, 0
    %v2638 = vsel %vm2630, 1, 0
    %v2639 = vsel %vm2631, 1, 0
    %v2640 = vsel %vm2632, 1, 0
    %v2641 = vsel %vm2633, 1, 0
    %v2642 = vsel %vm2634, 1, 0
    %v2643 = vsel %vm2635, 1, 0
    %v2644 = vsel %vm2636, 1, 0
    %2645 = vset.pattern.permute.xlu0 0
    %2646 = vperm.xlu0 %2645, %v2637
    %v2647 = vpop.permute.xlu0 %2646
    %2648 = vset.pattern.permute.xlu0 0
    %2649 = vperm.xlu0 %2648, %v2638
    %v2650 = vpop.permute.xlu0 %2649
    %2651 = vset.pattern.permute.xlu0 0
    %2652 = vperm.xlu0 %2651, %v2639
    %v2653 = vpop.permute.xlu0 %2652
    %2654 = vset.pattern.permute.xlu0 0
    %2655 = vperm.xlu0 %2654, %v2640
    %v2656 = vpop.permute.xlu0 %2655
    %2657 = vset.pattern.permute.xlu0 0
    %2658 = vperm.xlu0 %2657, %v2641
    %v2659 = vpop.permute.xlu0 %2658
    %2660 = vset.pattern.permute.xlu0 0
    %2661 = vperm.xlu0 %2660, %v2642
    %v2662 = vpop.permute.xlu0 %2661
    %2663 = vset.pattern.permute.xlu0 0
    %2664 = vperm.xlu0 %2663, %v2643
    %v2665 = vpop.permute.xlu0 %2664
    %2666 = vset.pattern.permute.xlu0 0
    %2667 = vperm.xlu0 %2666, %v2644
    %v2668 = vpop.permute.xlu0 %2667
    %vm2669 = vcmp.eq.s32.totalorder %v2647, 1
    %vm2670 = vcmp.eq.s32.totalorder %v2650, 1
    %vm2671 = vcmp.eq.s32.totalorder %v2653, 1
    %vm2672 = vcmp.eq.s32.totalorder %v2656, 1
    %vm2673 = vcmp.eq.s32.totalorder %v2659, 1
    %vm2674 = vcmp.eq.s32.totalorder %v2662, 1
    %vm2675 = vcmp.eq.s32.totalorder %v2665, 1
    %vm2676 = vcmp.eq.s32.totalorder %v2668, 1
    %v2677 = vsel %vm2669, %v2428, -3e+38
    %v2678 = vsel %vm2670, %v2429, -3e+38
    %v2679 = vsel %vm2671, %v2430, -3e+38
    %v2680 = vsel %vm2672, %v2431, -3e+38
    %v2681 = vsel %vm2673, %v2432, -3e+38
    %v2682 = vsel %vm2674, %v2433, -3e+38
    %v2683 = vsel %vm2675, %v2434, -3e+38
    %v2684 = vsel %vm2676, %v2435, -3e+38
    %v2685 = vmax.f32 %v2677, %v2681
    %v2686 = vmax.f32 %v2678, %v2682
    %v2687 = vmax.f32 %v2679, %v2683
    %v2688 = vmax.f32 %v2680, %v2684
    %v2689 = vmax.f32 %v2685, %v2686
    %v2690 = vmax.f32 %v2687, %v2688
    %v2691 = vmax.f32 %v2689, %v2690
    %v2692 = vrot.slane %v2691, 4
    %v2693 = vmax.f32 %v2691, %v2692
    %v2694 = vrot.slane %v2693, 2
    %v2695 = vmax.f32 %v2693, %v2694
    %v2696 = vrot.slane %v2695, 1
    %v2697 = vmax.f32 %v2695, %v2696
    %v2698 = vsel %vm1117, %v2628, %v2697
    %v2699 = vadd.f32 %v1908, %v2698
    %v2700 = vadd.f32 %v1909, %v2551
    %v2701 = vpack.c.bf16 %v2699, %v2699
    %v2702 = vpack.c.bf16 %v2700, %v2700
    %v2703 = vlaneseq
    %v2704 = vshrl.u32 %v2703, 7
    %v2705 = vsub.s32 0, %v2704
    %v2706 = vrot.slane %v263, %v2705
    %v2739 = vunpack.c.l.b16 %v193
    %v2740 = vunpack.c.l.b16 %v194
    %v2741 = vunpack.c.l.b16 %v195
    %v2742 = vunpack.c.l.b16 %v196
    %v2743 = vunpack.c.l.b16 %v197
    %v2744 = vunpack.c.l.b16 %v198
    %v2745 = vunpack.c.l.b16 %v199
    %v2746 = vunpack.c.l.b16 %v200
    %v2747 = vunpack.c.l.b16 %v201
    %v2748 = vunpack.c.l.b16 %v202
    %v2749 = vunpack.c.l.b16 %v203
    %v2750 = vunpack.c.l.b16 %v204
    %v2751 = vunpack.c.l.b16 %v205
    %v2752 = vunpack.c.l.b16 %v206
    %v2753 = vunpack.c.l.b16 %v207
    %v2754 = vunpack.c.l.b16 %v208
    %v2755 = vunpack.c.l.b16 %v209
    %v2756 = vunpack.c.l.b16 %v210
    %v2757 = vunpack.c.l.b16 %v211
    %v2758 = vunpack.c.l.b16 %v212
    %v2759 = vunpack.c.l.b16 %v213
    %v2760 = vunpack.c.l.b16 %v214
    %v2761 = vunpack.c.l.b16 %v215
    %v2762 = vunpack.c.l.b16 %v216
    %v2763 = vunpack.c.l.b16 %v217
    %v2764 = vunpack.c.l.b16 %v218
    %v2765 = vunpack.c.l.b16 %v219
    %v2766 = vunpack.c.l.b16 %v220
    %v2767 = vunpack.c.l.b16 %v221
    %v2768 = vunpack.c.l.b16 %v222
    %v2769 = vunpack.c.l.b16 %v223
    %v2770 = vunpack.c.l.b16 %v224
    %v2771 = vpack.c.b16 %v2740, %v2739
    %v2772 = vpack.c.b16 %v2742, %v2741
    %v2773 = vpack.c.b16 %v2744, %v2743
    %v2774 = vpack.c.b16 %v2746, %v2745
    %v2775 = vpack.c.b16 %v2748, %v2747
    %v2776 = vpack.c.b16 %v2750, %v2749
    %v2777 = vpack.c.b16 %v2752, %v2751
    %v2778 = vpack.c.b16 %v2754, %v2753
    %v2779 = vpack.c.b16 %v2756, %v2755
    %v2780 = vpack.c.b16 %v2758, %v2757
    %v2781 = vpack.c.b16 %v2760, %v2759
    %v2782 = vpack.c.b16 %v2762, %v2761
    %v2783 = vpack.c.b16 %v2764, %v2763
    %v2784 = vpack.c.b16 %v2766, %v2765
    %v2785 = vpack.c.b16 %v2768, %v2767
    %v2786 = vpack.c.b16 %v2770, %v2769
    %2803 = vmatprep.subr.bf16.mxu0 0
    %2804 = vmatpush1.bf16.msra.mxu0 %v2771
    %2805 = vmatprep.subr.bf16.mxu0 0
    %2806 = vmatpush1.bf16.msra.mxu0 %v2772
    %2807 = vmatprep.subr.bf16.mxu0 0
    %2808 = vmatpush1.bf16.msra.mxu0 %v2773
    %2809 = vmatprep.subr.bf16.mxu0 0
    %2810 = vmatpush1.bf16.msra.mxu0 %v2774
    %2811 = vmatprep.subr.bf16.mxu0 0
    %2812 = vmatpush1.bf16.msra.mxu0 %v2775
    %2813 = vmatprep.subr.bf16.mxu0 0
    %2814 = vmatpush1.bf16.msra.mxu0 %v2776
    %2815 = vmatprep.subr.bf16.mxu0 0
    %2816 = vmatpush1.bf16.msra.mxu0 %v2777
    %2817 = vmatprep.subr.bf16.mxu0 0
    %2818 = vmatpush1.bf16.msra.mxu0 %v2778
    %2819 = vmatprep.subr.bf16.mxu0 0
    %2820 = vmatpush1.bf16.msra.mxu0 %v2779
    %2821 = vmatprep.subr.bf16.mxu0 0
    %2822 = vmatpush1.bf16.msra.mxu0 %v2780
    %2823 = vmatprep.subr.bf16.mxu0 0
    %2824 = vmatpush1.bf16.msra.mxu0 %v2781
    %2825 = vmatprep.subr.bf16.mxu0 0
    %2826 = vmatpush1.bf16.msra.mxu0 %v2782
    %2827 = vmatprep.subr.bf16.mxu0 0
    %2828 = vmatpush1.bf16.msra.mxu0 %v2783
    %2829 = vmatprep.subr.bf16.mxu0 0
    %2830 = vmatpush1.bf16.msra.mxu0 %v2784
    %2831 = vmatprep.subr.bf16.mxu0 0
    %2832 = vmatpush1.bf16.msra.mxu0 %v2785
    %2833 = vmatprep.subr.bf16.mxu0 0
    %2834 = vmatpush1.bf16.msra.mxu0 %v2786
    %2835 = vmatprep.mubr.bf16.mxu0 %v2702
    %2836 = vmatmul.mubr.bf16.gmra.mrb[0].mxu0 %v2701
    %v2837 = vpop.f32.mrb[0].mxu0
    %v2838 = vadd.f32 %v2706, %v2837
    %v2839 = vpop.f32.mrb[0].mxu0
    %v2840 = vpop.f32.mrb[0].mxu0
    %v2841 = vpop.f32.mrb[0].mxu0
    %2842 = vdwg.mxu0
    %v2843 = vmax.f32 %v2838, 0.0
    %v2844 = vpack.c.bf16 %v2843, %v2843
    %v2845 = vlaneseq
    %v2846 = vshrl.u32 %v2845, 7
    %v2847 = vsub.s32 0, %v2846
    %v2848 = vrot.slane %v264, %v2847
    %v2865 = vunpack.c.l.b16 %v225
    %v2866 = vunpack.c.l.b16 %v226
    %v2867 = vunpack.c.l.b16 %v227
    %v2868 = vunpack.c.l.b16 %v228
    %v2869 = vunpack.c.l.b16 %v229
    %v2870 = vunpack.c.l.b16 %v230
    %v2871 = vunpack.c.l.b16 %v231
    %v2872 = vunpack.c.l.b16 %v232
    %v2873 = vunpack.c.l.b16 %v233
    %v2874 = vunpack.c.l.b16 %v234
    %v2875 = vunpack.c.l.b16 %v235
    %v2876 = vunpack.c.l.b16 %v236
    %v2877 = vunpack.c.l.b16 %v237
    %v2878 = vunpack.c.l.b16 %v238
    %v2879 = vunpack.c.l.b16 %v239
    %v2880 = vunpack.c.l.b16 %v240
    %v2881 = vpack.c.b16 %v2866, %v2865
    %v2882 = vpack.c.b16 %v2868, %v2867
    %v2883 = vpack.c.b16 %v2870, %v2869
    %v2884 = vpack.c.b16 %v2872, %v2871
    %v2885 = vpack.c.b16 %v2874, %v2873
    %v2886 = vpack.c.b16 %v2876, %v2875
    %v2887 = vpack.c.b16 %v2878, %v2877
    %v2888 = vpack.c.b16 %v2880, %v2879
    %2897 = vmatprep.subr.bf16.mxu0 0
    %2898 = vmatpush1.bf16.msra.mxu0 %v2881
    %2899 = vmatprep.subr.bf16.mxu0 0
    %2900 = vmatpush1.bf16.msra.mxu0 %v2882
    %2901 = vmatprep.subr.bf16.mxu0 0
    %2902 = vmatpush1.bf16.msra.mxu0 %v2883
    %2903 = vmatprep.subr.bf16.mxu0 0
    %2904 = vmatpush1.bf16.msra.mxu0 %v2884
    %2905 = vmatprep.subr.bf16.mxu0 0
    %2906 = vmatpush1.bf16.msra.mxu0 %v2885
    %2907 = vmatprep.subr.bf16.mxu0 0
    %2908 = vmatpush1.bf16.msra.mxu0 %v2886
    %2909 = vmatprep.subr.bf16.mxu0 0
    %2910 = vmatpush1.bf16.msra.mxu0 %v2887
    %2911 = vmatprep.subr.bf16.mxu0 0
    %2912 = vmatpush1.bf16.msra.mxu0 %v2888
    %2913 = vmatprep.subr.bf16.mxu0 0
    %2914 = vmatpush1.bf16.msra.mxu0 0
    %2915 = vmatprep.subr.bf16.mxu0 0
    %2916 = vmatpush1.bf16.msra.mxu0 0
    %2917 = vmatprep.subr.bf16.mxu0 0
    %2918 = vmatpush1.bf16.msra.mxu0 0
    %2919 = vmatprep.subr.bf16.mxu0 0
    %2920 = vmatpush1.bf16.msra.mxu0 0
    %2921 = vmatprep.subr.bf16.mxu0 0
    %2922 = vmatpush1.bf16.msra.mxu0 0
    %2923 = vmatprep.subr.bf16.mxu0 0
    %2924 = vmatpush1.bf16.msra.mxu0 0
    %2925 = vmatprep.subr.bf16.mxu0 0
    %2926 = vmatpush1.bf16.msra.mxu0 0
    %2927 = vmatprep.subr.bf16.mxu0 0
    %2928 = vmatpush1.bf16.msra.mxu0 0
    %2929 = vmatprep.mubr.bf16.mxu0 0
    %2930 = vmatmul.mubr.bf16.gmra.mrb[0].mxu0 %v2844
    %v2931 = vpop.f32.mrb[0].mxu0
    %v2932 = vadd.f32 %v2848, %v2931
    %v2933 = vpop.f32.mrb[0].mxu0
    %v2934 = vpop.f32.mrb[0].mxu0
    %v2935 = vpop.f32.mrb[0].mxu0
    %2936 = vdwg.mxu0
    %v2937 = vmax.f32 %v2932, 0.0
    %v2938 = vpack.c.bf16 %v2937, %v2937
    %v2939 = vlaneseq
    %v2940 = vshrl.u32 %v2939, 7
    %v2941 = vsub.s32 0, %v2940
    %v2942 = vrot.slane %v265, %v2941
    %v2959 = vunpack.c.l.b16 %v241
    %v2960 = vunpack.c.l.b16 %v242
    %v2961 = vunpack.c.l.b16 %v243
    %v2962 = vunpack.c.l.b16 %v244
    %v2963 = vunpack.c.l.b16 %v245
    %v2964 = vunpack.c.l.b16 %v246
    %v2965 = vunpack.c.l.b16 %v247
    %v2966 = vunpack.c.l.b16 %v248
    %v2967 = vunpack.c.l.b16 %v249
    %v2968 = vunpack.c.l.b16 %v250
    %v2969 = vunpack.c.l.b16 %v251
    %v2970 = vunpack.c.l.b16 %v252
    %v2971 = vunpack.c.l.b16 %v253
    %v2972 = vunpack.c.l.b16 %v254
    %v2973 = vunpack.c.l.b16 %v255
    %v2974 = vunpack.c.l.b16 %v256
    %v2975 = vpack.c.b16 %v2960, %v2959
    %v2976 = vpack.c.b16 %v2962, %v2961
    %v2977 = vpack.c.b16 %v2964, %v2963
    %v2978 = vpack.c.b16 %v2966, %v2965
    %v2979 = vpack.c.b16 %v2968, %v2967
    %v2980 = vpack.c.b16 %v2970, %v2969
    %v2981 = vpack.c.b16 %v2972, %v2971
    %v2982 = vpack.c.b16 %v2974, %v2973
    %2991 = vmatprep.subr.bf16.mxu0 0
    %2992 = vmatpush1.bf16.msra.mxu0 %v2975
    %2993 = vmatprep.subr.bf16.mxu0 0
    %2994 = vmatpush1.bf16.msra.mxu0 %v2976
    %2995 = vmatprep.subr.bf16.mxu0 0
    %2996 = vmatpush1.bf16.msra.mxu0 %v2977
    %2997 = vmatprep.subr.bf16.mxu0 0
    %2998 = vmatpush1.bf16.msra.mxu0 %v2978
    %2999 = vmatprep.subr.bf16.mxu0 0
    %3000 = vmatpush1.bf16.msra.mxu0 %v2979
    %3001 = vmatprep.subr.bf16.mxu0 0
    %3002 = vmatpush1.bf16.msra.mxu0 %v2980
    %3003 = vmatprep.subr.bf16.mxu0 0
    %3004 = vmatpush1.bf16.msra.mxu0 %v2981
    %3005 = vmatprep.subr.bf16.mxu0 0
    %3006 = vmatpush1.bf16.msra.mxu0 %v2982
    %3007 = vmatprep.subr.bf16.mxu0 0
    %3008 = vmatpush1.bf16.msra.mxu0 0
    %3009 = vmatprep.subr.bf16.mxu0 0
    %3010 = vmatpush1.bf16.msra.mxu0 0
    %3011 = vmatprep.subr.bf16.mxu0 0
    %3012 = vmatpush1.bf16.msra.mxu0 0
    %3013 = vmatprep.subr.bf16.mxu0 0
    %3014 = vmatpush1.bf16.msra.mxu0 0
    %3015 = vmatprep.subr.bf16.mxu0 0
    %3016 = vmatpush1.bf16.msra.mxu0 0
    %3017 = vmatprep.subr.bf16.mxu0 0
    %3018 = vmatpush1.bf16.msra.mxu0 0
    %3019 = vmatprep.subr.bf16.mxu0 0
    %3020 = vmatpush1.bf16.msra.mxu0 0
    %3021 = vmatprep.subr.bf16.mxu0 0
    %3022 = vmatpush1.bf16.msra.mxu0 0
    %3023 = vmatprep.mubr.bf16.mxu0 0
    %3024 = vmatmul.mubr.bf16.gmra.mrb[0].mxu0 %v2938
    %v3025 = vpop.f32.mrb[0].mxu0
    %v3026 = vadd.f32 %v2942, %v3025
    %v3027 = vpop.f32.mrb[0].mxu0
    %v3028 = vpop.f32.mrb[0].mxu0
    %v3029 = vpop.f32.mrb[0].mxu0
    %3030 = vdwg.mxu0
    %vm3031 = vcmask 1041408
    %v3032 = vsel %vm3031, %v3026, -inf
    %3033 = vmax.xlane.f32.xlu0 %v3032
    %v3034 = vpop.xlane.xlu0 %3033
    %v3035 = vsub.f32 %v3026, %v3034
    %v3036 = vmul.f32 %v3035, 1.442695
    %v3037 = vpow.pop %v3036
    %v3038 = vsel %vm3031, %v3037, 0.0
    %3039 = vadd.xlane.f32.xlu0 %v3038
    %v3040 = vpop.xlane.xlu0 %3039
    %v3041 = vlog2.pop %v3040
    %v3042 = vmul.f32 %v3041, 0.6931472
    %v3043 = vadd.f32 %v3042, %v3034
    %v3044 = vsub.f32 %v3026, %v3043
    %3045 = vst [vmem:[#allocation2] sm:$0x3] %v3044
    // Predicated region
    $region26: #{net1_forward.1} parent=1 // pred_check
      _
    $region27: #{net1_forward.1} parent=1 // pred_check_branch
      %3047 = sbr.rel (0) target = $region29
    $region28: #{net1_forward.1} parent=1 // pred_region
      %s3049 = ssub.s32 32, 32
      %3050 = vsyncadd [#allocation3], %s3049
      %s3052 = sshll.u32 [#allocation2], 4
      %s3053 = int_to_ptr.vmem [resolvable:$true] %s3052
      %3055 = dma.vmem_to_hbm [thread:$0]  %s3053, 32, %s6, [#allocation3]
    $region29: #{net1_forward.1} parent=1 // pred_fallthru
      _
    // Predicated region
    $region30: #{net1_forward.1} parent=1 // pred_check
      _
    $region31: #{net1_forward.1} parent=1 // pred_check_branch
      %3057 = sbr.rel (0) target = $region33
    $region32: #{net1_forward.1} parent=1 // pred_region
      %3058 = dma.done [#allocation3], 32
    $region33: #{net1_forward.1} parent=1 // pred_fallthru
      _
    %3059 = vsyncpa [#allocation3], 1

</llo_original>
